<compile_context>
chip_gen: v5e
topology: v5e:2x2
jax: 0.10.0
libtpu: 0.0.40
codegen_flags: <defaults>
</compile_context>

<pallas_src>
import numpy as np
import jax
import jax.numpy as jnp
from jax import lax
from jax.experimental import pallas as pl
from jax.experimental.pallas import tpu as pltpu

LATENT = 128   # latent_size from the module
DIM = 8        # small `dim` for the synthetic test
EPS = 1e-5     # BatchNorm2d eps (torch default)

PHASES = ((0, 0), (0, 1), (1, 0), (1, 1))                 # output pixel parity (row, col)
OFFSETS = tuple((dy, dx) for dy in (-1, 0, 1) for dx in (-1, 0, 1))


def _taps_1d(parity):
    # stride-2 / pad-1 / K=4 transposed conv, 1-D: output row 2a+parity reads
    # input row a+d with kernel index k for each (d, k) pair below.
    return ((0, 1), (-1, 3)) if parity == 0 else ((0, 2), (1, 0))


class _Geom:
    """Geometry of one conv input stored as (C, N*(H+2)*(W+2)) + slack margins."""

    def __init__(self, n, h, w):
        self.n, self.h, self.w = n, h, w
        self.hp, self.wp = h + 2, w + 2
        self.p = self.hp * self.wp          # padded pixels per image
        self.flat = n * self.p              # lane extent of the activation matrix
        self.marg = self.wp + 1             # every tap shift becomes a static slice
        self.buf_w = self.flat + 2 * self.marg


# ------------------------------ fused kernel --------------------------------

def _build_pallas_call(n, dim):
    g1, g2, g3 = _Geom(n, 4, 4), _Geom(n, 7, 7), _Geom(n, 14, 14)
    c1, c2, c3 = 4 * dim, 2 * dim, dim              # conv input channels
    o1, o2 = 2 * dim, dim                           # conv output channels (BN layers)
    cnt1, cnt2 = float(n * 8 * 8), float(n * 14 * 14)
    f32, bf16 = jnp.float32, jnp.bfloat16

    def conv_stacked(buf, geom, wt_ref):
        # Implicit (zero-free) im2col: 9 flat-shifted static slices of the padded
        # activation buffer, each multiplied by a phase-stacked weight block.
        acc = None
        for oi, (dy, dx) in enumerate(OFFSETS):
            start = geom.marg + dy * geom.wp + dx
            tap = buf[:, start:start + geom.flat]
            z = jnp.dot(wt_ref[oi], tap, preferred_element_type=f32)
            acc = z if acc is None else acc + z
        return acc                                   # (4*Cout, N*P) f32, phase-stacked

    def bn_train(zr, mask, count, cout, gamma, beta):
        # one stats pass over the (already ReLU'd) activations, folded affine
        s1 = jnp.sum(zr * mask, axis=1, keepdims=True)
        s2 = jnp.sum(zr * zr * mask, axis=1, keepdims=True)
        s1 = s1[0:cout] + s1[cout:2 * cout] + s1[2 * cout:3 * cout] + s1[3 * cout:4 * cout]
        s2 = s2[0:cout] + s2[cout:2 * cout] + s2[2 * cout:3 * cout] + s2[3 * cout:4 * cout]
        mean = s1 * (1.0 / count)
        var = s2 * (1.0 / count) - mean * mean       # biased variance (train mode)
        scale = gamma * lax.rsqrt(var + EPS)
        shift = beta - mean * scale
        return scale, shift

    def scatter(zr, scale, shift, cout, gmat_ref, buf, geom_next):
        # interleave the 4 output phases (and apply the spatial crop) into the
        # next layer's zero-padded activation buffer via constant 0/1 matmuls.
        acc = None
        for p in range(4):
            y = zr[p * cout:(p + 1) * cout, :] * scale + shift
            z = jnp.dot(y.astype(bf16), gmat_ref[p], preferred_element_type=f32)
            acc = z if acc is None else acc + z
        buf[...] = jnp.zeros(buf.shape, bf16)
        buf[:, geom_next.marg:geom_next.marg + geom_next.flat] = acc.astype(bf16)

    def kernel(noise_ref, wfc_ref, sel_ref, bsel_ref, match_ref, bfc_ref,
               wt1_ref, b1_ref, ga1_ref, be1_ref, m1_ref, sc1_ref,
               wt2_ref, b2_ref, ga2_ref, be2_ref, m2_ref, sc2_ref,
               wt3_ref, b3_ref,
               o_ref, buf1, buf2, buf3):
        # ---- latent_to_features: Linear + ReLU, written channel-major straight
        #      into the padded layer-1 activation layout (fused, no extra call).
        ht = jnp.dot(wfc_ref[...], noise_ref[...].astype(bf16).T,
                     preferred_element_type=f32)                     # (feat, N)
        ht = jnp.dot(ht.astype(bf16), bsel_ref[...],
                     preferred_element_type=f32)                     # broadcast per image
        ht = ht * match_ref[...]                                     # keep matching 4x4 slot
        x1 = jnp.dot(sel_ref[...], ht.astype(bf16),
                     preferred_element_type=f32) + bfc_ref[...]      # (C1, N*P1)
        x1 = jnp.maximum(x1, 0.0)
        buf1[...] = jnp.zeros(buf1.shape, bf16)
        buf1[:, g1.marg:g1.marg + g1.flat] = x1.astype(bf16)

        # ---- block_1: ConvT(4d->2d,4,2,1) + ReLU + BN(train); the x[:,:,:7,:7]
        #      crop is folded into the phase-interleave matrices sc1_ref.
        z = conv_stacked(buf1, g1, wt1_ref)
        z = jnp.maximum(z + b1_ref[...], 0.0)
        scale, shift = bn_train(z, m1_ref[...], cnt1, o1, ga1_ref[...], be1_ref[...])
        scatter(z, scale, shift, o1, sc1_ref, buf2, g2)

        # ---- block_2: ConvT(2d->d,4,2,1) + ReLU + BN(train)
        z = conv_stacked(buf2, g2, wt2_ref)
        z = jnp.maximum(z + b2_ref[...], 0.0)
        scale, shift = bn_train(z, m2_ref[...], cnt2, o2, ga2_ref[...], be2_ref[...])
        scatter(z, scale, shift, o2, sc2_ref, buf3, g3)

        # ---- output_conv: ConvT(d->1,4,2,1) + Sigmoid, emitted phase-stacked and
        #      lane-dense as (4, N*16*16); exp on EUP + approx reciprocal.
        z = conv_stacked(buf3, g3, wt3_ref) + b3_ref[...]
        sig = pl.reciprocal(1.0 + jnp.exp(-z), approx=True)
        o_ref[...] = jnp.clip(sig, 0.0, 1.0)

    call = pl.pallas_call(
        kernel,
        out_shape=jax.ShapeDtypeStruct((4, g3.flat), jnp.float32),
        in_specs=[pl.BlockSpec(memory_space=pltpu.MemorySpace.VMEM)] * 20,
        out_specs=pl.BlockSpec(memory_space=pltpu.MemorySpace.VMEM),
        scratch_shapes=[
            pltpu.VMEM((c1, g1.buf_w), jnp.bfloat16),
            pltpu.VMEM((c2, g2.buf_w), jnp.bfloat16),
            pltpu.VMEM((c3, g3.buf_w), jnp.bfloat16),
        ],
    )
    return call


def generator_dcgan_forward(noise, kp, dim=DIM):
    n = noise.shape[0]
    call = _build_pallas_call(n, dim)
    o = call(noise, kp["wfc"], kp["sel"], kp["bsel"], kp["match"], kp["bfc"],
             kp["wt1"], kp["b1"], kp["ga1"], kp["be1"], kp["m1"], kp["sc1"],
             kp["wt2"], kp["b2"], kp["ga2"], kp["be2"], kp["m2"], kp["sc2"],
             kp["wt3"], kp["b3"])
    # (4, N*16*16) phase-stacked / padded-flat spatial  ->  NCHW (N, 1, 28, 28)
    o = o.reshape(2, 2, n, 16, 16)[:, :, :, 1:15, 1:15]   # (py, px, n, a, b)
    return o.transpose(2, 3, 0, 4, 1).reshape(n, 1, 28, 28)


# ---------------------- kernel-side constant preparation --------------------

def prepare_kernel_params(params, n, dim=DIM):
    g1, g2, g3 = _Geom(n, 4, 4), _Geom(n, 7, 7), _Geom(n, 14, 14)
    c1 = 4 * dim
    feat = dim * 64

    def stacked_weights(w):                 # torch ConvTranspose2d weight (Cin, Cout, 4, 4)
        w = np.asarray(w, np.float32)
        cin, cout = w.shape[0], w.shape[1]
        wt = np.zeros((len(OFFSETS), 4 * cout, cin), np.float32)
        for oi, (dy, dx) in enumerate(OFFSETS):
            for p, (py, px) in enumerate(PHASES):
                row, col = dict(_taps_1d(py)), dict(_taps_1d(px))
                if dy in row and dx in col:
                    wt[oi, p * cout:(p + 1) * cout, :] = w[:, :, row[dy], col[dx]].T
        return jnp.asarray(wt, jnp.bfloat16)

    def stacked_bias(b):
        b = np.asarray(b, np.float32).reshape(-1)
        return jnp.asarray(np.tile(b, 4).reshape(-1, 1))

    def col_vec(v):
        return jnp.asarray(np.asarray(v, np.float32).reshape(-1, 1))

    def interior_mask(g):
        m = np.zeros((1, g.flat), np.float32)
        for nn in range(g.n):
            for a in range(g.h):
                for b in range(g.w):
                    m[0, nn * g.p + (a + 1) * g.wp + (b + 1)] = 1.0
        return jnp.asarray(m)

    def phase_scatter(gin, crop, gout):
        s = np.zeros((4, gin.flat, gout.flat), np.float32)
        for p, (py, px) in enumerate(PHASES):
            for nn in range(gin.n):
                for a in range(gin.h):
                    for b in range(gin.w):
                        y, x = 2 * a + py, 2 * b + px
                        if y < crop and x < crop:
                            src = nn * gin.p + (a + 1) * gin.wp + (b + 1)
                            dst = nn * gout.p + (y + 1) * gout.wp + (x + 1)
                            s[p, src, dst] = 1.0
        return jnp.asarray(s, jnp.bfloat16)

    # Linear: place h[n, c*16 + i*4 + j] (== x.view(-1, 4*dim, 4, 4)) at padded
    # flat position (n, i+1, j+1) of channel row c.
    b_fc = np.asarray(params["b_fc"], np.float32).reshape(c1, 16)
    sel = np.zeros((c1, feat), np.float32)
    for c in range(c1):
        sel[c, c * 16:(c + 1) * 16] = 1.0
    bsel = np.zeros((n, g1.flat), np.float32)
    match = np.zeros((feat, g1.flat), np.float32)
    bfc = np.zeros((c1, g1.flat), np.float32)
    spatial = np.arange(feat) % 16
    for nn in range(n):
        bsel[nn, nn * g1.p:(nn + 1) * g1.p] = 1.0
        for i in range(4):
            for j in range(4):
                m = nn * g1.p + (i + 1) * g1.wp + (j + 1)
                s = i * 4 + j
                match[spatial == s, m] = 1.0
                bfc[:, m] = b_fc[:, s]

    return {
        "wfc": jnp.asarray(np.asarray(params["w_fc"], np.float32), jnp.bfloat16),
        "sel": jnp.asarray(sel, jnp.bfloat16),
        "bsel": jnp.asarray(bsel, jnp.bfloat16),
        "match": jnp.asarray(match),
        "bfc": jnp.asarray(bfc),
        "wt1": stacked_weights(params["w1"]), "b1": stacked_bias(params["b1"]),
        "ga1": col_vec(params["g1"]), "be1": col_vec(params["be1"]),
        "m1": interior_mask(g1), "sc1": phase_scatter(g1, 7, g2),
        "wt2": stacked_weights(params["w2"]), "b2": stacked_bias(params["b2"]),
        "ga2": col_vec(params["g2"]), "be2": col_vec(params["be2"]),
        "m2": interior_mask(g2), "sc2": phase_scatter(g2, 14, g3),
        "wt3": stacked_weights(params["w3"]), "b3": stacked_bias(params["b3"]),
    }


# --------------------------- parameter construction -------------------------

def init_params(key, dim=DIM, latent=LATENT, w0=0.1):
    ks = jax.random.split(key, 12)
    u = lambda k, s: jax.random.uniform(k, s, jnp.float32, -w0, w0)
    feat = dim * 4 * 4 * 4
    return {
        "w_fc": u(ks[0], (feat, latent)),           # torch Linear weight (out, in)
        "b_fc": u(ks[1], (feat,)),
        "w1": u(ks[2], (4 * dim, 2 * dim, 4, 4)),   # ConvTranspose2d (Cin, Cout, K, K)
        "b1": u(ks[3], (2 * dim,)),
        "g1": u(ks[4], (2 * dim,)),                 # BatchNorm2d weight
        "be1": u(ks[5], (2 * dim,)),                # BatchNorm2d bias
        "w2": u(ks[6], (2 * dim, dim, 4, 4)),
        "b2": u(ks[7], (dim,)),
        "g2": u(ks[8], (dim,)),
        "be2": u(ks[9], (dim,)),
        "w3": u(ks[10], (dim, 1, 4, 4)),
        "b3": u(ks[11], (1,)),
    }


if __name__ == "__main__":
    root = jax.random.PRNGKey(0)
    k_params, k_noise = jax.random.split(root)
    params = init_params(k_params)
    noise = jax.random.normal(k_noise, (2, LATENT), jnp.float32)   # GenerateNoise(2)

    # one-time weight / constant repacking (outside the hot path)
    kp = prepare_kernel_params(params, n=2, dim=DIM)

    fwd = jax.jit(generator_dcgan_forward)
    out = jax.block_until_ready(fwd(noise, kp))

    assert out.shape == (2, 1, 28, 28), out.shape
    assert bool(jnp.all(jnp.isfinite(out)))
    assert bool(jnp.all((out >= 0.0) & (out <= 1.0)))   # sigmoid output
    print("KERNEL_OK")
</pallas_src>

<mosaic_0001>
module attributes {stable_mosaic.version = 11 : i64} {
  func.func @kernel(%arg0: memref<2x128xf32, #tpu.memory_space<vmem>>, %arg1: memref<512x128xbf16, #tpu.memory_space<vmem>>, %arg2: memref<32x512xbf16, #tpu.memory_space<vmem>>, %arg3: memref<2x72xbf16, #tpu.memory_space<vmem>>, %arg4: memref<512x72xf32, #tpu.memory_space<vmem>>, %arg5: memref<32x72xf32, #tpu.memory_space<vmem>>, %arg6: memref<9x64x32xbf16, #tpu.memory_space<vmem>>, %arg7: memref<64x1xf32, #tpu.memory_space<vmem>>, %arg8: memref<16x1xf32, #tpu.memory_space<vmem>>, %arg9: memref<16x1xf32, #tpu.memory_space<vmem>>, %arg10: memref<1x72xf32, #tpu.memory_space<vmem>>, %arg11: memref<4x72x162xbf16, #tpu.memory_space<vmem>>, %arg12: memref<9x32x16xbf16, #tpu.memory_space<vmem>>, %arg13: memref<32x1xf32, #tpu.memory_space<vmem>>, %arg14: memref<8x1xf32, #tpu.memory_space<vmem>>, %arg15: memref<8x1xf32, #tpu.memory_space<vmem>>, %arg16: memref<1x162xf32, #tpu.memory_space<vmem>>, %arg17: memref<4x162x512xbf16, #tpu.memory_space<vmem>>, %arg18: memref<9x4x8xbf16, #tpu.memory_space<vmem>>, %arg19: memref<4x1xf32, #tpu.memory_space<vmem>>, %arg20: memref<4x512xf32, #tpu.memory_space<vmem>>, %arg21: memref<32x86xbf16, #tpu.memory_space<vmem>>, %arg22: memref<16x182xbf16, #tpu.memory_space<vmem>>, %arg23: memref<8x546xbf16, #tpu.memory_space<vmem>>) attributes {dimension_semantics = [], scalar_prefetch = 0 : i64, scratch_operands = 3 : i64, tpu.core_type = #tpu.core_type<tc>} {
    %c0 = arith.constant 0 : index
    %c0_0 = arith.constant 0 : index
    %0 = vector.load %arg1[%c0, %c0_0] : memref<512x128xbf16, #tpu.memory_space<vmem>>, vector<512x128xbf16>
    %c0_1 = arith.constant 0 : index
    %c0_2 = arith.constant 0 : index
    %1 = vector.load %arg0[%c0_1, %c0_2] : memref<2x128xf32, #tpu.memory_space<vmem>>, vector<2x128xf32>
    %2 = arith.truncf %1 : vector<2x128xf32> to vector<2x128xbf16>
    %3 = tpu.transpose %2, [1, 0] : vector<2x128xbf16> -> vector<128x2xbf16>
    %cst = arith.constant dense<0.000000e+00> : vector<512x2xf32>
    %4 = tpu.matmul %0, %3, %cst {dimension_numbers = #tpu.dot_dimension_numbers<[1], [0], [0], [1], [0, 0, 1, 1], [], []>} : vector<512x128xbf16>, vector<128x2xbf16>, vector<512x2xf32> -> vector<512x2xf32>
    %5 = arith.truncf %4 : vector<512x2xf32> to vector<512x2xbf16>
    %c0_3 = arith.constant 0 : index
    %c0_4 = arith.constant 0 : index
    %6 = vector.load %arg3[%c0_3, %c0_4] : memref<2x72xbf16, #tpu.memory_space<vmem>>, vector<2x72xbf16>
    %cst_5 = arith.constant dense<0.000000e+00> : vector<512x72xf32>
    %7 = tpu.matmul %5, %6, %cst_5 {dimension_numbers = #tpu.dot_dimension_numbers<[1], [0], [0], [1], [0, 0, 1, 1], [], []>} : vector<512x2xbf16>, vector<2x72xbf16>, vector<512x72xf32> -> vector<512x72xf32>
    %c0_6 = arith.constant 0 : index
    %c0_7 = arith.constant 0 : index
    %8 = vector.load %arg4[%c0_6, %c0_7] : memref<512x72xf32, #tpu.memory_space<vmem>>, vector<512x72xf32>
    %9 = arith.mulf %7, %8 : vector<512x72xf32>
    %c0_8 = arith.constant 0 : index
    %c0_9 = arith.constant 0 : index
    %10 = vector.load %arg2[%c0_8, %c0_9] : memref<32x512xbf16, #tpu.memory_space<vmem>>, vector<32x512xbf16>
    %11 = arith.truncf %9 : vector<512x72xf32> to vector<512x72xbf16>
    %cst_10 = arith.constant dense<0.000000e+00> : vector<32x72xf32>
    %12 = tpu.matmul %10, %11, %cst_10 {dimension_numbers = #tpu.dot_dimension_numbers<[1], [0], [0], [1], [0, 0, 1, 1], [], []>} : vector<32x512xbf16>, vector<512x72xbf16>, vector<32x72xf32> -> vector<32x72xf32>
    %c0_11 = arith.constant 0 : index
    %c0_12 = arith.constant 0 : index
    %13 = vector.load %arg5[%c0_11, %c0_12] : memref<32x72xf32, #tpu.memory_space<vmem>>, vector<32x72xf32>
    %14 = arith.addf %12, %13 : vector<32x72xf32>
    %cst_13 = arith.constant 0.000000e+00 : f32
    %15 = vector.broadcast %cst_13 : f32 to vector<32x72xf32>
    %16 = arith.maximumf %14, %15 : vector<32x72xf32>
    %cst_14 = arith.constant 0.000000e+00 : bf16
    %17 = vector.broadcast %cst_14 : bf16 to vector<32x86xbf16>
    %c0_15 = arith.constant 0 : index
    %c0_16 = arith.constant 0 : index
    %18 = vector.load %arg21[%c0_15, %c0_16] : memref<32x86xbf16, #tpu.memory_space<vmem>>, vector<32x86xbf16>
    tpu.vector_store %arg21[%c0_15, %c0_16], %17 {strides = array<i32>} : memref<32x86xbf16, #tpu.memory_space<vmem>>, vector<32x86xbf16>,
    %19 = arith.truncf %16 : vector<32x72xf32> to vector<32x72xbf16>
    %c0_17 = arith.constant 0 : index
    %c7 = arith.constant 7 : index
    %20 = vector.load %arg21[%c0_17, %c7] : memref<32x86xbf16, #tpu.memory_space<vmem>>, vector<32x72xbf16>
    tpu.vector_store %arg21[%c0_17, %c7], %19 {strides = array<i32>} : memref<32x86xbf16, #tpu.memory_space<vmem>>, vector<32x72xbf16>,
    %c0_18 = arith.constant 0 : index
    %c0_19 = arith.constant 0 : index
    %21 = vector.load %arg21[%c0_18, %c0_19] : memref<32x86xbf16, #tpu.memory_space<vmem>>, vector<32x72xbf16>
    %c0_20 = arith.constant 0 : index
    %c0_21 = arith.constant 0 : index
    %c0_22 = arith.constant 0 : index
    %22 = vector.load %arg6[%c0_20, %c0_21, %c0_22] : memref<9x64x32xbf16, #tpu.memory_space<vmem>>, vector<1x64x32xbf16>
    %23 = vector.shape_cast %22 : vector<1x64x32xbf16> to vector<64x32xbf16>
    %cst_23 = arith.constant dense<0.000000e+00> : vector<64x72xf32>
    %24 = tpu.matmul %23, %21, %cst_23 {dimension_numbers = #tpu.dot_dimension_numbers<[1], [0], [0], [1], [0, 0, 1, 1], [], []>} : vector<64x32xbf16>, vector<32x72xbf16>, vector<64x72xf32> -> vector<64x72xf32>
    %c0_24 = arith.constant 0 : index
    %c1 = arith.constant 1 : index
    %25 = vector.load %arg21[%c0_24, %c1] : memref<32x86xbf16, #tpu.memory_space<vmem>>, vector<32x72xbf16>
    %c1_25 = arith.constant 1 : index
    %c0_26 = arith.constant 0 : index
    %c0_27 = arith.constant 0 : index
    %26 = vector.load %arg6[%c1_25, %c0_26, %c0_27] : memref<9x64x32xbf16, #tpu.memory_space<vmem>>, vector<1x64x32xbf16>
    %27 = vector.shape_cast %26 : vector<1x64x32xbf16> to vector<64x32xbf16>
    %cst_28 = arith.constant dense<0.000000e+00> : vector<64x72xf32>
    %28 = tpu.matmul %27, %25, %cst_28 {dimension_numbers = #tpu.dot_dimension_numbers<[1], [0], [0], [1], [0, 0, 1, 1], [], []>} : vector<64x32xbf16>, vector<32x72xbf16>, vector<64x72xf32> -> vector<64x72xf32>
    %29 = arith.addf %24, %28 : vector<64x72xf32>
    %c0_29 = arith.constant 0 : index
    %c2 = arith.constant 2 : index
    %30 = vector.load %arg21[%c0_29, %c2] : memref<32x86xbf16, #tpu.memory_space<vmem>>, vector<32x72xbf16>
    %c2_30 = arith.constant 2 : index
    %c0_31 = arith.constant 0 : index
    %c0_32 = arith.constant 0 : index
    %31 = vector.load %arg6[%c2_30, %c0_31, %c0_32] : memref<9x64x32xbf16, #tpu.memory_space<vmem>>, vector<1x64x32xbf16>
    %32 = vector.shape_cast %31 : vector<1x64x32xbf16> to vector<64x32xbf16>
    %cst_33 = arith.constant dense<0.000000e+00> : vector<64x72xf32>
    %33 = tpu.matmul %32, %30, %cst_33 {dimension_numbers = #tpu.dot_dimension_numbers<[1], [0], [0], [1], [0, 0, 1, 1], [], []>} : vector<64x32xbf16>, vector<32x72xbf16>, vector<64x72xf32> -> vector<64x72xf32>
    %34 = arith.addf %29, %33 : vector<64x72xf32>
    %c0_34 = arith.constant 0 : index
    %c6 = arith.constant 6 : index
    %35 = vector.load %arg21[%c0_34, %c6] : memref<32x86xbf16, #tpu.memory_space<vmem>>, vector<32x72xbf16>
    %c3 = arith.constant 3 : index
    %c0_35 = arith.constant 0 : index
    %c0_36 = arith.constant 0 : index
    %36 = vector.load %arg6[%c3, %c0_35, %c0_36] : memref<9x64x32xbf16, #tpu.memory_space<vmem>>, vector<1x64x32xbf16>
    %37 = vector.shape_cast %36 : vector<1x64x32xbf16> to vector<64x32xbf16>
    %cst_37 = arith.constant dense<0.000000e+00> : vector<64x72xf32>
    %38 = tpu.matmul %37, %35, %cst_37 {dimension_numbers = #tpu.dot_dimension_numbers<[1], [0], [0], [1], [0, 0, 1, 1], [], []>} : vector<64x32xbf16>, vector<32x72xbf16>, vector<64x72xf32> -> vector<64x72xf32>
    %39 = arith.addf %34, %38 : vector<64x72xf32>
    %c0_38 = arith.constant 0 : index
    %c7_39 = arith.constant 7 : index
    %40 = vector.load %arg21[%c0_38, %c7_39] : memref<32x86xbf16, #tpu.memory_space<vmem>>, vector<32x72xbf16>
    %c4 = arith.constant 4 : index
    %c0_40 = arith.constant 0 : index
    %c0_41 = arith.constant 0 : index
    %41 = vector.load %arg6[%c4, %c0_40, %c0_41] : memref<9x64x32xbf16, #tpu.memory_space<vmem>>, vector<1x64x32xbf16>
    %42 = vector.shape_cast %41 : vector<1x64x32xbf16> to vector<64x32xbf16>
    %cst_42 = arith.constant dense<0.000000e+00> : vector<64x72xf32>
    %43 = tpu.matmul %42, %40, %cst_42 {dimension_numbers = #tpu.dot_dimension_numbers<[1], [0], [0], [1], [0, 0, 1, 1], [], []>} : vector<64x32xbf16>, vector<32x72xbf16>, vector<64x72xf32> -> vector<64x72xf32>
    %44 = arith.addf %39, %43 : vector<64x72xf32>
    %c0_43 = arith.constant 0 : index
    %c8 = arith.constant 8 : index
    %45 = vector.load %arg21[%c0_43, %c8] : memref<32x86xbf16, #tpu.memory_space<vmem>>, vector<32x72xbf16>
    %c5 = arith.constant 5 : index
    %c0_44 = arith.constant 0 : index
    %c0_45 = arith.constant 0 : index
    %46 = vector.load %arg6[%c5, %c0_44, %c0_45] : memref<9x64x32xbf16, #tpu.memory_space<vmem>>, vector<1x64x32xbf16>
    %47 = vector.shape_cast %46 : vector<1x64x32xbf16> to vector<64x32xbf16>
    %cst_46 = arith.constant dense<0.000000e+00> : vector<64x72xf32>
    %48 = tpu.matmul %47, %45, %cst_46 {dimension_numbers = #tpu.dot_dimension_numbers<[1], [0], [0], [1], [0, 0, 1, 1], [], []>} : vector<64x32xbf16>, vector<32x72xbf16>, vector<64x72xf32> -> vector<64x72xf32>
    %49 = arith.addf %44, %48 : vector<64x72xf32>
    %c0_47 = arith.constant 0 : index
    %c12 = arith.constant 12 : index
    %50 = vector.load %arg21[%c0_47, %c12] : memref<32x86xbf16, #tpu.memory_space<vmem>>, vector<32x72xbf16>
    %c6_48 = arith.constant 6 : index
    %c0_49 = arith.constant 0 : index
    %c0_50 = arith.constant 0 : index
    %51 = vector.load %arg6[%c6_48, %c0_49, %c0_50] : memref<9x64x32xbf16, #tpu.memory_space<vmem>>, vector<1x64x32xbf16>
    %52 = vector.shape_cast %51 : vector<1x64x32xbf16> to vector<64x32xbf16>
    %cst_51 = arith.constant dense<0.000000e+00> : vector<64x72xf32>
    %53 = tpu.matmul %52, %50, %cst_51 {dimension_numbers = #tpu.dot_dimension_numbers<[1], [0], [0], [1], [0, 0, 1, 1], [], []>} : vector<64x32xbf16>, vector<32x72xbf16>, vector<64x72xf32> -> vector<64x72xf32>
    %54 = arith.addf %49, %53 : vector<64x72xf32>
    %c0_52 = arith.constant 0 : index
    %c13 = arith.constant 13 : index
    %55 = vector.load %arg21[%c0_52, %c13] : memref<32x86xbf16, #tpu.memory_space<vmem>>, vector<32x72xbf16>
    %c7_53 = arith.constant 7 : index
    %c0_54 = arith.constant 0 : index
    %c0_55 = arith.constant 0 : index
    %56 = vector.load %arg6[%c7_53, %c0_54, %c0_55] : memref<9x64x32xbf16, #tpu.memory_space<vmem>>, vector<1x64x32xbf16>
    %57 = vector.shape_cast %56 : vector<1x64x32xbf16> to vector<64x32xbf16>
    %cst_56 = arith.constant dense<0.000000e+00> : vector<64x72xf32>
    %58 = tpu.matmul %57, %55, %cst_56 {dimension_numbers = #tpu.dot_dimension_numbers<[1], [0], [0], [1], [0, 0, 1, 1], [], []>} : vector<64x32xbf16>, vector<32x72xbf16>, vector<64x72xf32> -> vector<64x72xf32>
    %59 = arith.addf %54, %58 : vector<64x72xf32>
    %c0_57 = arith.constant 0 : index
    %c14 = arith.constant 14 : index
    %60 = vector.load %arg21[%c0_57, %c14] : memref<32x86xbf16, #tpu.memory_space<vmem>>, vector<32x72xbf16>
    %c8_58 = arith.constant 8 : index
    %c0_59 = arith.constant 0 : index
    %c0_60 = arith.constant 0 : index
    %61 = vector.load %arg6[%c8_58, %c0_59, %c0_60] : memref<9x64x32xbf16, #tpu.memory_space<vmem>>, vector<1x64x32xbf16>
    %62 = vector.shape_cast %61 : vector<1x64x32xbf16> to vector<64x32xbf16>
    %cst_61 = arith.constant dense<0.000000e+00> : vector<64x72xf32>
    %63 = tpu.matmul %62, %60, %cst_61 {dimension_numbers = #tpu.dot_dimension_numbers<[1], [0], [0], [1], [0, 0, 1, 1], [], []>} : vector<64x32xbf16>, vector<32x72xbf16>, vector<64x72xf32> -> vector<64x72xf32>
    %64 = arith.addf %59, %63 : vector<64x72xf32>
    %c0_62 = arith.constant 0 : index
    %c0_63 = arith.constant 0 : index
    %65 = vector.load %arg7[%c0_62, %c0_63] : memref<64x1xf32, #tpu.memory_space<vmem>>, vector<64x1xf32>
    %66 = vector.broadcast %65 : vector<64x1xf32> to vector<64x72xf32>
    %67 = arith.addf %64, %66 : vector<64x72xf32>
    %cst_64 = arith.constant 0.000000e+00 : f32
    %68 = vector.broadcast %cst_64 : f32 to vector<64x72xf32>
    %69 = arith.maximumf %67, %68 : vector<64x72xf32>
    %c0_65 = arith.constant 0 : index
    %c0_66 = arith.constant 0 : index
    %70 = vector.load %arg10[%c0_65, %c0_66] : memref<1x72xf32, #tpu.memory_space<vmem>>, vector<1x72xf32>
    %c0_67 = arith.constant 0 : index
    %c0_68 = arith.constant 0 : index
    %71 = vector.load %arg8[%c0_67, %c0_68] : memref<16x1xf32, #tpu.memory_space<vmem>>, vector<16x1xf32>
    %c0_69 = arith.constant 0 : index
    %c0_70 = arith.constant 0 : index
    %72 = vector.load %arg9[%c0_69, %c0_70] : memref<16x1xf32, #tpu.memory_space<vmem>>, vector<16x1xf32>
    %73 = vector.broadcast %70 : vector<1x72xf32> to vector<64x72xf32>
    %74 = arith.mulf %69, %73 : vector<64x72xf32>
    %cst_71 = arith.constant dense<0.000000e+00> : vector<64xf32>
    %75 = vector.multi_reduction <add>, %74, %cst_71 [1] : vector<64x72xf32> to vector<64xf32>
    %76 = vector.shape_cast %75 : vector<64xf32> to vector<64x1xf32>
    %77 = arith.mulf %69, %69 : vector<64x72xf32>
    %78 = vector.broadcast %70 : vector<1x72xf32> to vector<64x72xf32>
    %79 = arith.mulf %77, %78 : vector<64x72xf32>
    %cst_72 = arith.constant dense<0.000000e+00> : vector<64xf32>
    %80 = vector.multi_reduction <add>, %79, %cst_72 [1] : vector<64x72xf32> to vector<64xf32>
    %81 = vector.shape_cast %80 : vector<64xf32> to vector<64x1xf32>
    %82 = vector.extract_strided_slice %76 {offsets = [0, 0], sizes = [16, 1], strides = [1, 1]} : vector<64x1xf32> to vector<16x1xf32>
    %83 = vector.extract_strided_slice %76 {offsets = [16, 0], sizes = [16, 1], strides = [1, 1]} : vector<64x1xf32> to vector<16x1xf32>
    %84 = arith.addf %82, %83 : vector<16x1xf32>
    %85 = vector.extract_strided_slice %76 {offsets = [32, 0], sizes = [16, 1], strides = [1, 1]} : vector<64x1xf32> to vector<16x1xf32>
    %86 = arith.addf %84, %85 : vector<16x1xf32>
    %87 = vector.extract_strided_slice %76 {offsets = [48, 0], sizes = [16, 1], strides = [1, 1]} : vector<64x1xf32> to vector<16x1xf32>
    %88 = arith.addf %86, %87 : vector<16x1xf32>
    %89 = vector.extract_strided_slice %81 {offsets = [0, 0], sizes = [16, 1], strides = [1, 1]} : vector<64x1xf32> to vector<16x1xf32>
    %90 = vector.extract_strided_slice %81 {offsets = [16, 0], sizes = [16, 1], strides = [1, 1]} : vector<64x1xf32> to vector<16x1xf32>
    %91 = arith.addf %89, %90 : vector<16x1xf32>
    %92 = vector.extract_strided_slice %81 {offsets = [32, 0], sizes = [16, 1], strides = [1, 1]} : vector<64x1xf32> to vector<16x1xf32>
    %93 = arith.addf %91, %92 : vector<16x1xf32>
    %94 = vector.extract_strided_slice %81 {offsets = [48, 0], sizes = [16, 1], strides = [1, 1]} : vector<64x1xf32> to vector<16x1xf32>
    %95 = arith.addf %93, %94 : vector<16x1xf32>
    %cst_73 = arith.constant 7.812500e-03 : f32
    %96 = vector.broadcast %cst_73 : f32 to vector<16x1xf32>
    %97 = arith.mulf %88, %96 : vector<16x1xf32>
    %cst_74 = arith.constant 7.812500e-03 : f32
    %98 = vector.broadcast %cst_74 : f32 to vector<16x1xf32>
    %99 = arith.mulf %95, %98 : vector<16x1xf32>
    %100 = arith.mulf %97, %97 : vector<16x1xf32>
    %101 = arith.subf %99, %100 : vector<16x1xf32>
    %cst_75 = arith.constant 9.99999974E-6 : f32
    %102 = vector.broadcast %cst_75 : f32 to vector<16x1xf32>
    %103 = arith.addf %101, %102 : vector<16x1xf32>
    %104 = math.rsqrt %103 : vector<16x1xf32>
    %105 = arith.mulf %71, %104 : vector<16x1xf32>
    %106 = arith.mulf %97, %105 : vector<16x1xf32>
    %107 = arith.subf %72, %106 : vector<16x1xf32>
    %108 = vector.extract_strided_slice %69 {offsets = [0, 0], sizes = [16, 72], strides = [1, 1]} : vector<64x72xf32> to vector<16x72xf32>
    %109 = vector.broadcast %105 : vector<16x1xf32> to vector<16x72xf32>
    %110 = arith.mulf %108, %109 : vector<16x72xf32>
    %111 = vector.broadcast %107 : vector<16x1xf32> to vector<16x72xf32>
    %112 = arith.addf %110, %111 : vector<16x72xf32>
    %113 = arith.truncf %112 : vector<16x72xf32> to vector<16x72xbf16>
    %c0_76 = arith.constant 0 : index
    %c0_77 = arith.constant 0 : index
    %c0_78 = arith.constant 0 : index
    %114 = vector.load %arg11[%c0_76, %c0_77, %c0_78] : memref<4x72x162xbf16, #tpu.memory_space<vmem>>, vector<1x72x162xbf16>
    %115 = vector.shape_cast %114 : vector<1x72x162xbf16> to vector<72x162xbf16>
    %cst_79 = arith.constant dense<0.000000e+00> : vector<16x162xf32>
    %116 = tpu.matmul %113, %115, %cst_79 {dimension_numbers = #tpu.dot_dimension_numbers<[1], [0], [0], [1], [0, 0, 1, 1], [], []>} : vector<16x72xbf16>, vector<72x162xbf16>, vector<16x162xf32> -> vector<16x162xf32>
    %117 = vector.extract_strided_slice %69 {offsets = [16, 0], sizes = [16, 72], strides = [1, 1]} : vector<64x72xf32> to vector<16x72xf32>
    %118 = vector.broadcast %105 : vector<16x1xf32> to vector<16x72xf32>
    %119 = arith.mulf %117, %118 : vector<16x72xf32>
    %120 = vector.broadcast %107 : vector<16x1xf32> to vector<16x72xf32>
    %121 = arith.addf %119, %120 : vector<16x72xf32>
    %122 = arith.truncf %121 : vector<16x72xf32> to vector<16x72xbf16>
    %c1_80 = arith.constant 1 : index
    %c0_81 = arith.constant 0 : index
    %c0_82 = arith.constant 0 : index
    %123 = vector.load %arg11[%c1_80, %c0_81, %c0_82] : memref<4x72x162xbf16, #tpu.memory_space<vmem>>, vector<1x72x162xbf16>
    %124 = vector.shape_cast %123 : vector<1x72x162xbf16> to vector<72x162xbf16>
    %cst_83 = arith.constant dense<0.000000e+00> : vector<16x162xf32>
    %125 = tpu.matmul %122, %124, %cst_83 {dimension_numbers = #tpu.dot_dimension_numbers<[1], [0], [0], [1], [0, 0, 1, 1], [], []>} : vector<16x72xbf16>, vector<72x162xbf16>, vector<16x162xf32> -> vector<16x162xf32>
    %126 = arith.addf %116, %125 : vector<16x162xf32>
    %127 = vector.extract_strided_slice %69 {offsets = [32, 0], sizes = [16, 72], strides = [1, 1]} : vector<64x72xf32> to vector<16x72xf32>
    %128 = vector.broadcast %105 : vector<16x1xf32> to vector<16x72xf32>
    %129 = arith.mulf %127, %128 : vector<16x72xf32>
    %130 = vector.broadcast %107 : vector<16x1xf32> to vector<16x72xf32>
    %131 = arith.addf %129, %130 : vector<16x72xf32>
    %132 = arith.truncf %131 : vector<16x72xf32> to vector<16x72xbf16>
    %c2_84 = arith.constant 2 : index
    %c0_85 = arith.constant 0 : index
    %c0_86 = arith.constant 0 : index
    %133 = vector.load %arg11[%c2_84, %c0_85, %c0_86] : memref<4x72x162xbf16, #tpu.memory_space<vmem>>, vector<1x72x162xbf16>
    %134 = vector.shape_cast %133 : vector<1x72x162xbf16> to vector<72x162xbf16>
    %cst_87 = arith.constant dense<0.000000e+00> : vector<16x162xf32>
    %135 = tpu.matmul %132, %134, %cst_87 {dimension_numbers = #tpu.dot_dimension_numbers<[1], [0], [0], [1], [0, 0, 1, 1], [], []>} : vector<16x72xbf16>, vector<72x162xbf16>, vector<16x162xf32> -> vector<16x162xf32>
    %136 = arith.addf %126, %135 : vector<16x162xf32>
    %137 = vector.extract_strided_slice %69 {offsets = [48, 0], sizes = [16, 72], strides = [1, 1]} : vector<64x72xf32> to vector<16x72xf32>
    %138 = vector.broadcast %105 : vector<16x1xf32> to vector<16x72xf32>
    %139 = arith.mulf %137, %138 : vector<16x72xf32>
    %140 = vector.broadcast %107 : vector<16x1xf32> to vector<16x72xf32>
    %141 = arith.addf %139, %140 : vector<16x72xf32>
    %142 = arith.truncf %141 : vector<16x72xf32> to vector<16x72xbf16>
    %c3_88 = arith.constant 3 : index
    %c0_89 = arith.constant 0 : index
    %c0_90 = arith.constant 0 : index
    %143 = vector.load %arg11[%c3_88, %c0_89, %c0_90] : memref<4x72x162xbf16, #tpu.memory_space<vmem>>, vector<1x72x162xbf16>
    %144 = vector.shape_cast %143 : vector<1x72x162xbf16> to vector<72x162xbf16>
    %cst_91 = arith.constant dense<0.000000e+00> : vector<16x162xf32>
    %145 = tpu.matmul %142, %144, %cst_91 {dimension_numbers = #tpu.dot_dimension_numbers<[1], [0], [0], [1], [0, 0, 1, 1], [], []>} : vector<16x72xbf16>, vector<72x162xbf16>, vector<16x162xf32> -> vector<16x162xf32>
    %146 = arith.addf %136, %145 : vector<16x162xf32>
    %cst_92 = arith.constant 0.000000e+00 : bf16
    %147 = vector.broadcast %cst_92 : bf16 to vector<16x182xbf16>
    %c0_93 = arith.constant 0 : index
    %c0_94 = arith.constant 0 : index
    %148 = vector.load %arg22[%c0_93, %c0_94] : memref<16x182xbf16, #tpu.memory_space<vmem>>, vector<16x182xbf16>
    tpu.vector_store %arg22[%c0_93, %c0_94], %147 {strides = array<i32>} : memref<16x182xbf16, #tpu.memory_space<vmem>>, vector<16x182xbf16>,
    %149 = arith.truncf %146 : vector<16x162xf32> to vector<16x162xbf16>
    %c0_95 = arith.constant 0 : index
    %c10 = arith.constant 10 : index
    %150 = vector.load %arg22[%c0_95, %c10] : memref<16x182xbf16, #tpu.memory_space<vmem>>, vector<16x162xbf16>
    tpu.vector_store %arg22[%c0_95, %c10], %149 {strides = array<i32>} : memref<16x182xbf16, #tpu.memory_space<vmem>>, vector<16x162xbf16>,
    %c0_96 = arith.constant 0 : index
    %c0_97 = arith.constant 0 : index
    %151 = vector.load %arg22[%c0_96, %c0_97] : memref<16x182xbf16, #tpu.memory_space<vmem>>, vector<16x162xbf16>
    %c0_98 = arith.constant 0 : index
    %c0_99 = arith.constant 0 : index
    %c0_100 = arith.constant 0 : index
    %152 = vector.load %arg12[%c0_98, %c0_99, %c0_100] : memref<9x32x16xbf16, #tpu.memory_space<vmem>>, vector<1x32x16xbf16>
    %153 = vector.shape_cast %152 : vector<1x32x16xbf16> to vector<32x16xbf16>
    %cst_101 = arith.constant dense<0.000000e+00> : vector<32x162xf32>
    %154 = tpu.matmul %153, %151, %cst_101 {dimension_numbers = #tpu.dot_dimension_numbers<[1], [0], [0], [1], [0, 0, 1, 1], [], []>} : vector<32x16xbf16>, vector<16x162xbf16>, vector<32x162xf32> -> vector<32x162xf32>
    %c0_102 = arith.constant 0 : index
    %c1_103 = arith.constant 1 : index
    %155 = vector.load %arg22[%c0_102, %c1_103] : memref<16x182xbf16, #tpu.memory_space<vmem>>, vector<16x162xbf16>
    %c1_104 = arith.constant 1 : index
    %c0_105 = arith.constant 0 : index
    %c0_106 = arith.constant 0 : index
    %156 = vector.load %arg12[%c1_104, %c0_105, %c0_106] : memref<9x32x16xbf16, #tpu.memory_space<vmem>>, vector<1x32x16xbf16>
    %157 = vector.shape_cast %156 : vector<1x32x16xbf16> to vector<32x16xbf16>
    %cst_107 = arith.constant dense<0.000000e+00> : vector<32x162xf32>
    %158 = tpu.matmul %157, %155, %cst_107 {dimension_numbers = #tpu.dot_dimension_numbers<[1], [0], [0], [1], [0, 0, 1, 1], [], []>} : vector<32x16xbf16>, vector<16x162xbf16>, vector<32x162xf32> -> vector<32x162xf32>
    %159 = arith.addf %154, %158 : vector<32x162xf32>
    %c0_108 = arith.constant 0 : index
    %c2_109 = arith.constant 2 : index
    %160 = vector.load %arg22[%c0_108, %c2_109] : memref<16x182xbf16, #tpu.memory_space<vmem>>, vector<16x162xbf16>
    %c2_110 = arith.constant 2 : index
    %c0_111 = arith.constant 0 : index
    %c0_112 = arith.constant 0 : index
    %161 = vector.load %arg12[%c2_110, %c0_111, %c0_112] : memref<9x32x16xbf16, #tpu.memory_space<vmem>>, vector<1x32x16xbf16>
    %162 = vector.shape_cast %161 : vector<1x32x16xbf16> to vector<32x16xbf16>
    %cst_113 = arith.constant dense<0.000000e+00> : vector<32x162xf32>
    %163 = tpu.matmul %162, %160, %cst_113 {dimension_numbers = #tpu.dot_dimension_numbers<[1], [0], [0], [1], [0, 0, 1, 1], [], []>} : vector<32x16xbf16>, vector<16x162xbf16>, vector<32x162xf32> -> vector<32x162xf32>
    %164 = arith.addf %159, %163 : vector<32x162xf32>
    %c0_114 = arith.constant 0 : index
    %c9 = arith.constant 9 : index
    %165 = vector.load %arg22[%c0_114, %c9] : memref<16x182xbf16, #tpu.memory_space<vmem>>, vector<16x162xbf16>
    %c3_115 = arith.constant 3 : index
    %c0_116 = arith.constant 0 : index
    %c0_117 = arith.constant 0 : index
    %166 = vector.load %arg12[%c3_115, %c0_116, %c0_117] : memref<9x32x16xbf16, #tpu.memory_space<vmem>>, vector<1x32x16xbf16>
    %167 = vector.shape_cast %166 : vector<1x32x16xbf16> to vector<32x16xbf16>
    %cst_118 = arith.constant dense<0.000000e+00> : vector<32x162xf32>
    %168 = tpu.matmul %167, %165, %cst_118 {dimension_numbers = #tpu.dot_dimension_numbers<[1], [0], [0], [1], [0, 0, 1, 1], [], []>} : vector<32x16xbf16>, vector<16x162xbf16>, vector<32x162xf32> -> vector<32x162xf32>
    %169 = arith.addf %164, %168 : vector<32x162xf32>
    %c0_119 = arith.constant 0 : index
    %c10_120 = arith.constant 10 : index
    %170 = vector.load %arg22[%c0_119, %c10_120] : memref<16x182xbf16, #tpu.memory_space<vmem>>, vector<16x162xbf16>
    %c4_121 = arith.constant 4 : index
    %c0_122 = arith.constant 0 : index
    %c0_123 = arith.constant 0 : index
    %171 = vector.load %arg12[%c4_121, %c0_122, %c0_123] : memref<9x32x16xbf16, #tpu.memory_space<vmem>>, vector<1x32x16xbf16>
    %172 = vector.shape_cast %171 : vector<1x32x16xbf16> to vector<32x16xbf16>
    %cst_124 = arith.constant dense<0.000000e+00> : vector<32x162xf32>
    %173 = tpu.matmul %172, %170, %cst_124 {dimension_numbers = #tpu.dot_dimension_numbers<[1], [0], [0], [1], [0, 0, 1, 1], [], []>} : vector<32x16xbf16>, vector<16x162xbf16>, vector<32x162xf32> -> vector<32x162xf32>
    %174 = arith.addf %169, %173 : vector<32x162xf32>
    %c0_125 = arith.constant 0 : index
    %c11 = arith.constant 11 : index
    %175 = vector.load %arg22[%c0_125, %c11] : memref<16x182xbf16, #tpu.memory_space<vmem>>, vector<16x162xbf16>
    %c5_126 = arith.constant 5 : index
    %c0_127 = arith.constant 0 : index
    %c0_128 = arith.constant 0 : index
    %176 = vector.load %arg12[%c5_126, %c0_127, %c0_128] : memref<9x32x16xbf16, #tpu.memory_space<vmem>>, vector<1x32x16xbf16>
    %177 = vector.shape_cast %176 : vector<1x32x16xbf16> to vector<32x16xbf16>
    %cst_129 = arith.constant dense<0.000000e+00> : vector<32x162xf32>
    %178 = tpu.matmul %177, %175, %cst_129 {dimension_numbers = #tpu.dot_dimension_numbers<[1], [0], [0], [1], [0, 0, 1, 1], [], []>} : vector<32x16xbf16>, vector<16x162xbf16>, vector<32x162xf32> -> vector<32x162xf32>
    %179 = arith.addf %174, %178 : vector<32x162xf32>
    %c0_130 = arith.constant 0 : index
    %c18 = arith.constant 18 : index
    %180 = vector.load %arg22[%c0_130, %c18] : memref<16x182xbf16, #tpu.memory_space<vmem>>, vector<16x162xbf16>
    %c6_131 = arith.constant 6 : index
    %c0_132 = arith.constant 0 : index
    %c0_133 = arith.constant 0 : index
    %181 = vector.load %arg12[%c6_131, %c0_132, %c0_133] : memref<9x32x16xbf16, #tpu.memory_space<vmem>>, vector<1x32x16xbf16>
    %182 = vector.shape_cast %181 : vector<1x32x16xbf16> to vector<32x16xbf16>
    %cst_134 = arith.constant dense<0.000000e+00> : vector<32x162xf32>
    %183 = tpu.matmul %182, %180, %cst_134 {dimension_numbers = #tpu.dot_dimension_numbers<[1], [0], [0], [1], [0, 0, 1, 1], [], []>} : vector<32x16xbf16>, vector<16x162xbf16>, vector<32x162xf32> -> vector<32x162xf32>
    %184 = arith.addf %179, %183 : vector<32x162xf32>
    %c0_135 = arith.constant 0 : index
    %c19 = arith.constant 19 : index
    %185 = vector.load %arg22[%c0_135, %c19] : memref<16x182xbf16, #tpu.memory_space<vmem>>, vector<16x162xbf16>
    %c7_136 = arith.constant 7 : index
    %c0_137 = arith.constant 0 : index
    %c0_138 = arith.constant 0 : index
    %186 = vector.load %arg12[%c7_136, %c0_137, %c0_138] : memref<9x32x16xbf16, #tpu.memory_space<vmem>>, vector<1x32x16xbf16>
    %187 = vector.shape_cast %186 : vector<1x32x16xbf16> to vector<32x16xbf16>
    %cst_139 = arith.constant dense<0.000000e+00> : vector<32x162xf32>
    %188 = tpu.matmul %187, %185, %cst_139 {dimension_numbers = #tpu.dot_dimension_numbers<[1], [0], [0], [1], [0, 0, 1, 1], [], []>} : vector<32x16xbf16>, vector<16x162xbf16>, vector<32x162xf32> -> vector<32x162xf32>
    %189 = arith.addf %184, %188 : vector<32x162xf32>
    %c0_140 = arith.constant 0 : index
    %c20 = arith.constant 20 : index
    %190 = vector.load %arg22[%c0_140, %c20] : memref<16x182xbf16, #tpu.memory_space<vmem>>, vector<16x162xbf16>
    %c8_141 = arith.constant 8 : index
    %c0_142 = arith.constant 0 : index
    %c0_143 = arith.constant 0 : index
    %191 = vector.load %arg12[%c8_141, %c0_142, %c0_143] : memref<9x32x16xbf16, #tpu.memory_space<vmem>>, vector<1x32x16xbf16>
    %192 = vector.shape_cast %191 : vector<1x32x16xbf16> to vector<32x16xbf16>
    %cst_144 = arith.constant dense<0.000000e+00> : vector<32x162xf32>
    %193 = tpu.matmul %192, %190, %cst_144 {dimension_numbers = #tpu.dot_dimension_numbers<[1], [0], [0], [1], [0, 0, 1, 1], [], []>} : vector<32x16xbf16>, vector<16x162xbf16>, vector<32x162xf32> -> vector<32x162xf32>
    %194 = arith.addf %189, %193 : vector<32x162xf32>
    %c0_145 = arith.constant 0 : index
    %c0_146 = arith.constant 0 : index
    %195 = vector.load %arg13[%c0_145, %c0_146] : memref<32x1xf32, #tpu.memory_space<vmem>>, vector<32x1xf32>
    %196 = vector.broadcast %195 : vector<32x1xf32> to vector<32x162xf32>
    %197 = arith.addf %194, %196 : vector<32x162xf32>
    %cst_147 = arith.constant 0.000000e+00 : f32
    %198 = vector.broadcast %cst_147 : f32 to vector<32x162xf32>
    %199 = arith.maximumf %197, %198 : vector<32x162xf32>
    %c0_148 = arith.constant 0 : index
    %c0_149 = arith.constant 0 : index
    %200 = vector.load %arg16[%c0_148, %c0_149] : memref<1x162xf32, #tpu.memory_space<vmem>>, vector<1x162xf32>
    %c0_150 = arith.constant 0 : index
    %c0_151 = arith.constant 0 : index
    %201 = vector.load %arg14[%c0_150, %c0_151] : memref<8x1xf32, #tpu.memory_space<vmem>>, vector<8x1xf32>
    %c0_152 = arith.constant 0 : index
    %c0_153 = arith.constant 0 : index
    %202 = vector.load %arg15[%c0_152, %c0_153] : memref<8x1xf32, #tpu.memory_space<vmem>>, vector<8x1xf32>
    %203 = vector.broadcast %200 : vector<1x162xf32> to vector<32x162xf32>
    %204 = arith.mulf %199, %203 : vector<32x162xf32>
    %cst_154 = arith.constant dense<0.000000e+00> : vector<32xf32>
    %205 = vector.multi_reduction <add>, %204, %cst_154 [1] : vector<32x162xf32> to vector<32xf32>
    %206 = vector.shape_cast %205 : vector<32xf32> to vector<32x1xf32>
    %207 = arith.mulf %199, %199 : vector<32x162xf32>
    %208 = vector.broadcast %200 : vector<1x162xf32> to vector<32x162xf32>
    %209 = arith.mulf %207, %208 : vector<32x162xf32>
    %cst_155 = arith.constant dense<0.000000e+00> : vector<32xf32>
    %210 = vector.multi_reduction <add>, %209, %cst_155 [1] : vector<32x162xf32> to vector<32xf32>
    %211 = vector.shape_cast %210 : vector<32xf32> to vector<32x1xf32>
    %212 = vector.extract_strided_slice %206 {offsets = [0, 0], sizes = [8, 1], strides = [1, 1]} : vector<32x1xf32> to vector<8x1xf32>
    %213 = vector.extract_strided_slice %206 {offsets = [8, 0], sizes = [8, 1], strides = [1, 1]} : vector<32x1xf32> to vector<8x1xf32>
    %214 = arith.addf %212, %213 : vector<8x1xf32>
    %215 = vector.extract_strided_slice %206 {offsets = [16, 0], sizes = [8, 1], strides = [1, 1]} : vector<32x1xf32> to vector<8x1xf32>
    %216 = arith.addf %214, %215 : vector<8x1xf32>
    %217 = vector.extract_strided_slice %206 {offsets = [24, 0], sizes = [8, 1], strides = [1, 1]} : vector<32x1xf32> to vector<8x1xf32>
    %218 = arith.addf %216, %217 : vector<8x1xf32>
    %219 = vector.extract_strided_slice %211 {offsets = [0, 0], sizes = [8, 1], strides = [1, 1]} : vector<32x1xf32> to vector<8x1xf32>
    %220 = vector.extract_strided_slice %211 {offsets = [8, 0], sizes = [8, 1], strides = [1, 1]} : vector<32x1xf32> to vector<8x1xf32>
    %221 = arith.addf %219, %220 : vector<8x1xf32>
    %222 = vector.extract_strided_slice %211 {offsets = [16, 0], sizes = [8, 1], strides = [1, 1]} : vector<32x1xf32> to vector<8x1xf32>
    %223 = arith.addf %221, %222 : vector<8x1xf32>
    %224 = vector.extract_strided_slice %211 {offsets = [24, 0], sizes = [8, 1], strides = [1, 1]} : vector<32x1xf32> to vector<8x1xf32>
    %225 = arith.addf %223, %224 : vector<8x1xf32>
    %cst_156 = arith.constant 0.00255102036 : f32
    %226 = vector.broadcast %cst_156 : f32 to vector<8x1xf32>
    %227 = arith.mulf %218, %226 : vector<8x1xf32>
    %cst_157 = arith.constant 0.00255102036 : f32
    %228 = vector.broadcast %cst_157 : f32 to vector<8x1xf32>
    %229 = arith.mulf %225, %228 : vector<8x1xf32>
    %230 = arith.mulf %227, %227 : vector<8x1xf32>
    %231 = arith.subf %229, %230 : vector<8x1xf32>
    %cst_158 = arith.constant 9.99999974E-6 : f32
    %232 = vector.broadcast %cst_158 : f32 to vector<8x1xf32>
    %233 = arith.addf %231, %232 : vector<8x1xf32>
    %234 = math.rsqrt %233 : vector<8x1xf32>
    %235 = arith.mulf %201, %234 : vector<8x1xf32>
    %236 = arith.mulf %227, %235 : vector<8x1xf32>
    %237 = arith.subf %202, %236 : vector<8x1xf32>
    %238 = vector.extract_strided_slice %199 {offsets = [0, 0], sizes = [8, 162], strides = [1, 1]} : vector<32x162xf32> to vector<8x162xf32>
    %239 = vector.broadcast %235 : vector<8x1xf32> to vector<8x162xf32>
    %240 = arith.mulf %238, %239 : vector<8x162xf32>
    %241 = vector.broadcast %237 : vector<8x1xf32> to vector<8x162xf32>
    %242 = arith.addf %240, %241 : vector<8x162xf32>
    %243 = arith.truncf %242 : vector<8x162xf32> to vector<8x162xbf16>
    %c0_159 = arith.constant 0 : index
    %c0_160 = arith.constant 0 : index
    %c0_161 = arith.constant 0 : index
    %244 = vector.load %arg17[%c0_159, %c0_160, %c0_161] : memref<4x162x512xbf16, #tpu.memory_space<vmem>>, vector<1x162x512xbf16>
    %245 = vector.shape_cast %244 : vector<1x162x512xbf16> to vector<162x512xbf16>
    %cst_162 = arith.constant dense<0.000000e+00> : vector<8x512xf32>
    %246 = tpu.matmul %243, %245, %cst_162 {dimension_numbers = #tpu.dot_dimension_numbers<[1], [0], [0], [1], [0, 0, 1, 1], [], []>} : vector<8x162xbf16>, vector<162x512xbf16>, vector<8x512xf32> -> vector<8x512xf32>
    %247 = vector.extract_strided_slice %199 {offsets = [8, 0], sizes = [8, 162], strides = [1, 1]} : vector<32x162xf32> to vector<8x162xf32>
    %248 = vector.broadcast %235 : vector<8x1xf32> to vector<8x162xf32>
    %249 = arith.mulf %247, %248 : vector<8x162xf32>
    %250 = vector.broadcast %237 : vector<8x1xf32> to vector<8x162xf32>
    %251 = arith.addf %249, %250 : vector<8x162xf32>
    %252 = arith.truncf %251 : vector<8x162xf32> to vector<8x162xbf16>
    %c1_163 = arith.constant 1 : index
    %c0_164 = arith.constant 0 : index
    %c0_165 = arith.constant 0 : index
    %253 = vector.load %arg17[%c1_163, %c0_164, %c0_165] : memref<4x162x512xbf16, #tpu.memory_space<vmem>>, vector<1x162x512xbf16>
    %254 = vector.shape_cast %253 : vector<1x162x512xbf16> to vector<162x512xbf16>
    %cst_166 = arith.constant dense<0.000000e+00> : vector<8x512xf32>
    %255 = tpu.matmul %252, %254, %cst_166 {dimension_numbers = #tpu.dot_dimension_numbers<[1], [0], [0], [1], [0, 0, 1, 1], [], []>} : vector<8x162xbf16>, vector<162x512xbf16>, vector<8x512xf32> -> vector<8x512xf32>
    %256 = arith.addf %246, %255 : vector<8x512xf32>
    %257 = vector.extract_strided_slice %199 {offsets = [16, 0], sizes = [8, 162], strides = [1, 1]} : vector<32x162xf32> to vector<8x162xf32>
    %258 = vector.broadcast %235 : vector<8x1xf32> to vector<8x162xf32>
    %259 = arith.mulf %257, %258 : vector<8x162xf32>
    %260 = vector.broadcast %237 : vector<8x1xf32> to vector<8x162xf32>
    %261 = arith.addf %259, %260 : vector<8x162xf32>
    %262 = arith.truncf %261 : vector<8x162xf32> to vector<8x162xbf16>
    %c2_167 = arith.constant 2 : index
    %c0_168 = arith.constant 0 : index
    %c0_169 = arith.constant 0 : index
    %263 = vector.load %arg17[%c2_167, %c0_168, %c0_169] : memref<4x162x512xbf16, #tpu.memory_space<vmem>>, vector<1x162x512xbf16>
    %264 = vector.shape_cast %263 : vector<1x162x512xbf16> to vector<162x512xbf16>
    %cst_170 = arith.constant dense<0.000000e+00> : vector<8x512xf32>
    %265 = tpu.matmul %262, %264, %cst_170 {dimension_numbers = #tpu.dot_dimension_numbers<[1], [0], [0], [1], [0, 0, 1, 1], [], []>} : vector<8x162xbf16>, vector<162x512xbf16>, vector<8x512xf32> -> vector<8x512xf32>
    %266 = arith.addf %256, %265 : vector<8x512xf32>
    %267 = vector.extract_strided_slice %199 {offsets = [24, 0], sizes = [8, 162], strides = [1, 1]} : vector<32x162xf32> to vector<8x162xf32>
    %268 = vector.broadcast %235 : vector<8x1xf32> to vector<8x162xf32>
    %269 = arith.mulf %267, %268 : vector<8x162xf32>
    %270 = vector.broadcast %237 : vector<8x1xf32> to vector<8x162xf32>
    %271 = arith.addf %269, %270 : vector<8x162xf32>
    %272 = arith.truncf %271 : vector<8x162xf32> to vector<8x162xbf16>
    %c3_171 = arith.constant 3 : index
    %c0_172 = arith.constant 0 : index
    %c0_173 = arith.constant 0 : index
    %273 = vector.load %arg17[%c3_171, %c0_172, %c0_173] : memref<4x162x512xbf16, #tpu.memory_space<vmem>>, vector<1x162x512xbf16>
    %274 = vector.shape_cast %273 : vector<1x162x512xbf16> to vector<162x512xbf16>
    %cst_174 = arith.constant dense<0.000000e+00> : vector<8x512xf32>
    %275 = tpu.matmul %272, %274, %cst_174 {dimension_numbers = #tpu.dot_dimension_numbers<[1], [0], [0], [1], [0, 0, 1, 1], [], []>} : vector<8x162xbf16>, vector<162x512xbf16>, vector<8x512xf32> -> vector<8x512xf32>
    %276 = arith.addf %266, %275 : vector<8x512xf32>
    %cst_175 = arith.constant 0.000000e+00 : bf16
    %277 = vector.broadcast %cst_175 : bf16 to vector<8x546xbf16>
    %c0_176 = arith.constant 0 : index
    %c0_177 = arith.constant 0 : index
    %278 = vector.load %arg23[%c0_176, %c0_177] : memref<8x546xbf16, #tpu.memory_space<vmem>>, vector<8x546xbf16>
    tpu.vector_store %arg23[%c0_176, %c0_177], %277 {strides = array<i32>} : memref<8x546xbf16, #tpu.memory_space<vmem>>, vector<8x546xbf16>,
    %279 = arith.truncf %276 : vector<8x512xf32> to vector<8x512xbf16>
    %c0_178 = arith.constant 0 : index
    %c17 = arith.constant 17 : index
    %280 = vector.load %arg23[%c0_178, %c17] : memref<8x546xbf16, #tpu.memory_space<vmem>>, vector<8x512xbf16>
    tpu.vector_store %arg23[%c0_178, %c17], %279 {strides = array<i32>} : memref<8x546xbf16, #tpu.memory_space<vmem>>, vector<8x512xbf16>,
    %c0_179 = arith.constant 0 : index
    %c0_180 = arith.constant 0 : index
    %281 = vector.load %arg23[%c0_179, %c0_180] : memref<8x546xbf16, #tpu.memory_space<vmem>>, vector<8x512xbf16>
    %c0_181 = arith.constant 0 : index
    %c0_182 = arith.constant 0 : index
    %c0_183 = arith.constant 0 : index
    %282 = vector.load %arg18[%c0_181, %c0_182, %c0_183] : memref<9x4x8xbf16, #tpu.memory_space<vmem>>, vector<1x4x8xbf16>
    %283 = vector.shape_cast %282 : vector<1x4x8xbf16> to vector<4x8xbf16>
    %cst_184 = arith.constant dense<0.000000e+00> : vector<4x512xf32>
    %284 = tpu.matmul %283, %281, %cst_184 {dimension_numbers = #tpu.dot_dimension_numbers<[1], [0], [0], [1], [0, 0, 1, 1], [], []>} : vector<4x8xbf16>, vector<8x512xbf16>, vector<4x512xf32> -> vector<4x512xf32>
    %c0_185 = arith.constant 0 : index
    %c1_186 = arith.constant 1 : index
    %285 = vector.load %arg23[%c0_185, %c1_186] : memref<8x546xbf16, #tpu.memory_space<vmem>>, vector<8x512xbf16>
    %c1_187 = arith.constant 1 : index
    %c0_188 = arith.constant 0 : index
    %c0_189 = arith.constant 0 : index
    %286 = vector.load %arg18[%c1_187, %c0_188, %c0_189] : memref<9x4x8xbf16, #tpu.memory_space<vmem>>, vector<1x4x8xbf16>
    %287 = vector.shape_cast %286 : vector<1x4x8xbf16> to vector<4x8xbf16>
    %cst_190 = arith.constant dense<0.000000e+00> : vector<4x512xf32>
    %288 = tpu.matmul %287, %285, %cst_190 {dimension_numbers = #tpu.dot_dimension_numbers<[1], [0], [0], [1], [0, 0, 1, 1], [], []>} : vector<4x8xbf16>, vector<8x512xbf16>, vector<4x512xf32> -> vector<4x512xf32>
    %289 = arith.addf %284, %288 : vector<4x512xf32>
    %c0_191 = arith.constant 0 : index
    %c2_192 = arith.constant 2 : index
    %290 = vector.load %arg23[%c0_191, %c2_192] : memref<8x546xbf16, #tpu.memory_space<vmem>>, vector<8x512xbf16>
    %c2_193 = arith.constant 2 : index
    %c0_194 = arith.constant 0 : index
    %c0_195 = arith.constant 0 : index
    %291 = vector.load %arg18[%c2_193, %c0_194, %c0_195] : memref<9x4x8xbf16, #tpu.memory_space<vmem>>, vector<1x4x8xbf16>
    %292 = vector.shape_cast %291 : vector<1x4x8xbf16> to vector<4x8xbf16>
    %cst_196 = arith.constant dense<0.000000e+00> : vector<4x512xf32>
    %293 = tpu.matmul %292, %290, %cst_196 {dimension_numbers = #tpu.dot_dimension_numbers<[1], [0], [0], [1], [0, 0, 1, 1], [], []>} : vector<4x8xbf16>, vector<8x512xbf16>, vector<4x512xf32> -> vector<4x512xf32>
    %294 = arith.addf %289, %293 : vector<4x512xf32>
    %c0_197 = arith.constant 0 : index
    %c16 = arith.constant 16 : index
    %295 = vector.load %arg23[%c0_197, %c16] : memref<8x546xbf16, #tpu.memory_space<vmem>>, vector<8x512xbf16>
    %c3_198 = arith.constant 3 : index
    %c0_199 = arith.constant 0 : index
    %c0_200 = arith.constant 0 : index
    %296 = vector.load %arg18[%c3_198, %c0_199, %c0_200] : memref<9x4x8xbf16, #tpu.memory_space<vmem>>, vector<1x4x8xbf16>
    %297 = vector.shape_cast %296 : vector<1x4x8xbf16> to vector<4x8xbf16>
    %cst_201 = arith.constant dense<0.000000e+00> : vector<4x512xf32>
    %298 = tpu.matmul %297, %295, %cst_201 {dimension_numbers = #tpu.dot_dimension_numbers<[1], [0], [0], [1], [0, 0, 1, 1], [], []>} : vector<4x8xbf16>, vector<8x512xbf16>, vector<4x512xf32> -> vector<4x512xf32>
    %299 = arith.addf %294, %298 : vector<4x512xf32>
    %c0_202 = arith.constant 0 : index
    %c17_203 = arith.constant 17 : index
    %300 = vector.load %arg23[%c0_202, %c17_203] : memref<8x546xbf16, #tpu.memory_space<vmem>>, vector<8x512xbf16>
    %c4_204 = arith.constant 4 : index
    %c0_205 = arith.constant 0 : index
    %c0_206 = arith.constant 0 : index
    %301 = vector.load %arg18[%c4_204, %c0_205, %c0_206] : memref<9x4x8xbf16, #tpu.memory_space<vmem>>, vector<1x4x8xbf16>
    %302 = vector.shape_cast %301 : vector<1x4x8xbf16> to vector<4x8xbf16>
    %cst_207 = arith.constant dense<0.000000e+00> : vector<4x512xf32>
    %303 = tpu.matmul %302, %300, %cst_207 {dimension_numbers = #tpu.dot_dimension_numbers<[1], [0], [0], [1], [0, 0, 1, 1], [], []>} : vector<4x8xbf16>, vector<8x512xbf16>, vector<4x512xf32> -> vector<4x512xf32>
    %304 = arith.addf %299, %303 : vector<4x512xf32>
    %c0_208 = arith.constant 0 : index
    %c18_209 = arith.constant 18 : index
    %305 = vector.load %arg23[%c0_208, %c18_209] : memref<8x546xbf16, #tpu.memory_space<vmem>>, vector<8x512xbf16>
    %c5_210 = arith.constant 5 : index
    %c0_211 = arith.constant 0 : index
    %c0_212 = arith.constant 0 : index
    %306 = vector.load %arg18[%c5_210, %c0_211, %c0_212] : memref<9x4x8xbf16, #tpu.memory_space<vmem>>, vector<1x4x8xbf16>
    %307 = vector.shape_cast %306 : vector<1x4x8xbf16> to vector<4x8xbf16>
    %cst_213 = arith.constant dense<0.000000e+00> : vector<4x512xf32>
    %308 = tpu.matmul %307, %305, %cst_213 {dimension_numbers = #tpu.dot_dimension_numbers<[1], [0], [0], [1], [0, 0, 1, 1], [], []>} : vector<4x8xbf16>, vector<8x512xbf16>, vector<4x512xf32> -> vector<4x512xf32>
    %309 = arith.addf %304, %308 : vector<4x512xf32>
    %c0_214 = arith.constant 0 : index
    %c32 = arith.constant 32 : index
    %310 = vector.load %arg23[%c0_214, %c32] : memref<8x546xbf16, #tpu.memory_space<vmem>>, vector<8x512xbf16>
    %c6_215 = arith.constant 6 : index
    %c0_216 = arith.constant 0 : index
    %c0_217 = arith.constant 0 : index
    %311 = vector.load %arg18[%c6_215, %c0_216, %c0_217] : memref<9x4x8xbf16, #tpu.memory_space<vmem>>, vector<1x4x8xbf16>
    %312 = vector.shape_cast %311 : vector<1x4x8xbf16> to vector<4x8xbf16>
    %cst_218 = arith.constant dense<0.000000e+00> : vector<4x512xf32>
    %313 = tpu.matmul %312, %310, %cst_218 {dimension_numbers = #tpu.dot_dimension_numbers<[1], [0], [0], [1], [0, 0, 1, 1], [], []>} : vector<4x8xbf16>, vector<8x512xbf16>, vector<4x512xf32> -> vector<4x512xf32>
    %314 = arith.addf %309, %313 : vector<4x512xf32>
    %c0_219 = arith.constant 0 : index
    %c33 = arith.constant 33 : index
    %315 = vector.load %arg23[%c0_219, %c33] : memref<8x546xbf16, #tpu.memory_space<vmem>>, vector<8x512xbf16>
    %c7_220 = arith.constant 7 : index
    %c0_221 = arith.constant 0 : index
    %c0_222 = arith.constant 0 : index
    %316 = vector.load %arg18[%c7_220, %c0_221, %c0_222] : memref<9x4x8xbf16, #tpu.memory_space<vmem>>, vector<1x4x8xbf16>
    %317 = vector.shape_cast %316 : vector<1x4x8xbf16> to vector<4x8xbf16>
    %cst_223 = arith.constant dense<0.000000e+00> : vector<4x512xf32>
    %318 = tpu.matmul %317, %315, %cst_223 {dimension_numbers = #tpu.dot_dimension_numbers<[1], [0], [0], [1], [0, 0, 1, 1], [], []>} : vector<4x8xbf16>, vector<8x512xbf16>, vector<4x512xf32> -> vector<4x512xf32>
    %319 = arith.addf %314, %318 : vector<4x512xf32>
    %c0_224 = arith.constant 0 : index
    %c34 = arith.constant 34 : index
    %320 = vector.load %arg23[%c0_224, %c34] : memref<8x546xbf16, #tpu.memory_space<vmem>>, vector<8x512xbf16>
    %c8_225 = arith.constant 8 : index
    %c0_226 = arith.constant 0 : index
    %c0_227 = arith.constant 0 : index
    %321 = vector.load %arg18[%c8_225, %c0_226, %c0_227] : memref<9x4x8xbf16, #tpu.memory_space<vmem>>, vector<1x4x8xbf16>
    %322 = vector.shape_cast %321 : vector<1x4x8xbf16> to vector<4x8xbf16>
    %cst_228 = arith.constant dense<0.000000e+00> : vector<4x512xf32>
    %323 = tpu.matmul %322, %320, %cst_228 {dimension_numbers = #tpu.dot_dimension_numbers<[1], [0], [0], [1], [0, 0, 1, 1], [], []>} : vector<4x8xbf16>, vector<8x512xbf16>, vector<4x512xf32> -> vector<4x512xf32>
    %324 = arith.addf %319, %323 : vector<4x512xf32>
    %c0_229 = arith.constant 0 : index
    %c0_230 = arith.constant 0 : index
    %325 = vector.load %arg19[%c0_229, %c0_230] : memref<4x1xf32, #tpu.memory_space<vmem>>, vector<4x1xf32>
    %326 = vector.broadcast %325 : vector<4x1xf32> to vector<4x512xf32>
    %327 = arith.addf %324, %326 : vector<4x512xf32>
    %cst_231 = arith.constant 0.000000e+00 : f32
    %328 = vector.broadcast %cst_231 : f32 to vector<4x512xf32>
    %329 = arith.subf %328, %327 : vector<4x512xf32>
    %330 = math.exp %329 : vector<4x512xf32>
    %cst_232 = arith.constant 1.000000e+00 : f32
    %331 = vector.broadcast %cst_232 : f32 to vector<4x512xf32>
    %332 = arith.addf %331, %330 : vector<4x512xf32>
    %333 = tpu.reciprocal %332 {approx = true} : vector<4x512xf32> -> vector<4x512xf32>
    %cst_233 = arith.constant 0.000000e+00 : f32
    %cst_234 = arith.constant 1.000000e+00 : f32
    %334 = vector.broadcast %cst_233 : f32 to vector<4x512xf32>
    %335 = arith.maximumf %334, %333 : vector<4x512xf32>
    %336 = vector.broadcast %cst_234 : f32 to vector<4x512xf32>
    %337 = arith.minimumf %336, %335 : vector<4x512xf32>
    %c0_235 = arith.constant 0 : index
    %c0_236 = arith.constant 0 : index
    %338 = vector.load %arg20[%c0_235, %c0_236] : memref<4x512xf32, #tpu.memory_space<vmem>>, vector<4x512xf32>
    tpu.vector_store %arg20[%c0_235, %c0_236], %337 {strides = array<i32>} : memref<4x512xf32, #tpu.memory_space<vmem>>, vector<4x512xf32>,
    return
  }
}

</mosaic_0001>

<llo_original>
// kernel: generator_dcgan_forward.1
$region0: #{generator_dcgan_forward.1}
  #allocation0 [shape = 'u32[]', space=smem, size = 0x4, offset = 0x4, fixed_abs, tag = 'smem constant byte address 0x4 - core index']
  #allocation1 [shape = 'u32[72,128]{1,0:T(1,128)}', space=vmem, size = 0x9000, scoped, tag = 'internal scratch']
  #allocation2 [shape = 'bf16[32,86]{1,0:T(8,128)(2,1)}', space=vmem, size = 0x2000, scoped, tag = 'scratch operand']
  #allocation3 [shape = 'bf16[16,182]{1,0:T(8,128)(2,1)}', space=vmem, size = 0x2000, scoped, tag = 'scratch operand']
  #allocation4 [shape = 'bf16[8,546]{1,0:T(8,128)(2,1)}', space=vmem, size = 0x2800, scoped, tag = 'scratch operand']
  %s0 = inlined_call_operand.vmem [shape: f32[2,128], index: 0, kind: input, shape index: {}]
  %s1 = inlined_call_operand.vmem [shape: bf16[512,128], index: 1, kind: input, shape index: {}]
  %s2 = inlined_call_operand.vmem [shape: bf16[32,512], index: 2, kind: input, shape index: {}]
  %s3 = inlined_call_operand.vmem [shape: bf16[2,72], index: 3, kind: input, shape index: {}]
  %s4 = inlined_call_operand.vmem [shape: f32[512,72], index: 4, kind: input, shape index: {}]
  %s5 = inlined_call_operand.vmem [shape: f32[32,72], index: 5, kind: input, shape index: {}]
  %s6 = inlined_call_operand.vmem [shape: bf16[9,64,32], index: 6, kind: input, shape index: {}]
  %s7 = inlined_call_operand.vmem [shape: f32[64,1], index: 7, kind: input, shape index: {}]
  %s8 = inlined_call_operand.vmem [shape: f32[16,1], index: 8, kind: input, shape index: {}]
  %s9 = inlined_call_operand.vmem [shape: f32[16,1], index: 9, kind: input, shape index: {}]
  %s10 = inlined_call_operand.vmem [shape: f32[1,72], index: 10, kind: input, shape index: {}]
  %s11 = inlined_call_operand.vmem [shape: bf16[4,72,162], index: 11, kind: input, shape index: {}]
  %s12 = inlined_call_operand.vmem [shape: bf16[9,32,16], index: 12, kind: input, shape index: {}]
  %s13 = inlined_call_operand.vmem [shape: f32[32,1], index: 13, kind: input, shape index: {}]
  %s14 = inlined_call_operand.vmem [shape: f32[8,1], index: 14, kind: input, shape index: {}]
  %s15 = inlined_call_operand.vmem [shape: f32[8,1], index: 15, kind: input, shape index: {}]
  %s16 = inlined_call_operand.vmem [shape: f32[1,162], index: 16, kind: input, shape index: {}]
  %s17 = inlined_call_operand.vmem [shape: bf16[4,162,512], index: 17, kind: input, shape index: {}]
  %s18 = inlined_call_operand.vmem [shape: bf16[9,4,8], index: 18, kind: input, shape index: {}]
  %s19 = inlined_call_operand.vmem [shape: f32[4,1], index: 19, kind: input, shape index: {}]
  %s20 = inlined_call_operand.vmem [shape: f32[4,512], index: 20, kind: output, shape index: {}]
  %s21 = sld [smem:[#allocation0]]
  $region90: #{generator_dcgan_forward.1} parent=0
    _
  %s23 = ssub.s32 1, %s21
  %s24 = scalar_select 0, %s23, %s21
  // Predicated region
  $region2: #{generator_dcgan_forward.1} parent=0 // pred_check
    _
  $region3: #{generator_dcgan_forward.1} parent=0 // pred_check_branch
    %26 = sbr.rel (0) target = $region5
  $region4: #{generator_dcgan_forward.1} parent=0 // pred_region
    _
  $region5: #{generator_dcgan_forward.1} parent=0 // pred_fallthru
    _
  // Predicated region
  $region6: #{generator_dcgan_forward.1} parent=0 // pred_check
    _
  $region7: #{generator_dcgan_forward.1} parent=0 // pred_check_branch
    %28 = sbr.rel (0) target = $region9
  $region8: #{generator_dcgan_forward.1} parent=0 // pred_region
    _
  $region9: #{generator_dcgan_forward.1} parent=0 // pred_fallthru
    _
  // Predicated region
  $region10: #{generator_dcgan_forward.1} parent=0 // pred_check
    _
  $region11: #{generator_dcgan_forward.1} parent=0 // pred_check_branch
    %30 = sbr.rel (0) target = $region13
  $region12: #{generator_dcgan_forward.1} parent=0 // pred_region
    _
  $region13: #{generator_dcgan_forward.1} parent=0 // pred_fallthru
    _
  // Predicated region
  $region14: #{generator_dcgan_forward.1} parent=0 // pred_check
    _
  $region15: #{generator_dcgan_forward.1} parent=0 // pred_check_branch
    %32 = sbr.rel (0) target = $region17
  $region16: #{generator_dcgan_forward.1} parent=0 // pred_region
    _
  $region17: #{generator_dcgan_forward.1} parent=0 // pred_fallthru
    _
  // Predicated region
  $region18: #{generator_dcgan_forward.1} parent=0 // pred_check
    _
  $region19: #{generator_dcgan_forward.1} parent=0 // pred_check_branch
    %34 = sbr.rel (0) target = $region21
  $region20: #{generator_dcgan_forward.1} parent=0 // pred_region
    _
  $region21: #{generator_dcgan_forward.1} parent=0 // pred_fallthru
    _
  // Predicated region
  $region22: #{generator_dcgan_forward.1} parent=0 // pred_check
    _
  $region23: #{generator_dcgan_forward.1} parent=0 // pred_check_branch
    %36 = sbr.rel (0) target = $region25
  $region24: #{generator_dcgan_forward.1} parent=0 // pred_region
    _
  $region25: #{generator_dcgan_forward.1} parent=0 // pred_fallthru
    _
  // Predicated region
  $region26: #{generator_dcgan_forward.1} parent=0 // pred_check
    _
  $region27: #{generator_dcgan_forward.1} parent=0 // pred_check_branch
    %38 = sbr.rel (0) target = $region29
  $region28: #{generator_dcgan_forward.1} parent=0 // pred_region
    _
  $region29: #{generator_dcgan_forward.1} parent=0 // pred_fallthru
    _
  // Predicated region
  $region30: #{generator_dcgan_forward.1} parent=0 // pred_check
    _
  $region31: #{generator_dcgan_forward.1} parent=0 // pred_check_branch
    %40 = sbr.rel (0) target = $region33
  $region32: #{generator_dcgan_forward.1} parent=0 // pred_region
    _
  $region33: #{generator_dcgan_forward.1} parent=0 // pred_fallthru
    _
  // Predicated region
  $region34: #{generator_dcgan_forward.1} parent=0 // pred_check
    _
  $region35: #{generator_dcgan_forward.1} parent=0 // pred_check_branch
    %42 = sbr.rel (0) target = $region37
  $region36: #{generator_dcgan_forward.1} parent=0 // pred_region
    _
  $region37: #{generator_dcgan_forward.1} parent=0 // pred_fallthru
    _
  // Predicated region
  $region38: #{generator_dcgan_forward.1} parent=0 // pred_check
    _
  $region39: #{generator_dcgan_forward.1} parent=0 // pred_check_branch
    %44 = sbr.rel (0) target = $region41
  $region40: #{generator_dcgan_forward.1} parent=0 // pred_region
    _
  $region41: #{generator_dcgan_forward.1} parent=0 // pred_fallthru
    _
  // Predicated region
  $region42: #{generator_dcgan_forward.1} parent=0 // pred_check
    _
  $region43: #{generator_dcgan_forward.1} parent=0 // pred_check_branch
    %46 = sbr.rel (0) target = $region45
  $region44: #{generator_dcgan_forward.1} parent=0 // pred_region
    _
  $region45: #{generator_dcgan_forward.1} parent=0 // pred_fallthru
    _
  // Predicated region
  $region46: #{generator_dcgan_forward.1} parent=0 // pred_check
    _
  $region47: #{generator_dcgan_forward.1} parent=0 // pred_check_branch
    %48 = sbr.rel (0) target = $region49
  $region48: #{generator_dcgan_forward.1} parent=0 // pred_region
    _
  $region49: #{generator_dcgan_forward.1} parent=0 // pred_fallthru
    _
  // Predicated region
  $region50: #{generator_dcgan_forward.1} parent=0 // pred_check
    _
  $region51: #{generator_dcgan_forward.1} parent=0 // pred_check_branch
    %50 = sbr.rel (0) target = $region53
  $region52: #{generator_dcgan_forward.1} parent=0 // pred_region
    _
  $region53: #{generator_dcgan_forward.1} parent=0 // pred_fallthru
    _
  // Predicated region
  $region54: #{generator_dcgan_forward.1} parent=0 // pred_check
    _
  $region55: #{generator_dcgan_forward.1} parent=0 // pred_check_branch
    %52 = sbr.rel (0) target = $region57
  $region56: #{generator_dcgan_forward.1} parent=0 // pred_region
    _
  $region57: #{generator_dcgan_forward.1} parent=0 // pred_fallthru
    _
  // Predicated region
  $region58: #{generator_dcgan_forward.1} parent=0 // pred_check
    _
  $region59: #{generator_dcgan_forward.1} parent=0 // pred_check_branch
    %54 = sbr.rel (0) target = $region61
  $region60: #{generator_dcgan_forward.1} parent=0 // pred_region
    _
  $region61: #{generator_dcgan_forward.1} parent=0 // pred_fallthru
    _
  // Predicated region
  $region62: #{generator_dcgan_forward.1} parent=0 // pred_check
    _
  $region63: #{generator_dcgan_forward.1} parent=0 // pred_check_branch
    %56 = sbr.rel (0) target = $region65
  $region64: #{generator_dcgan_forward.1} parent=0 // pred_region
    _
  $region65: #{generator_dcgan_forward.1} parent=0 // pred_fallthru
    _
  // Predicated region
  $region66: #{generator_dcgan_forward.1} parent=0 // pred_check
    _
  $region67: #{generator_dcgan_forward.1} parent=0 // pred_check_branch
    %58 = sbr.rel (0) target = $region69
  $region68: #{generator_dcgan_forward.1} parent=0 // pred_region
    _
  $region69: #{generator_dcgan_forward.1} parent=0 // pred_fallthru
    _
  // Predicated region
  $region70: #{generator_dcgan_forward.1} parent=0 // pred_check
    _
  $region71: #{generator_dcgan_forward.1} parent=0 // pred_check_branch
    %60 = sbr.rel (0) target = $region73
  $region72: #{generator_dcgan_forward.1} parent=0 // pred_region
    _
  $region73: #{generator_dcgan_forward.1} parent=0 // pred_fallthru
    _
  // Predicated region
  $region74: #{generator_dcgan_forward.1} parent=0 // pred_check
    _
  $region75: #{generator_dcgan_forward.1} parent=0 // pred_check_branch
    %62 = sbr.rel (0) target = $region77
  $region76: #{generator_dcgan_forward.1} parent=0 // pred_region
    _
  $region77: #{generator_dcgan_forward.1} parent=0 // pred_fallthru
    _
  // Predicated region
  $region78: #{generator_dcgan_forward.1} parent=0 // pred_check
    _
  $region79: #{generator_dcgan_forward.1} parent=0 // pred_check_branch
    %64 = sbr.rel (0) target = $region81
  $region80: #{generator_dcgan_forward.1} parent=0 // pred_region
    _
  $region81: #{generator_dcgan_forward.1} parent=0 // pred_fallthru
    _
  %v66 = vld [vmem:[%s1] sm:$0xf]
  %v67 = vld [vmem:[%s1 + $0x4] sm:$0xf]
  %v68 = vld [vmem:[%s1 + $0x8] sm:$0xf]
  %v69 = vld [vmem:[%s1 + $0xc] sm:$0xf]
  %v70 = vld [vmem:[%s1 + $0x10] sm:$0xf]
  %v71 = vld [vmem:[%s1 + $0x14] sm:$0xf]
  %v72 = vld [vmem:[%s1 + $0x18] sm:$0xf]
  %v73 = vld [vmem:[%s1 + $0x1c] sm:$0xf]
  %v74 = vld [vmem:[%s1 + $0x20] sm:$0xf]
  %v75 = vld [vmem:[%s1 + $0x24] sm:$0xf]
  %v76 = vld [vmem:[%s1 + $0x28] sm:$0xf]
  %v77 = vld [vmem:[%s1 + $0x2c] sm:$0xf]
  %v78 = vld [vmem:[%s1 + $0x30] sm:$0xf]
  %v79 = vld [vmem:[%s1 + $0x34] sm:$0xf]
  %v80 = vld [vmem:[%s1 + $0x38] sm:$0xf]
  %v81 = vld [vmem:[%s1 + $0x3c] sm:$0xf]
  %v82 = vld [vmem:[%s1 + $0x40] sm:$0xf]
  %v83 = vld [vmem:[%s1 + $0x44] sm:$0xf]
  %v84 = vld [vmem:[%s1 + $0x48] sm:$0xf]
  %v85 = vld [vmem:[%s1 + $0x4c] sm:$0xf]
  %v86 = vld [vmem:[%s1 + $0x50] sm:$0xf]
  %v87 = vld [vmem:[%s1 + $0x54] sm:$0xf]
  %v88 = vld [vmem:[%s1 + $0x58] sm:$0xf]
  %v89 = vld [vmem:[%s1 + $0x5c] sm:$0xf]
  %v90 = vld [vmem:[%s1 + $0x60] sm:$0xf]
  %v91 = vld [vmem:[%s1 + $0x64] sm:$0xf]
  %v92 = vld [vmem:[%s1 + $0x68] sm:$0xf]
  %v93 = vld [vmem:[%s1 + $0x6c] sm:$0xf]
  %v94 = vld [vmem:[%s1 + $0x70] sm:$0xf]
  %v95 = vld [vmem:[%s1 + $0x74] sm:$0xf]
  %v96 = vld [vmem:[%s1 + $0x78] sm:$0xf]
  %v97 = vld [vmem:[%s1 + $0x7c] sm:$0xf]
  %v98 = vld [vmem:[%s1 + $0x80] sm:$0xf]
  %v99 = vld [vmem:[%s1 + $0x84] sm:$0xf]
  %v100 = vld [vmem:[%s1 + $0x88] sm:$0xf]
  %v101 = vld [vmem:[%s1 + $0x8c] sm:$0xf]
  %v102 = vld [vmem:[%s1 + $0x90] sm:$0xf]
  %v103 = vld [vmem:[%s1 + $0x94] sm:$0xf]
  %v104 = vld [vmem:[%s1 + $0x98] sm:$0xf]
  %v105 = vld [vmem:[%s1 + $0x9c] sm:$0xf]
  %v106 = vld [vmem:[%s1 + $0xa0] sm:$0xf]
  %v107 = vld [vmem:[%s1 + $0xa4] sm:$0xf]
  %v108 = vld [vmem:[%s1 + $0xa8] sm:$0xf]
  %v109 = vld [vmem:[%s1 + $0xac] sm:$0xf]
  %v110 = vld [vmem:[%s1 + $0xb0] sm:$0xf]
  %v111 = vld [vmem:[%s1 + $0xb4] sm:$0xf]
  %v112 = vld [vmem:[%s1 + $0xb8] sm:$0xf]
  %v113 = vld [vmem:[%s1 + $0xbc] sm:$0xf]
  %v114 = vld [vmem:[%s1 + $0xc0] sm:$0xf]
  %v115 = vld [vmem:[%s1 + $0xc4] sm:$0xf]
  %v116 = vld [vmem:[%s1 + $0xc8] sm:$0xf]
  %v117 = vld [vmem:[%s1 + $0xcc] sm:$0xf]
  %v118 = vld [vmem:[%s1 + $0xd0] sm:$0xf]
  %v119 = vld [vmem:[%s1 + $0xd4] sm:$0xf]
  %v120 = vld [vmem:[%s1 + $0xd8] sm:$0xf]
  %v121 = vld [vmem:[%s1 + $0xdc] sm:$0xf]
  %v122 = vld [vmem:[%s1 + $0xe0] sm:$0xf]
  %v123 = vld [vmem:[%s1 + $0xe4] sm:$0xf]
  %v124 = vld [vmem:[%s1 + $0xe8] sm:$0xf]
  %v125 = vld [vmem:[%s1 + $0xec] sm:$0xf]
  %v126 = vld [vmem:[%s1 + $0xf0] sm:$0xf]
  %v127 = vld [vmem:[%s1 + $0xf4] sm:$0xf]
  %v128 = vld [vmem:[%s1 + $0xf8] sm:$0xf]
  %v129 = vld [vmem:[%s1 + $0xfc] sm:$0xf]
  %v130 = vld [vmem:[%s0] sm:$0x3]
  %v131 = vpack.c.bf16 %v130, %v130
  %v196 = vunpack.c.l.b16 %v66
  %v197 = vunpack.c.l.b16 %v67
  %v198 = vunpack.c.l.b16 %v68
  %v199 = vunpack.c.l.b16 %v69
  %v200 = vunpack.c.l.b16 %v70
  %v201 = vunpack.c.l.b16 %v71
  %v202 = vunpack.c.l.b16 %v72
  %v203 = vunpack.c.l.b16 %v73
  %v204 = vunpack.c.l.b16 %v74
  %v205 = vunpack.c.l.b16 %v75
  %v206 = vunpack.c.l.b16 %v76
  %v207 = vunpack.c.l.b16 %v77
  %v208 = vunpack.c.l.b16 %v78
  %v209 = vunpack.c.l.b16 %v79
  %v210 = vunpack.c.l.b16 %v80
  %v211 = vunpack.c.l.b16 %v81
  %v212 = vunpack.c.l.b16 %v82
  %v213 = vunpack.c.l.b16 %v83
  %v214 = vunpack.c.l.b16 %v84
  %v215 = vunpack.c.l.b16 %v85
  %v216 = vunpack.c.l.b16 %v86
  %v217 = vunpack.c.l.b16 %v87
  %v218 = vunpack.c.l.b16 %v88
  %v219 = vunpack.c.l.b16 %v89
  %v220 = vunpack.c.l.b16 %v90
  %v221 = vunpack.c.l.b16 %v91
  %v222 = vunpack.c.l.b16 %v92
  %v223 = vunpack.c.l.b16 %v93
  %v224 = vunpack.c.l.b16 %v94
  %v225 = vunpack.c.l.b16 %v95
  %v226 = vunpack.c.l.b16 %v96
  %v227 = vunpack.c.l.b16 %v97
  %v228 = vunpack.c.l.b16 %v98
  %v229 = vunpack.c.l.b16 %v99
  %v230 = vunpack.c.l.b16 %v100
  %v231 = vunpack.c.l.b16 %v101
  %v232 = vunpack.c.l.b16 %v102
  %v233 = vunpack.c.l.b16 %v103
  %v234 = vunpack.c.l.b16 %v104
  %v235 = vunpack.c.l.b16 %v105
  %v236 = vunpack.c.l.b16 %v106
  %v237 = vunpack.c.l.b16 %v107
  %v238 = vunpack.c.l.b16 %v108
  %v239 = vunpack.c.l.b16 %v109
  %v240 = vunpack.c.l.b16 %v110
  %v241 = vunpack.c.l.b16 %v111
  %v242 = vunpack.c.l.b16 %v112
  %v243 = vunpack.c.l.b16 %v113
  %v244 = vunpack.c.l.b16 %v114
  %v245 = vunpack.c.l.b16 %v115
  %v246 = vunpack.c.l.b16 %v116
  %v247 = vunpack.c.l.b16 %v117
  %v248 = vunpack.c.l.b16 %v118
  %v249 = vunpack.c.l.b16 %v119
  %v250 = vunpack.c.l.b16 %v120
  %v251 = vunpack.c.l.b16 %v121
  %v252 = vunpack.c.l.b16 %v122
  %v253 = vunpack.c.l.b16 %v123
  %v254 = vunpack.c.l.b16 %v124
  %v255 = vunpack.c.l.b16 %v125
  %v256 = vunpack.c.l.b16 %v126
  %v257 = vunpack.c.l.b16 %v127
  %v258 = vunpack.c.l.b16 %v128
  %v259 = vunpack.c.l.b16 %v129
  %v260 = vpack.c.b16 %v197, %v196
  %v261 = vpack.c.b16 %v199, %v198
  %v262 = vpack.c.b16 %v201, %v200
  %v263 = vpack.c.b16 %v203, %v202
  %v264 = vpack.c.b16 %v205, %v204
  %v265 = vpack.c.b16 %v207, %v206
  %v266 = vpack.c.b16 %v209, %v208
  %v267 = vpack.c.b16 %v211, %v210
  %v268 = vpack.c.b16 %v213, %v212
  %v269 = vpack.c.b16 %v215, %v214
  %v270 = vpack.c.b16 %v217, %v216
  %v271 = vpack.c.b16 %v219, %v218
  %v272 = vpack.c.b16 %v221, %v220
  %v273 = vpack.c.b16 %v223, %v222
  %v274 = vpack.c.b16 %v225, %v224
  %v275 = vpack.c.b16 %v227, %v226
  %v276 = vpack.c.b16 %v229, %v228
  %v277 = vpack.c.b16 %v231, %v230
  %v278 = vpack.c.b16 %v233, %v232
  %v279 = vpack.c.b16 %v235, %v234
  %v280 = vpack.c.b16 %v237, %v236
  %v281 = vpack.c.b16 %v239, %v238
  %v282 = vpack.c.b16 %v241, %v240
  %v283 = vpack.c.b16 %v243, %v242
  %v284 = vpack.c.b16 %v245, %v244
  %v285 = vpack.c.b16 %v247, %v246
  %v286 = vpack.c.b16 %v249, %v248
  %v287 = vpack.c.b16 %v251, %v250
  %v288 = vpack.c.b16 %v253, %v252
  %v289 = vpack.c.b16 %v255, %v254
  %v290 = vpack.c.b16 %v257, %v256
  %v291 = vpack.c.b16 %v259, %v258
  %324 = vmatpush.bf16.xpose.msra.mxu0 0
  %325 = vmatpush.bf16.xpose.msra.mxu0 0
  %326 = vmatpush.bf16.xpose.msra.mxu0 0
  %327 = vmatpush.bf16.xpose.msra.mxu0 0
  %328 = vmatpush.bf16.xpose.msra.mxu0 0
  %329 = vmatpush.bf16.xpose.msra.mxu0 0
  %330 = vmatpush.bf16.xpose.msra.mxu0 0
  %331 = vmatpush.bf16.xpose.msra.mxu0 %v131
  %332 = vmatmul.bf16.gmra.mxu0 %v260
  %v333 = vpop.f32.mrf.mxu0
  %v334 = vadd.f32 0.0, %v333
  %v335 = vpop.f32.mrf.mxu0
  %v336 = vadd.f32 0.0, %v335
  %337 = vmatmul.bf16.gmra.mxu0 %v261
  %v338 = vpop.f32.mrf.mxu0
  %v339 = vadd.f32 0.0, %v338
  %v340 = vpop.f32.mrf.mxu0
  %v341 = vadd.f32 0.0, %v340
  %342 = vmatmul.bf16.gmra.mxu0 %v262
  %v343 = vpop.f32.mrf.mxu0
  %v344 = vadd.f32 0.0, %v343
  %v345 = vpop.f32.mrf.mxu0
  %v346 = vadd.f32 0.0, %v345
  %347 = vmatmul.bf16.gmra.mxu0 %v263
  %v348 = vpop.f32.mrf.mxu0
  %v349 = vadd.f32 0.0, %v348
  %v350 = vpop.f32.mrf.mxu0
  %v351 = vadd.f32 0.0, %v350
  %352 = vmatmul.bf16.gmra.mxu0 %v264
  %v353 = vpop.f32.mrf.mxu0
  %v354 = vadd.f32 0.0, %v353
  %v355 = vpop.f32.mrf.mxu0
  %v356 = vadd.f32 0.0, %v355
  %357 = vmatmul.bf16.gmra.mxu0 %v265
  %v358 = vpop.f32.mrf.mxu0
  %v359 = vadd.f32 0.0, %v358
  %v360 = vpop.f32.mrf.mxu0
  %v361 = vadd.f32 0.0, %v360
  %362 = vmatmul.bf16.gmra.mxu0 %v266
  %v363 = vpop.f32.mrf.mxu0
  %v364 = vadd.f32 0.0, %v363
  %v365 = vpop.f32.mrf.mxu0
  %v366 = vadd.f32 0.0, %v365
  %367 = vmatmul.bf16.gmra.mxu0 %v267
  %v368 = vpop.f32.mrf.mxu0
  %v369 = vadd.f32 0.0, %v368
  %v370 = vpop.f32.mrf.mxu0
  %v371 = vadd.f32 0.0, %v370
  %372 = vmatmul.bf16.gmra.mxu0 %v268
  %v373 = vpop.f32.mrf.mxu0
  %v374 = vadd.f32 0.0, %v373
  %v375 = vpop.f32.mrf.mxu0
  %v376 = vadd.f32 0.0, %v375
  %377 = vmatmul.bf16.gmra.mxu0 %v269
  %v378 = vpop.f32.mrf.mxu0
  %v379 = vadd.f32 0.0, %v378
  %v380 = vpop.f32.mrf.mxu0
  %v381 = vadd.f32 0.0, %v380
  %382 = vmatmul.bf16.gmra.mxu0 %v270
  %v383 = vpop.f32.mrf.mxu0
  %v384 = vadd.f32 0.0, %v383
  %v385 = vpop.f32.mrf.mxu0
  %v386 = vadd.f32 0.0, %v385
  %387 = vmatmul.bf16.gmra.mxu0 %v271
  %v388 = vpop.f32.mrf.mxu0
  %v389 = vadd.f32 0.0, %v388
  %v390 = vpop.f32.mrf.mxu0
  %v391 = vadd.f32 0.0, %v390
  %392 = vmatmul.bf16.gmra.mxu0 %v272
  %v393 = vpop.f32.mrf.mxu0
  %v394 = vadd.f32 0.0, %v393
  %v395 = vpop.f32.mrf.mxu0
  %v396 = vadd.f32 0.0, %v395
  %397 = vmatmul.bf16.gmra.mxu0 %v273
  %v398 = vpop.f32.mrf.mxu0
  %v399 = vadd.f32 0.0, %v398
  %v400 = vpop.f32.mrf.mxu0
  %v401 = vadd.f32 0.0, %v400
  %402 = vmatmul.bf16.gmra.mxu0 %v274
  %v403 = vpop.f32.mrf.mxu0
  %v404 = vadd.f32 0.0, %v403
  %v405 = vpop.f32.mrf.mxu0
  %v406 = vadd.f32 0.0, %v405
  %407 = vmatmul.bf16.gmra.mxu0 %v275
  %v408 = vpop.f32.mrf.mxu0
  %v409 = vadd.f32 0.0, %v408
  %v410 = vpop.f32.mrf.mxu0
  %v411 = vadd.f32 0.0, %v410
  %412 = vmatmul.bf16.gmra.mxu0 %v276
  %v413 = vpop.f32.mrf.mxu0
  %v414 = vadd.f32 0.0, %v413
  %v415 = vpop.f32.mrf.mxu0
  %v416 = vadd.f32 0.0, %v415
  %417 = vmatmul.bf16.gmra.mxu0 %v277
  %v418 = vpop.f32.mrf.mxu0
  %v419 = vadd.f32 0.0, %v418
  %v420 = vpop.f32.mrf.mxu0
  %v421 = vadd.f32 0.0, %v420
  %422 = vmatmul.bf16.gmra.mxu0 %v278
  %v423 = vpop.f32.mrf.mxu0
  %v424 = vadd.f32 0.0, %v423
  %v425 = vpop.f32.mrf.mxu0
  %v426 = vadd.f32 0.0, %v425
  %427 = vmatmul.bf16.gmra.mxu0 %v279
  %v428 = vpop.f32.mrf.mxu0
  %v429 = vadd.f32 0.0, %v428
  %v430 = vpop.f32.mrf.mxu0
  %v431 = vadd.f32 0.0, %v430
  %432 = vmatmul.bf16.gmra.mxu0 %v280
  %v433 = vpop.f32.mrf.mxu0
  %v434 = vadd.f32 0.0, %v433
  %v435 = vpop.f32.mrf.mxu0
  %v436 = vadd.f32 0.0, %v435
  %437 = vmatmul.bf16.gmra.mxu0 %v281
  %v438 = vpop.f32.mrf.mxu0
  %v439 = vadd.f32 0.0, %v438
  %v440 = vpop.f32.mrf.mxu0
  %v441 = vadd.f32 0.0, %v440
  %442 = vmatmul.bf16.gmra.mxu0 %v282
  %v443 = vpop.f32.mrf.mxu0
  %v444 = vadd.f32 0.0, %v443
  %v445 = vpop.f32.mrf.mxu0
  %v446 = vadd.f32 0.0, %v445
  %447 = vmatmul.bf16.gmra.mxu0 %v283
  %v448 = vpop.f32.mrf.mxu0
  %v449 = vadd.f32 0.0, %v448
  %v450 = vpop.f32.mrf.mxu0
  %v451 = vadd.f32 0.0, %v450
  %452 = vmatmul.bf16.gmra.mxu0 %v284
  %v453 = vpop.f32.mrf.mxu0
  %v454 = vadd.f32 0.0, %v453
  %v455 = vpop.f32.mrf.mxu0
  %v456 = vadd.f32 0.0, %v455
  %457 = vmatmul.bf16.gmra.mxu0 %v285
  %v458 = vpop.f32.mrf.mxu0
  %v459 = vadd.f32 0.0, %v458
  %v460 = vpop.f32.mrf.mxu0
  %v461 = vadd.f32 0.0, %v460
  %462 = vmatmul.bf16.gmra.mxu0 %v286
  %v463 = vpop.f32.mrf.mxu0
  %v464 = vadd.f32 0.0, %v463
  %v465 = vpop.f32.mrf.mxu0
  %v466 = vadd.f32 0.0, %v465
  %467 = vmatmul.bf16.gmra.mxu0 %v287
  %v468 = vpop.f32.mrf.mxu0
  %v469 = vadd.f32 0.0, %v468
  %v470 = vpop.f32.mrf.mxu0
  %v471 = vadd.f32 0.0, %v470
  %472 = vmatmul.bf16.gmra.mxu0 %v288
  %v473 = vpop.f32.mrf.mxu0
  %v474 = vadd.f32 0.0, %v473
  %v475 = vpop.f32.mrf.mxu0
  %v476 = vadd.f32 0.0, %v475
  %477 = vmatmul.bf16.gmra.mxu0 %v289
  %v478 = vpop.f32.mrf.mxu0
  %v479 = vadd.f32 0.0, %v478
  %v480 = vpop.f32.mrf.mxu0
  %v481 = vadd.f32 0.0, %v480
  %482 = vmatmul.bf16.gmra.mxu0 %v290
  %v483 = vpop.f32.mrf.mxu0
  %v484 = vadd.f32 0.0, %v483
  %v485 = vpop.f32.mrf.mxu0
  %v486 = vadd.f32 0.0, %v485
  %487 = vmatmul.bf16.gmra.mxu0 %v291
  %v488 = vpop.f32.mrf.mxu0
  %v489 = vadd.f32 0.0, %v488
  %v490 = vpop.f32.mrf.mxu0
  %v491 = vadd.f32 0.0, %v490
  %492 = vdwg.mxu0
  %v493 = vpack.c.bf16 %v336, %v334
  %v494 = vpack.c.bf16 %v341, %v339
  %v495 = vpack.c.bf16 %v346, %v344
  %v496 = vpack.c.bf16 %v351, %v349
  %v497 = vpack.c.bf16 %v356, %v354
  %v498 = vpack.c.bf16 %v361, %v359
  %v499 = vpack.c.bf16 %v366, %v364
  %v500 = vpack.c.bf16 %v371, %v369
  %v501 = vpack.c.bf16 %v376, %v374
  %v502 = vpack.c.bf16 %v381, %v379
  %v503 = vpack.c.bf16 %v386, %v384
  %v504 = vpack.c.bf16 %v391, %v389
  %v505 = vpack.c.bf16 %v396, %v394
  %v506 = vpack.c.bf16 %v401, %v399
  %v507 = vpack.c.bf16 %v406, %v404
  %v508 = vpack.c.bf16 %v411, %v409
  %v509 = vpack.c.bf16 %v416, %v414
  %v510 = vpack.c.bf16 %v421, %v419
  %v511 = vpack.c.bf16 %v426, %v424
  %v512 = vpack.c.bf16 %v431, %v429
  %v513 = vpack.c.bf16 %v436, %v434
  %v514 = vpack.c.bf16 %v441, %v439
  %v515 = vpack.c.bf16 %v446, %v444
  %v516 = vpack.c.bf16 %v451, %v449
  %v517 = vpack.c.bf16 %v456, %v454
  %v518 = vpack.c.bf16 %v461, %v459
  %v519 = vpack.c.bf16 %v466, %v464
  %v520 = vpack.c.bf16 %v471, %v469
  %v521 = vpack.c.bf16 %v476, %v474
  %v522 = vpack.c.bf16 %v481, %v479
  %v523 = vpack.c.bf16 %v486, %v484
  %v524 = vpack.c.bf16 %v491, %v489
  %v525 = vld [vmem:[%s3] sm:$0x1]
  %vm526 = vcmask 15360
  %v528 = vsel %vm526, %v493, 0
  %v531 = vsel %vm526, %v494, 0
  %v534 = vsel %vm526, %v495, 0
  %v537 = vsel %vm526, %v496, 0
  %v540 = vsel %vm526, %v497, 0
  %v543 = vsel %vm526, %v498, 0
  %v546 = vsel %vm526, %v499, 0
  %v549 = vsel %vm526, %v500, 0
  %v552 = vsel %vm526, %v501, 0
  %v555 = vsel %vm526, %v502, 0
  %v558 = vsel %vm526, %v503, 0
  %v561 = vsel %vm526, %v504, 0
  %v564 = vsel %vm526, %v505, 0
  %v567 = vsel %vm526, %v506, 0
  %v570 = vsel %vm526, %v507, 0
  %v573 = vsel %vm526, %v508, 0
  %v576 = vsel %vm526, %v509, 0
  %v579 = vsel %vm526, %v510, 0
  %v582 = vsel %vm526, %v511, 0
  %v585 = vsel %vm526, %v512, 0
  %v588 = vsel %vm526, %v513, 0
  %v591 = vsel %vm526, %v514, 0
  %v594 = vsel %vm526, %v515, 0
  %v597 = vsel %vm526, %v516, 0
  %v600 = vsel %vm526, %v517, 0
  %v603 = vsel %vm526, %v518, 0
  %v606 = vsel %vm526, %v519, 0
  %v609 = vsel %vm526, %v520, 0
  %v612 = vsel %vm526, %v521, 0
  %v615 = vsel %vm526, %v522, 0
  %v618 = vsel %vm526, %v523, 0
  %v621 = vsel %vm526, %v524, 0
  %vm623 = vcmask 1040384
  %v625 = vsel %vm623, %v525, 0
  %627 = vmatpush.bf16.msra.mxu0 0
  %628 = vmatpush.bf16.msra.mxu0 0
  %629 = vmatpush.bf16.msra.mxu0 0
  %630 = vmatpush.bf16.msra.mxu0 0
  %631 = vmatpush.bf16.msra.mxu0 0
  %632 = vmatpush.bf16.msra.mxu0 0
  %633 = vmatpush.bf16.msra.mxu0 0
  %634 = vmatpush.bf16.msra.mxu0 %v625
  %635 = vmatmul.bf16.gmra.mxu0 %v528
  %v636 = vpop.f32.mrf.mxu0
  %v637 = vadd.f32 0.0, %v636
  %v638 = vpop.f32.mrf.mxu0
  %v639 = vadd.f32 0.0, %v638
  %640 = vmatmul.bf16.gmra.mxu0 %v531
  %v641 = vpop.f32.mrf.mxu0
  %v642 = vadd.f32 0.0, %v641
  %v643 = vpop.f32.mrf.mxu0
  %v644 = vadd.f32 0.0, %v643
  %645 = vmatmul.bf16.gmra.mxu0 %v534
  %v646 = vpop.f32.mrf.mxu0
  %v647 = vadd.f32 0.0, %v646
  %v648 = vpop.f32.mrf.mxu0
  %v649 = vadd.f32 0.0, %v648
  %650 = vmatmul.bf16.gmra.mxu0 %v537
  %v651 = vpop.f32.mrf.mxu0
  %v652 = vadd.f32 0.0, %v651
  %v653 = vpop.f32.mrf.mxu0
  %v654 = vadd.f32 0.0, %v653
  %655 = vmatmul.bf16.gmra.mxu0 %v540
  %v656 = vpop.f32.mrf.mxu0
  %v657 = vadd.f32 0.0, %v656
  %v658 = vpop.f32.mrf.mxu0
  %v659 = vadd.f32 0.0, %v658
  %660 = vmatmul.bf16.gmra.mxu0 %v543
  %v661 = vpop.f32.mrf.mxu0
  %v662 = vadd.f32 0.0, %v661
  %v663 = vpop.f32.mrf.mxu0
  %v664 = vadd.f32 0.0, %v663
  %665 = vmatmul.bf16.gmra.mxu0 %v546
  %v666 = vpop.f32.mrf.mxu0
  %v667 = vadd.f32 0.0, %v666
  %v668 = vpop.f32.mrf.mxu0
  %v669 = vadd.f32 0.0, %v668
  %670 = vmatmul.bf16.gmra.mxu0 %v549
  %v671 = vpop.f32.mrf.mxu0
  %v672 = vadd.f32 0.0, %v671
  %v673 = vpop.f32.mrf.mxu0
  %v674 = vadd.f32 0.0, %v673
  %675 = vmatmul.bf16.gmra.mxu0 %v552
  %v676 = vpop.f32.mrf.mxu0
  %v677 = vadd.f32 0.0, %v676
  %v678 = vpop.f32.mrf.mxu0
  %v679 = vadd.f32 0.0, %v678
  %680 = vmatmul.bf16.gmra.mxu0 %v555
  %v681 = vpop.f32.mrf.mxu0
  %v682 = vadd.f32 0.0, %v681
  %v683 = vpop.f32.mrf.mxu0
  %v684 = vadd.f32 0.0, %v683
  %685 = vmatmul.bf16.gmra.mxu0 %v558
  %v686 = vpop.f32.mrf.mxu0
  %v687 = vadd.f32 0.0, %v686
  %v688 = vpop.f32.mrf.mxu0
  %v689 = vadd.f32 0.0, %v688
  %690 = vmatmul.bf16.gmra.mxu0 %v561
  %v691 = vpop.f32.mrf.mxu0
  %v692 = vadd.f32 0.0, %v691
  %v693 = vpop.f32.mrf.mxu0
  %v694 = vadd.f32 0.0, %v693
  %695 = vmatmul.bf16.gmra.mxu0 %v564
  %v696 = vpop.f32.mrf.mxu0
  %v697 = vadd.f32 0.0, %v696
  %v698 = vpop.f32.mrf.mxu0
  %v699 = vadd.f32 0.0, %v698
  %700 = vmatmul.bf16.gmra.mxu0 %v567
  %v701 = vpop.f32.mrf.mxu0
  %v702 = vadd.f32 0.0, %v701
  %v703 = vpop.f32.mrf.mxu0
  %v704 = vadd.f32 0.0, %v703
  %705 = vmatmul.bf16.gmra.mxu0 %v570
  %v706 = vpop.f32.mrf.mxu0
  %v707 = vadd.f32 0.0, %v706
  %v708 = vpop.f32.mrf.mxu0
  %v709 = vadd.f32 0.0, %v708
  %710 = vmatmul.bf16.gmra.mxu0 %v573
  %v711 = vpop.f32.mrf.mxu0
  %v712 = vadd.f32 0.0, %v711
  %v713 = vpop.f32.mrf.mxu0
  %v714 = vadd.f32 0.0, %v713
  %715 = vmatmul.bf16.gmra.mxu0 %v576
  %v716 = vpop.f32.mrf.mxu0
  %v717 = vadd.f32 0.0, %v716
  %v718 = vpop.f32.mrf.mxu0
  %v719 = vadd.f32 0.0, %v718
  %720 = vmatmul.bf16.gmra.mxu0 %v579
  %v721 = vpop.f32.mrf.mxu0
  %v722 = vadd.f32 0.0, %v721
  %v723 = vpop.f32.mrf.mxu0
  %v724 = vadd.f32 0.0, %v723
  %725 = vmatmul.bf16.gmra.mxu0 %v582
  %v726 = vpop.f32.mrf.mxu0
  %v727 = vadd.f32 0.0, %v726
  %v728 = vpop.f32.mrf.mxu0
  %v729 = vadd.f32 0.0, %v728
  %730 = vmatmul.bf16.gmra.mxu0 %v585
  %v731 = vpop.f32.mrf.mxu0
  %v732 = vadd.f32 0.0, %v731
  %v733 = vpop.f32.mrf.mxu0
  %v734 = vadd.f32 0.0, %v733
  %735 = vmatmul.bf16.gmra.mxu0 %v588
  %v736 = vpop.f32.mrf.mxu0
  %v737 = vadd.f32 0.0, %v736
  %v738 = vpop.f32.mrf.mxu0
  %v739 = vadd.f32 0.0, %v738
  %740 = vmatmul.bf16.gmra.mxu0 %v591
  %v741 = vpop.f32.mrf.mxu0
  %v742 = vadd.f32 0.0, %v741
  %v743 = vpop.f32.mrf.mxu0
  %v744 = vadd.f32 0.0, %v743
  %745 = vmatmul.bf16.gmra.mxu0 %v594
  %v746 = vpop.f32.mrf.mxu0
  %v747 = vadd.f32 0.0, %v746
  %v748 = vpop.f32.mrf.mxu0
  %v749 = vadd.f32 0.0, %v748
  %750 = vmatmul.bf16.gmra.mxu0 %v597
  %v751 = vpop.f32.mrf.mxu0
  %v752 = vadd.f32 0.0, %v751
  %v753 = vpop.f32.mrf.mxu0
  %v754 = vadd.f32 0.0, %v753
  %755 = vmatmul.bf16.gmra.mxu0 %v600
  %v756 = vpop.f32.mrf.mxu0
  %v757 = vadd.f32 0.0, %v756
  %v758 = vpop.f32.mrf.mxu0
  %v759 = vadd.f32 0.0, %v758
  %760 = vmatmul.bf16.gmra.mxu0 %v603
  %v761 = vpop.f32.mrf.mxu0
  %v762 = vadd.f32 0.0, %v761
  %v763 = vpop.f32.mrf.mxu0
  %v764 = vadd.f32 0.0, %v763
  %765 = vmatmul.bf16.gmra.mxu0 %v606
  %v766 = vpop.f32.mrf.mxu0
  %v767 = vadd.f32 0.0, %v766
  %v768 = vpop.f32.mrf.mxu0
  %v769 = vadd.f32 0.0, %v768
  %770 = vmatmul.bf16.gmra.mxu0 %v609
  %v771 = vpop.f32.mrf.mxu0
  %v772 = vadd.f32 0.0, %v771
  %v773 = vpop.f32.mrf.mxu0
  %v774 = vadd.f32 0.0, %v773
  %775 = vmatmul.bf16.gmra.mxu0 %v612
  %v776 = vpop.f32.mrf.mxu0
  %v777 = vadd.f32 0.0, %v776
  %v778 = vpop.f32.mrf.mxu0
  %v779 = vadd.f32 0.0, %v778
  %780 = vmatmul.bf16.gmra.mxu0 %v615
  %v781 = vpop.f32.mrf.mxu0
  %v782 = vadd.f32 0.0, %v781
  %v783 = vpop.f32.mrf.mxu0
  %v784 = vadd.f32 0.0, %v783
  %785 = vmatmul.bf16.gmra.mxu0 %v618
  %v786 = vpop.f32.mrf.mxu0
  %v787 = vadd.f32 0.0, %v786
  %v788 = vpop.f32.mrf.mxu0
  %v789 = vadd.f32 0.0, %v788
  %790 = vmatmul.bf16.gmra.mxu0 %v621
  %v791 = vpop.f32.mrf.mxu0
  %v792 = vadd.f32 0.0, %v791
  %v793 = vpop.f32.mrf.mxu0
  %v794 = vadd.f32 0.0, %v793
  %795 = vdwg.mxu0
  %v796 = vld [vmem:[%s4] sm:$0xff]
  %v797 = vld [vmem:[%s4 + $0x8] sm:$0xff]
  %v798 = vld [vmem:[%s4 + $0x10] sm:$0xff]
  %v799 = vld [vmem:[%s4 + $0x18] sm:$0xff]
  %v800 = vld [vmem:[%s4 + $0x20] sm:$0xff]
  %v801 = vld [vmem:[%s4 + $0x28] sm:$0xff]
  %v802 = vld [vmem:[%s4 + $0x30] sm:$0xff]
  %v803 = vld [vmem:[%s4 + $0x38] sm:$0xff]
  %v804 = vld [vmem:[%s4 + $0x40] sm:$0xff]
  %v805 = vld [vmem:[%s4 + $0x48] sm:$0xff]
  %v806 = vld [vmem:[%s4 + $0x50] sm:$0xff]
  %v807 = vld [vmem:[%s4 + $0x58] sm:$0xff]
  %v808 = vld [vmem:[%s4 + $0x60] sm:$0xff]
  %v809 = vld [vmem:[%s4 + $0x68] sm:$0xff]
  %v810 = vld [vmem:[%s4 + $0x70] sm:$0xff]
  %v811 = vld [vmem:[%s4 + $0x78] sm:$0xff]
  %v812 = vld [vmem:[%s4 + $0x80] sm:$0xff]
  %v813 = vld [vmem:[%s4 + $0x88] sm:$0xff]
  %v814 = vld [vmem:[%s4 + $0x90] sm:$0xff]
  %v815 = vld [vmem:[%s4 + $0x98] sm:$0xff]
  %v816 = vld [vmem:[%s4 + $0xa0] sm:$0xff]
  %v817 = vld [vmem:[%s4 + $0xa8] sm:$0xff]
  %v818 = vld [vmem:[%s4 + $0xb0] sm:$0xff]
  %v819 = vld [vmem:[%s4 + $0xb8] sm:$0xff]
  %v820 = vld [vmem:[%s4 + $0xc0] sm:$0xff]
  %v821 = vld [vmem:[%s4 + $0xc8] sm:$0xff]
  %v822 = vld [vmem:[%s4 + $0xd0] sm:$0xff]
  %v823 = vld [vmem:[%s4 + $0xd8] sm:$0xff]
  %v824 = vld [vmem:[%s4 + $0xe0] sm:$0xff]
  %v825 = vld [vmem:[%s4 + $0xe8] sm:$0xff]
  %v826 = vld [vmem:[%s4 + $0xf0] sm:$0xff]
  %v827 = vld [vmem:[%s4 + $0xf8] sm:$0xff]
  %v828 = vld [vmem:[%s4 + $0x100] sm:$0xff]
  %v829 = vld [vmem:[%s4 + $0x108] sm:$0xff]
  %v830 = vld [vmem:[%s4 + $0x110] sm:$0xff]
  %v831 = vld [vmem:[%s4 + $0x118] sm:$0xff]
  %v832 = vld [vmem:[%s4 + $0x120] sm:$0xff]
  %v833 = vld [vmem:[%s4 + $0x128] sm:$0xff]
  %v834 = vld [vmem:[%s4 + $0x130] sm:$0xff]
  %v835 = vld [vmem:[%s4 + $0x138] sm:$0xff]
  %v836 = vld [vmem:[%s4 + $0x140] sm:$0xff]
  %v837 = vld [vmem:[%s4 + $0x148] sm:$0xff]
  %v838 = vld [vmem:[%s4 + $0x150] sm:$0xff]
  %v839 = vld [vmem:[%s4 + $0x158] sm:$0xff]
  %v840 = vld [vmem:[%s4 + $0x160] sm:$0xff]
  %v841 = vld [vmem:[%s4 + $0x168] sm:$0xff]
  %v842 = vld [vmem:[%s4 + $0x170] sm:$0xff]
  %v843 = vld [vmem:[%s4 + $0x178] sm:$0xff]
  %v844 = vld [vmem:[%s4 + $0x180] sm:$0xff]
  %v845 = vld [vmem:[%s4 + $0x188] sm:$0xff]
  %v846 = vld [vmem:[%s4 + $0x190] sm:$0xff]
  %v847 = vld [vmem:[%s4 + $0x198] sm:$0xff]
  %v848 = vld [vmem:[%s4 + $0x1a0] sm:$0xff]
  %v849 = vld [vmem:[%s4 + $0x1a8] sm:$0xff]
  %v850 = vld [vmem:[%s4 + $0x1b0] sm:$0xff]
  %v851 = vld [vmem:[%s4 + $0x1b8] sm:$0xff]
  %v852 = vld [vmem:[%s4 + $0x1c0] sm:$0xff]
  %v853 = vld [vmem:[%s4 + $0x1c8] sm:$0xff]
  %v854 = vld [vmem:[%s4 + $0x1d0] sm:$0xff]
  %v855 = vld [vmem:[%s4 + $0x1d8] sm:$0xff]
  %v856 = vld [vmem:[%s4 + $0x1e0] sm:$0xff]
  %v857 = vld [vmem:[%s4 + $0x1e8] sm:$0xff]
  %v858 = vld [vmem:[%s4 + $0x1f0] sm:$0xff]
  %v859 = vld [vmem:[%s4 + $0x1f8] sm:$0xff]
  %v860 = vmul.f32 %v637, %v796
  %v861 = vmul.f32 %v639, %v797
  %v862 = vmul.f32 %v642, %v798
  %v863 = vmul.f32 %v644, %v799
  %v864 = vmul.f32 %v647, %v800
  %v865 = vmul.f32 %v649, %v801
  %v866 = vmul.f32 %v652, %v802
  %v867 = vmul.f32 %v654, %v803
  %v868 = vmul.f32 %v657, %v804
  %v869 = vmul.f32 %v659, %v805
  %v870 = vmul.f32 %v662, %v806
  %v871 = vmul.f32 %v664, %v807
  %v872 = vmul.f32 %v667, %v808
  %v873 = vmul.f32 %v669, %v809
  %v874 = vmul.f32 %v672, %v810
  %v875 = vmul.f32 %v674, %v811
  %v876 = vmul.f32 %v677, %v812
  %v877 = vmul.f32 %v679, %v813
  %v878 = vmul.f32 %v682, %v814
  %v879 = vmul.f32 %v684, %v815
  %v880 = vmul.f32 %v687, %v816
  %v881 = vmul.f32 %v689, %v817
  %v882 = vmul.f32 %v692, %v818
  %v883 = vmul.f32 %v694, %v819
  %v884 = vmul.f32 %v697, %v820
  %v885 = vmul.f32 %v699, %v821
  %v886 = vmul.f32 %v702, %v822
  %v887 = vmul.f32 %v704, %v823
  %v888 = vmul.f32 %v707, %v824
  %v889 = vmul.f32 %v709, %v825
  %v890 = vmul.f32 %v712, %v826
  %v891 = vmul.f32 %v714, %v827
  %v892 = vmul.f32 %v717, %v828
  %v893 = vmul.f32 %v719, %v829
  %v894 = vmul.f32 %v722, %v830
  %v895 = vmul.f32 %v724, %v831
  %v896 = vmul.f32 %v727, %v832
  %v897 = vmul.f32 %v729, %v833
  %v898 = vmul.f32 %v732, %v834
  %v899 = vmul.f32 %v734, %v835
  %v900 = vmul.f32 %v737, %v836
  %v901 = vmul.f32 %v739, %v837
  %v902 = vmul.f32 %v742, %v838
  %v903 = vmul.f32 %v744, %v839
  %v904 = vmul.f32 %v747, %v840
  %v905 = vmul.f32 %v749, %v841
  %v906 = vmul.f32 %v752, %v842
  %v907 = vmul.f32 %v754, %v843
  %v908 = vmul.f32 %v757, %v844
  %v909 = vmul.f32 %v759, %v845
  %v910 = vmul.f32 %v762, %v846
  %v911 = vmul.f32 %v764, %v847
  %v912 = vmul.f32 %v767, %v848
  %v913 = vmul.f32 %v769, %v849
  %v914 = vmul.f32 %v772, %v850
  %v915 = vmul.f32 %v774, %v851
  %v916 = vmul.f32 %v777, %v852
  %v917 = vmul.f32 %v779, %v853
  %v918 = vmul.f32 %v782, %v854
  %v919 = vmul.f32 %v784, %v855
  %v920 = vmul.f32 %v787, %v856
  %v921 = vmul.f32 %v789, %v857
  %v922 = vmul.f32 %v792, %v858
  %v923 = vmul.f32 %v794, %v859
  %v924 = vld [vmem:[%s2] sm:$0xff]
  %v925 = vld [vmem:[%s2 + $0x8] sm:$0xff]
  %v926 = vld [vmem:[%s2 + $0x10] sm:$0xff]
  %v927 = vld [vmem:[%s2 + $0x18] sm:$0xff]
  %v928 = vld [vmem:[%s2 + $0x20] sm:$0xff]
  %v929 = vld [vmem:[%s2 + $0x28] sm:$0xff]
  %v930 = vld [vmem:[%s2 + $0x30] sm:$0xff]
  %v931 = vld [vmem:[%s2 + $0x38] sm:$0xff]
  %v932 = vpack.c.bf16 %v861, %v860
  %v933 = vpack.c.bf16 %v863, %v862
  %v934 = vpack.c.bf16 %v865, %v864
  %v935 = vpack.c.bf16 %v867, %v866
  %v936 = vpack.c.bf16 %v869, %v868
  %v937 = vpack.c.bf16 %v871, %v870
  %v938 = vpack.c.bf16 %v873, %v872
  %v939 = vpack.c.bf16 %v875, %v874
  %v940 = vpack.c.bf16 %v877, %v876
  %v941 = vpack.c.bf16 %v879, %v878
  %v942 = vpack.c.bf16 %v881, %v880
  %v943 = vpack.c.bf16 %v883, %v882
  %v944 = vpack.c.bf16 %v885, %v884
  %v945 = vpack.c.bf16 %v887, %v886
  %v946 = vpack.c.bf16 %v889, %v888
  %v947 = vpack.c.bf16 %v891, %v890
  %v948 = vpack.c.bf16 %v893, %v892
  %v949 = vpack.c.bf16 %v895, %v894
  %v950 = vpack.c.bf16 %v897, %v896
  %v951 = vpack.c.bf16 %v899, %v898
  %v952 = vpack.c.bf16 %v901, %v900
  %v953 = vpack.c.bf16 %v903, %v902
  %v954 = vpack.c.bf16 %v905, %v904
  %v955 = vpack.c.bf16 %v907, %v906
  %v956 = vpack.c.bf16 %v909, %v908
  %v957 = vpack.c.bf16 %v911, %v910
  %v958 = vpack.c.bf16 %v913, %v912
  %v959 = vpack.c.bf16 %v915, %v914
  %v960 = vpack.c.bf16 %v917, %v916
  %v961 = vpack.c.bf16 %v919, %v918
  %v962 = vpack.c.bf16 %v921, %v920
  %v963 = vpack.c.bf16 %v923, %v922
  %v964 = vld [vmem:[%s5] sm:$0xff]
  %v965 = vld [vmem:[%s5 + $0x8] sm:$0xff]
  %v966 = vld [vmem:[%s5 + $0x10] sm:$0xff]
  %v967 = vld [vmem:[%s5 + $0x18] sm:$0xff]
  %v976 = vunpack.c.l.b16 %v924
  %v977 = vunpack.c.h.b16 %v924
  %v978 = vunpack.c.l.b16 %v925
  %v979 = vunpack.c.h.b16 %v925
  %v980 = vunpack.c.l.b16 %v926
  %v981 = vunpack.c.h.b16 %v926
  %v982 = vunpack.c.l.b16 %v927
  %v983 = vunpack.c.h.b16 %v927
  %v984 = vunpack.c.l.b16 %v928
  %v985 = vunpack.c.h.b16 %v928
  %v986 = vunpack.c.l.b16 %v929
  %v987 = vunpack.c.h.b16 %v929
  %v988 = vunpack.c.l.b16 %v930
  %v989 = vunpack.c.h.b16 %v930
  %v990 = vunpack.c.l.b16 %v931
  %v991 = vunpack.c.h.b16 %v931
  %v992 = vpack.c.b16 %v980, %v976
  %v993 = vpack.c.b16 %v981, %v977
  %v994 = vpack.c.b16 %v982, %v978
  %v995 = vpack.c.b16 %v983, %v979
  %v996 = vpack.c.b16 %v988, %v984
  %v997 = vpack.c.b16 %v989, %v985
  %v998 = vpack.c.b16 %v990, %v986
  %v999 = vpack.c.b16 %v991, %v987
  %1008 = vmatpush.bf16.msra.mxu0 %v939
  %1009 = vmatpush.bf16.msra.mxu0 %v938
  %1010 = vmatpush.bf16.msra.mxu0 %v937
  %1011 = vmatpush.bf16.msra.mxu0 %v936
  %1012 = vmatpush.bf16.msra.mxu0 %v935
  %1013 = vmatpush.bf16.msra.mxu0 %v934
  %1014 = vmatpush.bf16.msra.mxu0 %v933
  %1015 = vmatpush.bf16.msra.mxu0 %v932
  %1016 = vmatmul.bf16.gmra.mxu0 %v992
  %v1017 = vpop.f32.mrf.mxu0
  %v1018 = vadd.f32 %v964, %v1017
  %v1019 = vpop.f32.mrf.mxu0
  %v1020 = vadd.f32 %v965, %v1019
  %1021 = vmatmul.bf16.gmra.mxu0 %v996
  %v1022 = vpop.f32.mrf.mxu0
  %v1023 = vadd.f32 %v966, %v1022
  %v1024 = vpop.f32.mrf.mxu0
  %v1025 = vadd.f32 %v967, %v1024
  %1026 = vdwg.mxu0
  %1027 = vmatpush.bf16.msra.mxu0 %v947
  %1028 = vmatpush.bf16.msra.mxu0 %v946
  %1029 = vmatpush.bf16.msra.mxu0 %v945
  %1030 = vmatpush.bf16.msra.mxu0 %v944
  %1031 = vmatpush.bf16.msra.mxu0 %v943
  %1032 = vmatpush.bf16.msra.mxu0 %v942
  %1033 = vmatpush.bf16.msra.mxu0 %v941
  %1034 = vmatpush.bf16.msra.mxu0 %v940
  %1035 = vmatmul.bf16.gmra.mxu0 %v993
  %v1036 = vpop.f32.mrf.mxu0
  %v1037 = vadd.f32 %v1018, %v1036
  %v1038 = vpop.f32.mrf.mxu0
  %v1039 = vadd.f32 %v1020, %v1038
  %1040 = vmatmul.bf16.gmra.mxu0 %v997
  %v1041 = vpop.f32.mrf.mxu0
  %v1042 = vadd.f32 %v1023, %v1041
  %v1043 = vpop.f32.mrf.mxu0
  %v1044 = vadd.f32 %v1025, %v1043
  %1045 = vdwg.mxu0
  %1046 = vmatpush.bf16.msra.mxu0 %v955
  %1047 = vmatpush.bf16.msra.mxu0 %v954
  %1048 = vmatpush.bf16.msra.mxu0 %v953
  %1049 = vmatpush.bf16.msra.mxu0 %v952
  %1050 = vmatpush.bf16.msra.mxu0 %v951
  %1051 = vmatpush.bf16.msra.mxu0 %v950
  %1052 = vmatpush.bf16.msra.mxu0 %v949
  %1053 = vmatpush.bf16.msra.mxu0 %v948
  %1054 = vmatmul.bf16.gmra.mxu0 %v994
  %v1055 = vpop.f32.mrf.mxu0
  %v1056 = vadd.f32 %v1037, %v1055
  %v1057 = vpop.f32.mrf.mxu0
  %v1058 = vadd.f32 %v1039, %v1057
  %1059 = vmatmul.bf16.gmra.mxu0 %v998
  %v1060 = vpop.f32.mrf.mxu0
  %v1061 = vadd.f32 %v1042, %v1060
  %v1062 = vpop.f32.mrf.mxu0
  %v1063 = vadd.f32 %v1044, %v1062
  %1064 = vdwg.mxu0
  %1065 = vmatpush.bf16.msra.mxu0 %v963
  %1066 = vmatpush.bf16.msra.mxu0 %v962
  %1067 = vmatpush.bf16.msra.mxu0 %v961
  %1068 = vmatpush.bf16.msra.mxu0 %v960
  %1069 = vmatpush.bf16.msra.mxu0 %v959
  %1070 = vmatpush.bf16.msra.mxu0 %v958
  %1071 = vmatpush.bf16.msra.mxu0 %v957
  %1072 = vmatpush.bf16.msra.mxu0 %v956
  %1073 = vmatmul.bf16.gmra.mxu0 %v995
  %v1074 = vpop.f32.mrf.mxu0
  %v1075 = vadd.f32 %v1056, %v1074
  %v1076 = vpop.f32.mrf.mxu0
  %v1077 = vadd.f32 %v1058, %v1076
  %1078 = vmatmul.bf16.gmra.mxu0 %v999
  %v1079 = vpop.f32.mrf.mxu0
  %v1080 = vadd.f32 %v1061, %v1079
  %v1081 = vpop.f32.mrf.mxu0
  %v1082 = vadd.f32 %v1063, %v1081
  %1083 = vdwg.mxu0
  %v1084 = vmax.f32 %v1075, 0.0
  %v1085 = vmax.f32 %v1077, 0.0
  %v1086 = vmax.f32 %v1080, 0.0
  %v1087 = vmax.f32 %v1082, 0.0
  %vm1088 = vcmask 699392
  %1089 = vst.msk [vmem:[#allocation2] sm:$0xf] %vm1088, 0
  %1090 = vst.msk [vmem:[#allocation2 + $0x4] sm:$0xf] %vm1088, 0
  %1091 = vst.msk [vmem:[#allocation2 + $0x8] sm:$0xf] %vm1088, 0
  %1092 = vst.msk [vmem:[#allocation2 + $0xc] sm:$0xf] %vm1088, 0
  %v1093 = vpack.c.bf16 %v1084, %v1084
  %v1094 = vpack.c.bf16 %v1085, %v1085
  %v1095 = vpack.c.bf16 %v1086, %v1086
  %v1096 = vpack.c.bf16 %v1087, %v1087
  %1101 = vrot.lane.b32.xlu0 %v1093, 7
  %v1102 = vpop.permute.xlu0 %1101
  %1103 = vrot.lane.b32.xlu0 %v1094, 7
  %v1104 = vpop.permute.xlu0 %1103
  %1105 = vrot.lane.b32.xlu0 %v1095, 7
  %v1106 = vpop.permute.xlu0 %1105
  %1107 = vrot.lane.b32.xlu0 %v1096, 7
  %v1108 = vpop.permute.xlu0 %1107
  %vm1113 = vcmask 642104
  %1114 = vst.msk [vmem:[#allocation2] sm:$0xf] %vm1113, %v1102
  %1115 = vst.msk [vmem:[#allocation2 + $0x4] sm:$0xf] %vm1113, %v1104
  %1116 = vst.msk [vmem:[#allocation2 + $0x8] sm:$0xf] %vm1113, %v1106
  %1117 = vst.msk [vmem:[#allocation2 + $0xc] sm:$0xf] %vm1113, %v1108
  %v1118 = vld [vmem:[#allocation2] sm:$0xf]
  %v1119 = vld [vmem:[#allocation2 + $0x4] sm:$0xf]
  %v1120 = vld [vmem:[#allocation2 + $0x8] sm:$0xf]
  %v1121 = vld [vmem:[#allocation2 + $0xc] sm:$0xf]
  %v1122 = vld [vmem:[%s6] sm:$0xf]
  %v1123 = vld [vmem:[%s6 + $0x4] sm:$0xf]
  %v1124 = vld [vmem:[%s6 + $0x8] sm:$0xf]
  %v1125 = vld [vmem:[%s6 + $0xc] sm:$0xf]
  %v1126 = vld [vmem:[%s6 + $0x10] sm:$0xf]
  %v1127 = vld [vmem:[%s6 + $0x14] sm:$0xf]
  %v1128 = vld [vmem:[%s6 + $0x18] sm:$0xf]
  %v1129 = vld [vmem:[%s6 + $0x1c] sm:$0xf]
  %s1130 = scalar_lea.vmem %s6, 32
  %v1131 = vld [vmem:[%s1130] sm:$0xf]
  %v1132 = vld [vmem:[%s1130 + $0x4] sm:$0xf]
  %v1133 = vld [vmem:[%s1130 + $0x8] sm:$0xf]
  %v1134 = vld [vmem:[%s1130 + $0xc] sm:$0xf]
  %v1135 = vld [vmem:[%s1130 + $0x10] sm:$0xf]
  %v1136 = vld [vmem:[%s1130 + $0x14] sm:$0xf]
  %v1137 = vld [vmem:[%s1130 + $0x18] sm:$0xf]
  %v1138 = vld [vmem:[%s1130 + $0x1c] sm:$0xf]
  %v1147 = vunpack.c.l.b16 %v1131
  %v1148 = vunpack.c.l.b16 %v1132
  %v1149 = vunpack.c.l.b16 %v1133
  %v1150 = vunpack.c.l.b16 %v1134
  %v1151 = vunpack.c.l.b16 %v1135
  %v1152 = vunpack.c.l.b16 %v1136
  %v1153 = vunpack.c.l.b16 %v1137
  %v1154 = vunpack.c.l.b16 %v1138
  %v1155 = vpack.c.b16 %v1148, %v1147
  %v1156 = vpack.c.b16 %v1150, %v1149
  %v1157 = vpack.c.b16 %v1152, %v1151
  %v1158 = vpack.c.b16 %v1154, %v1153
  %v1163 = vunpack.c.l.b16 %v1118
  %v1164 = vunpack.c.l.b16 %v1119
  %v1165 = vunpack.c.l.b16 %v1120
  %v1166 = vunpack.c.l.b16 %v1121
  %v1167 = vpack.c.b16 %v1164, %v1163
  %v1168 = vpack.c.b16 %v1166, %v1165
  %1169 = vrot.lane.b32.xlu0 %v1167, 127
  %v1170 = vpop.permute.xlu0 %1169
  %1171 = vrot.lane.b32.xlu0 %v1168, 127
  %v1172 = vpop.permute.xlu0 %1171
  %vm1175 = vcmask 261120
  %v1177 = vsel %vm1175, %v1155, 0
  %v1180 = vsel %vm1175, %v1156, 0
  %v1183 = vsel %vm1175, %v1157, 0
  %v1186 = vsel %vm1175, %v1158, 0
  %1188 = vmatpush.bf16.msra.mxu0 0
  %1189 = vmatpush.bf16.msra.mxu0 0
  %1190 = vmatpush.bf16.msra.mxu0 0
  %1191 = vmatpush.bf16.msra.mxu0 0
  %1192 = vmatpush.bf16.msra.mxu0 0
  %1193 = vmatpush.bf16.msra.mxu0 0
  %1194 = vmatpush.bf16.msra.mxu0 %v1172
  %1195 = vmatpush.bf16.msra.mxu0 %v1170
  %1196 = vmatmul.bf16.gmra.mxu0 %v1177
  %v1197 = vpop.f32.mrf.mxu0
  %v1198 = vadd.f32 0.0, %v1197
  %v1199 = vpop.f32.mrf.mxu0
  %v1200 = vadd.f32 0.0, %v1199
  %1201 = vmatmul.bf16.gmra.mxu0 %v1180
  %v1202 = vpop.f32.mrf.mxu0
  %v1203 = vadd.f32 0.0, %v1202
  %v1204 = vpop.f32.mrf.mxu0
  %v1205 = vadd.f32 0.0, %v1204
  %1206 = vmatmul.bf16.gmra.mxu0 %v1183
  %v1207 = vpop.f32.mrf.mxu0
  %v1208 = vadd.f32 0.0, %v1207
  %v1209 = vpop.f32.mrf.mxu0
  %v1210 = vadd.f32 0.0, %v1209
  %1211 = vmatmul.bf16.gmra.mxu0 %v1186
  %v1212 = vpop.f32.mrf.mxu0
  %v1213 = vadd.f32 0.0, %v1212
  %v1214 = vpop.f32.mrf.mxu0
  %v1215 = vadd.f32 0.0, %v1214
  %1216 = vdwg.mxu0
  %v1225 = vunpack.c.l.b16 %v1122
  %v1226 = vunpack.c.l.b16 %v1123
  %v1227 = vunpack.c.l.b16 %v1124
  %v1228 = vunpack.c.l.b16 %v1125
  %v1229 = vunpack.c.l.b16 %v1126
  %v1230 = vunpack.c.l.b16 %v1127
  %v1231 = vunpack.c.l.b16 %v1128
  %v1232 = vunpack.c.l.b16 %v1129
  %v1233 = vpack.c.b16 %v1226, %v1225
  %v1234 = vpack.c.b16 %v1228, %v1227
  %v1235 = vpack.c.b16 %v1230, %v1229
  %v1236 = vpack.c.b16 %v1232, %v1231
  %v1240 = vsel %vm1175, %v1233, 0
  %v1243 = vsel %vm1175, %v1234, 0
  %v1246 = vsel %vm1175, %v1235, 0
  %v1249 = vsel %vm1175, %v1236, 0
  %1251 = vmatpush.bf16.msra.mxu0 0
  %1252 = vmatpush.bf16.msra.mxu0 0
  %1253 = vmatpush.bf16.msra.mxu0 0
  %1254 = vmatpush.bf16.msra.mxu0 0
  %1255 = vmatpush.bf16.msra.mxu0 0
  %1256 = vmatpush.bf16.msra.mxu0 0
  %1257 = vmatpush.bf16.msra.mxu0 %v1168
  %1258 = vmatpush.bf16.msra.mxu0 %v1167
  %1259 = vmatmul.bf16.gmra.mxu0 %v1240
  %v1260 = vpop.f32.mrf.mxu0
  %v1261 = vadd.f32 %v1198, %v1260
  %v1262 = vpop.f32.mrf.mxu0
  %v1263 = vadd.f32 %v1200, %v1262
  %1264 = vmatmul.bf16.gmra.mxu0 %v1243
  %v1265 = vpop.f32.mrf.mxu0
  %v1266 = vadd.f32 %v1203, %v1265
  %v1267 = vpop.f32.mrf.mxu0
  %v1268 = vadd.f32 %v1205, %v1267
  %1269 = vmatmul.bf16.gmra.mxu0 %v1246
  %v1270 = vpop.f32.mrf.mxu0
  %v1271 = vadd.f32 %v1208, %v1270
  %v1272 = vpop.f32.mrf.mxu0
  %v1273 = vadd.f32 %v1210, %v1272
  %1274 = vmatmul.bf16.gmra.mxu0 %v1249
  %v1275 = vpop.f32.mrf.mxu0
  %v1276 = vadd.f32 %v1213, %v1275
  %v1277 = vpop.f32.mrf.mxu0
  %v1278 = vadd.f32 %v1215, %v1277
  %1279 = vdwg.mxu0
  %s1280 = scalar_lea.vmem %s6, 64
  %v1281 = vld [vmem:[%s1280] sm:$0xf]
  %v1282 = vld [vmem:[%s1280 + $0x4] sm:$0xf]
  %v1283 = vld [vmem:[%s1280 + $0x8] sm:$0xf]
  %v1284 = vld [vmem:[%s1280 + $0xc] sm:$0xf]
  %v1285 = vld [vmem:[%s1280 + $0x10] sm:$0xf]
  %v1286 = vld [vmem:[%s1280 + $0x14] sm:$0xf]
  %v1287 = vld [vmem:[%s1280 + $0x18] sm:$0xf]
  %v1288 = vld [vmem:[%s1280 + $0x1c] sm:$0xf]
  %v1297 = vunpack.c.l.b16 %v1281
  %v1298 = vunpack.c.l.b16 %v1282
  %v1299 = vunpack.c.l.b16 %v1283
  %v1300 = vunpack.c.l.b16 %v1284
  %v1301 = vunpack.c.l.b16 %v1285
  %v1302 = vunpack.c.l.b16 %v1286
  %v1303 = vunpack.c.l.b16 %v1287
  %v1304 = vunpack.c.l.b16 %v1288
  %v1305 = vpack.c.b16 %v1298, %v1297
  %v1306 = vpack.c.b16 %v1300, %v1299
  %v1307 = vpack.c.b16 %v1302, %v1301
  %v1308 = vpack.c.b16 %v1304, %v1303
  %1309 = vrot.lane.b32.xlu0 %v1167, 126
  %v1310 = vpop.permute.xlu0 %1309
  %1311 = vrot.lane.b32.xlu0 %v1168, 126
  %v1312 = vpop.permute.xlu0 %1311
  %v1316 = vsel %vm1175, %v1305, 0
  %v1319 = vsel %vm1175, %v1306, 0
  %v1322 = vsel %vm1175, %v1307, 0
  %v1325 = vsel %vm1175, %v1308, 0
  %1327 = vmatpush.bf16.msra.mxu0 0
  %1328 = vmatpush.bf16.msra.mxu0 0
  %1329 = vmatpush.bf16.msra.mxu0 0
  %1330 = vmatpush.bf16.msra.mxu0 0
  %1331 = vmatpush.bf16.msra.mxu0 0
  %1332 = vmatpush.bf16.msra.mxu0 0
  %1333 = vmatpush.bf16.msra.mxu0 %v1312
  %1334 = vmatpush.bf16.msra.mxu0 %v1310
  %1335 = vmatmul.bf16.gmra.mxu0 %v1316
  %v1336 = vpop.f32.mrf.mxu0
  %v1337 = vadd.f32 0.0, %v1336
  %v1338 = vpop.f32.mrf.mxu0
  %v1339 = vadd.f32 0.0, %v1338
  %1340 = vmatmul.bf16.gmra.mxu0 %v1319
  %v1341 = vpop.f32.mrf.mxu0
  %v1342 = vadd.f32 0.0, %v1341
  %v1343 = vpop.f32.mrf.mxu0
  %v1344 = vadd.f32 0.0, %v1343
  %1345 = vmatmul.bf16.gmra.mxu0 %v1322
  %v1346 = vpop.f32.mrf.mxu0
  %v1347 = vadd.f32 0.0, %v1346
  %v1348 = vpop.f32.mrf.mxu0
  %v1349 = vadd.f32 0.0, %v1348
  %1350 = vmatmul.bf16.gmra.mxu0 %v1325
  %v1351 = vpop.f32.mrf.mxu0
  %v1352 = vadd.f32 0.0, %v1351
  %v1353 = vpop.f32.mrf.mxu0
  %v1354 = vadd.f32 0.0, %v1353
  %1355 = vdwg.mxu0
  %v1356 = vadd.f32 %v1261, %v1337
  %v1357 = vadd.f32 %v1263, %v1339
  %v1358 = vadd.f32 %v1266, %v1342
  %v1359 = vadd.f32 %v1268, %v1344
  %v1360 = vadd.f32 %v1271, %v1347
  %v1361 = vadd.f32 %v1273, %v1349
  %v1362 = vadd.f32 %v1276, %v1352
  %v1363 = vadd.f32 %v1278, %v1354
  %s1364 = scalar_lea.vmem %s6, 96
  %v1365 = vld [vmem:[%s1364] sm:$0xf]
  %v1366 = vld [vmem:[%s1364 + $0x4] sm:$0xf]
  %v1367 = vld [vmem:[%s1364 + $0x8] sm:$0xf]
  %v1368 = vld [vmem:[%s1364 + $0xc] sm:$0xf]
  %v1369 = vld [vmem:[%s1364 + $0x10] sm:$0xf]
  %v1370 = vld [vmem:[%s1364 + $0x14] sm:$0xf]
  %v1371 = vld [vmem:[%s1364 + $0x18] sm:$0xf]
  %v1372 = vld [vmem:[%s1364 + $0x1c] sm:$0xf]
  %v1381 = vunpack.c.l.b16 %v1365
  %v1382 = vunpack.c.l.b16 %v1366
  %v1383 = vunpack.c.l.b16 %v1367
  %v1384 = vunpack.c.l.b16 %v1368
  %v1385 = vunpack.c.l.b16 %v1369
  %v1386 = vunpack.c.l.b16 %v1370
  %v1387 = vunpack.c.l.b16 %v1371
  %v1388 = vunpack.c.l.b16 %v1372
  %v1389 = vpack.c.b16 %v1382, %v1381
  %v1390 = vpack.c.b16 %v1384, %v1383
  %v1391 = vpack.c.b16 %v1386, %v1385
  %v1392 = vpack.c.b16 %v1388, %v1387
  %1393 = vrot.lane.b32.xlu0 %v1167, 122
  %v1394 = vpop.permute.xlu0 %1393
  %1395 = vrot.lane.b32.xlu0 %v1168, 122
  %v1396 = vpop.permute.xlu0 %1395
  %v1400 = vsel %vm1175, %v1389, 0
  %v1403 = vsel %vm1175, %v1390, 0
  %v1406 = vsel %vm1175, %v1391, 0
  %v1409 = vsel %vm1175, %v1392, 0
  %1411 = vmatpush.bf16.msra.mxu0 0
  %1412 = vmatpush.bf16.msra.mxu0 0
  %1413 = vmatpush.bf16.msra.mxu0 0
  %1414 = vmatpush.bf16.msra.mxu0 0
  %1415 = vmatpush.bf16.msra.mxu0 0
  %1416 = vmatpush.bf16.msra.mxu0 0
  %1417 = vmatpush.bf16.msra.mxu0 %v1396
  %1418 = vmatpush.bf16.msra.mxu0 %v1394
  %1419 = vmatmul.bf16.gmra.mxu0 %v1400
  %v1420 = vpop.f32.mrf.mxu0
  %v1421 = vadd.f32 0.0, %v1420
  %v1422 = vpop.f32.mrf.mxu0
  %v1423 = vadd.f32 0.0, %v1422
  %1424 = vmatmul.bf16.gmra.mxu0 %v1403
  %v1425 = vpop.f32.mrf.mxu0
  %v1426 = vadd.f32 0.0, %v1425
  %v1427 = vpop.f32.mrf.mxu0
  %v1428 = vadd.f32 0.0, %v1427
  %1429 = vmatmul.bf16.gmra.mxu0 %v1406
  %v1430 = vpop.f32.mrf.mxu0
  %v1431 = vadd.f32 0.0, %v1430
  %v1432 = vpop.f32.mrf.mxu0
  %v1433 = vadd.f32 0.0, %v1432
  %1434 = vmatmul.bf16.gmra.mxu0 %v1409
  %v1435 = vpop.f32.mrf.mxu0
  %v1436 = vadd.f32 0.0, %v1435
  %v1437 = vpop.f32.mrf.mxu0
  %v1438 = vadd.f32 0.0, %v1437
  %1439 = vdwg.mxu0
  %v1440 = vadd.f32 %v1356, %v1421
  %v1441 = vadd.f32 %v1357, %v1423
  %v1442 = vadd.f32 %v1358, %v1426
  %v1443 = vadd.f32 %v1359, %v1428
  %v1444 = vadd.f32 %v1360, %v1431
  %v1445 = vadd.f32 %v1361, %v1433
  %v1446 = vadd.f32 %v1362, %v1436
  %v1447 = vadd.f32 %v1363, %v1438
  %s1448 = scalar_lea.vmem %s6, 128
  %v1449 = vld [vmem:[%s1448] sm:$0xf]
  %v1450 = vld [vmem:[%s1448 + $0x4] sm:$0xf]
  %v1451 = vld [vmem:[%s1448 + $0x8] sm:$0xf]
  %v1452 = vld [vmem:[%s1448 + $0xc] sm:$0xf]
  %v1453 = vld [vmem:[%s1448 + $0x10] sm:$0xf]
  %v1454 = vld [vmem:[%s1448 + $0x14] sm:$0xf]
  %v1455 = vld [vmem:[%s1448 + $0x18] sm:$0xf]
  %v1456 = vld [vmem:[%s1448 + $0x1c] sm:$0xf]
  %v1465 = vunpack.c.l.b16 %v1449
  %v1466 = vunpack.c.l.b16 %v1450
  %v1467 = vunpack.c.l.b16 %v1451
  %v1468 = vunpack.c.l.b16 %v1452
  %v1469 = vunpack.c.l.b16 %v1453
  %v1470 = vunpack.c.l.b16 %v1454
  %v1471 = vunpack.c.l.b16 %v1455
  %v1472 = vunpack.c.l.b16 %v1456
  %v1473 = vpack.c.b16 %v1466, %v1465
  %v1474 = vpack.c.b16 %v1468, %v1467
  %v1475 = vpack.c.b16 %v1470, %v1469
  %v1476 = vpack.c.b16 %v1472, %v1471
  %1477 = vrot.lane.b32.xlu0 %v1167, 121
  %v1478 = vpop.permute.xlu0 %1477
  %1479 = vrot.lane.b32.xlu0 %v1168, 121
  %v1480 = vpop.permute.xlu0 %1479
  %v1484 = vsel %vm1175, %v1473, 0
  %v1487 = vsel %vm1175, %v1474, 0
  %v1490 = vsel %vm1175, %v1475, 0
  %v1493 = vsel %vm1175, %v1476, 0
  %1495 = vmatpush.bf16.msra.mxu0 0
  %1496 = vmatpush.bf16.msra.mxu0 0
  %1497 = vmatpush.bf16.msra.mxu0 0
  %1498 = vmatpush.bf16.msra.mxu0 0
  %1499 = vmatpush.bf16.msra.mxu0 0
  %1500 = vmatpush.bf16.msra.mxu0 0
  %1501 = vmatpush.bf16.msra.mxu0 %v1480
  %1502 = vmatpush.bf16.msra.mxu0 %v1478
  %1503 = vmatmul.bf16.gmra.mxu0 %v1484
  %v1504 = vpop.f32.mrf.mxu0
  %v1505 = vadd.f32 0.0, %v1504
  %v1506 = vpop.f32.mrf.mxu0
  %v1507 = vadd.f32 0.0, %v1506
  %1508 = vmatmul.bf16.gmra.mxu0 %v1487
  %v1509 = vpop.f32.mrf.mxu0
  %v1510 = vadd.f32 0.0, %v1509
  %v1511 = vpop.f32.mrf.mxu0
  %v1512 = vadd.f32 0.0, %v1511
  %1513 = vmatmul.bf16.gmra.mxu0 %v1490
  %v1514 = vpop.f32.mrf.mxu0
  %v1515 = vadd.f32 0.0, %v1514
  %v1516 = vpop.f32.mrf.mxu0
  %v1517 = vadd.f32 0.0, %v1516
  %1518 = vmatmul.bf16.gmra.mxu0 %v1493
  %v1519 = vpop.f32.mrf.mxu0
  %v1520 = vadd.f32 0.0, %v1519
  %v1521 = vpop.f32.mrf.mxu0
  %v1522 = vadd.f32 0.0, %v1521
  %1523 = vdwg.mxu0
  %v1524 = vadd.f32 %v1440, %v1505
  %v1525 = vadd.f32 %v1441, %v1507
  %v1526 = vadd.f32 %v1442, %v1510
  %v1527 = vadd.f32 %v1443, %v1512
  %v1528 = vadd.f32 %v1444, %v1515
  %v1529 = vadd.f32 %v1445, %v1517
  %v1530 = vadd.f32 %v1446, %v1520
  %v1531 = vadd.f32 %v1447, %v1522
  %s1532 = scalar_lea.vmem %s6, 160
  %v1533 = vld [vmem:[%s1532] sm:$0xf]
  %v1534 = vld [vmem:[%s1532 + $0x4] sm:$0xf]
  %v1535 = vld [vmem:[%s1532 + $0x8] sm:$0xf]
  %v1536 = vld [vmem:[%s1532 + $0xc] sm:$0xf]
  %v1537 = vld [vmem:[%s1532 + $0x10] sm:$0xf]
  %v1538 = vld [vmem:[%s1532 + $0x14] sm:$0xf]
  %v1539 = vld [vmem:[%s1532 + $0x18] sm:$0xf]
  %v1540 = vld [vmem:[%s1532 + $0x1c] sm:$0xf]
  %v1549 = vunpack.c.l.b16 %v1533
  %v1550 = vunpack.c.l.b16 %v1534
  %v1551 = vunpack.c.l.b16 %v1535
  %v1552 = vunpack.c.l.b16 %v1536
  %v1553 = vunpack.c.l.b16 %v1537
  %v1554 = vunpack.c.l.b16 %v1538
  %v1555 = vunpack.c.l.b16 %v1539
  %v1556 = vunpack.c.l.b16 %v1540
  %v1557 = vpack.c.b16 %v1550, %v1549
  %v1558 = vpack.c.b16 %v1552, %v1551
  %v1559 = vpack.c.b16 %v1554, %v1553
  %v1560 = vpack.c.b16 %v1556, %v1555
  %1561 = vrot.lane.b32.xlu0 %v1167, 120
  %v1562 = vpop.permute.xlu0 %1561
  %1563 = vrot.lane.b32.xlu0 %v1168, 120
  %v1564 = vpop.permute.xlu0 %1563
  %v1568 = vsel %vm1175, %v1557, 0
  %v1571 = vsel %vm1175, %v1558, 0
  %v1574 = vsel %vm1175, %v1559, 0
  %v1577 = vsel %vm1175, %v1560, 0
  %1579 = vmatpush.bf16.msra.mxu0 0
  %1580 = vmatpush.bf16.msra.mxu0 0
  %1581 = vmatpush.bf16.msra.mxu0 0
  %1582 = vmatpush.bf16.msra.mxu0 0
  %1583 = vmatpush.bf16.msra.mxu0 0
  %1584 = vmatpush.bf16.msra.mxu0 0
  %1585 = vmatpush.bf16.msra.mxu0 %v1564
  %1586 = vmatpush.bf16.msra.mxu0 %v1562
  %1587 = vmatmul.bf16.gmra.mxu0 %v1568
  %v1588 = vpop.f32.mrf.mxu0
  %v1589 = vadd.f32 0.0, %v1588
  %v1590 = vpop.f32.mrf.mxu0
  %v1591 = vadd.f32 0.0, %v1590
  %1592 = vmatmul.bf16.gmra.mxu0 %v1571
  %v1593 = vpop.f32.mrf.mxu0
  %v1594 = vadd.f32 0.0, %v1593
  %v1595 = vpop.f32.mrf.mxu0
  %v1596 = vadd.f32 0.0, %v1595
  %1597 = vmatmul.bf16.gmra.mxu0 %v1574
  %v1598 = vpop.f32.mrf.mxu0
  %v1599 = vadd.f32 0.0, %v1598
  %v1600 = vpop.f32.mrf.mxu0
  %v1601 = vadd.f32 0.0, %v1600
  %1602 = vmatmul.bf16.gmra.mxu0 %v1577
  %v1603 = vpop.f32.mrf.mxu0
  %v1604 = vadd.f32 0.0, %v1603
  %v1605 = vpop.f32.mrf.mxu0
  %v1606 = vadd.f32 0.0, %v1605
  %1607 = vdwg.mxu0
  %v1608 = vadd.f32 %v1524, %v1589
  %v1609 = vadd.f32 %v1525, %v1591
  %v1610 = vadd.f32 %v1526, %v1594
  %v1611 = vadd.f32 %v1527, %v1596
  %v1612 = vadd.f32 %v1528, %v1599
  %v1613 = vadd.f32 %v1529, %v1601
  %v1614 = vadd.f32 %v1530, %v1604
  %v1615 = vadd.f32 %v1531, %v1606
  %s1616 = scalar_lea.vmem %s6, 192
  %v1617 = vld [vmem:[%s1616] sm:$0xf]
  %v1618 = vld [vmem:[%s1616 + $0x4] sm:$0xf]
  %v1619 = vld [vmem:[%s1616 + $0x8] sm:$0xf]
  %v1620 = vld [vmem:[%s1616 + $0xc] sm:$0xf]
  %v1621 = vld [vmem:[%s1616 + $0x10] sm:$0xf]
  %v1622 = vld [vmem:[%s1616 + $0x14] sm:$0xf]
  %v1623 = vld [vmem:[%s1616 + $0x18] sm:$0xf]
  %v1624 = vld [vmem:[%s1616 + $0x1c] sm:$0xf]
  %v1633 = vunpack.c.l.b16 %v1617
  %v1634 = vunpack.c.l.b16 %v1618
  %v1635 = vunpack.c.l.b16 %v1619
  %v1636 = vunpack.c.l.b16 %v1620
  %v1637 = vunpack.c.l.b16 %v1621
  %v1638 = vunpack.c.l.b16 %v1622
  %v1639 = vunpack.c.l.b16 %v1623
  %v1640 = vunpack.c.l.b16 %v1624
  %v1641 = vpack.c.b16 %v1634, %v1633
  %v1642 = vpack.c.b16 %v1636, %v1635
  %v1643 = vpack.c.b16 %v1638, %v1637
  %v1644 = vpack.c.b16 %v1640, %v1639
  %1645 = vrot.lane.b32.xlu0 %v1167, 116
  %v1646 = vpop.permute.xlu0 %1645
  %1647 = vrot.lane.b32.xlu0 %v1168, 116
  %v1648 = vpop.permute.xlu0 %1647
  %v1652 = vsel %vm1175, %v1641, 0
  %v1655 = vsel %vm1175, %v1642, 0
  %v1658 = vsel %vm1175, %v1643, 0
  %v1661 = vsel %vm1175, %v1644, 0
  %1663 = vmatpush.bf16.msra.mxu0 0
  %1664 = vmatpush.bf16.msra.mxu0 0
  %1665 = vmatpush.bf16.msra.mxu0 0
  %1666 = vmatpush.bf16.msra.mxu0 0
  %1667 = vmatpush.bf16.msra.mxu0 0
  %1668 = vmatpush.bf16.msra.mxu0 0
  %1669 = vmatpush.bf16.msra.mxu0 %v1648
  %1670 = vmatpush.bf16.msra.mxu0 %v1646
  %1671 = vmatmul.bf16.gmra.mxu0 %v1652
  %v1672 = vpop.f32.mrf.mxu0
  %v1673 = vadd.f32 0.0, %v1672
  %v1674 = vpop.f32.mrf.mxu0
  %v1675 = vadd.f32 0.0, %v1674
  %1676 = vmatmul.bf16.gmra.mxu0 %v1655
  %v1677 = vpop.f32.mrf.mxu0
  %v1678 = vadd.f32 0.0, %v1677
  %v1679 = vpop.f32.mrf.mxu0
  %v1680 = vadd.f32 0.0, %v1679
  %1681 = vmatmul.bf16.gmra.mxu0 %v1658
  %v1682 = vpop.f32.mrf.mxu0
  %v1683 = vadd.f32 0.0, %v1682
  %v1684 = vpop.f32.mrf.mxu0
  %v1685 = vadd.f32 0.0, %v1684
  %1686 = vmatmul.bf16.gmra.mxu0 %v1661
  %v1687 = vpop.f32.mrf.mxu0
  %v1688 = vadd.f32 0.0, %v1687
  %v1689 = vpop.f32.mrf.mxu0
  %v1690 = vadd.f32 0.0, %v1689
  %1691 = vdwg.mxu0
  %v1692 = vadd.f32 %v1608, %v1673
  %v1693 = vadd.f32 %v1609, %v1675
  %v1694 = vadd.f32 %v1610, %v1678
  %v1695 = vadd.f32 %v1611, %v1680
  %v1696 = vadd.f32 %v1612, %v1683
  %v1697 = vadd.f32 %v1613, %v1685
  %v1698 = vadd.f32 %v1614, %v1688
  %v1699 = vadd.f32 %v1615, %v1690
  %s1700 = scalar_lea.vmem %s6, 224
  %v1701 = vld [vmem:[%s1700] sm:$0xf]
  %v1702 = vld [vmem:[%s1700 + $0x4] sm:$0xf]
  %v1703 = vld [vmem:[%s1700 + $0x8] sm:$0xf]
  %v1704 = vld [vmem:[%s1700 + $0xc] sm:$0xf]
  %v1705 = vld [vmem:[%s1700 + $0x10] sm:$0xf]
  %v1706 = vld [vmem:[%s1700 + $0x14] sm:$0xf]
  %v1707 = vld [vmem:[%s1700 + $0x18] sm:$0xf]
  %v1708 = vld [vmem:[%s1700 + $0x1c] sm:$0xf]
  %v1717 = vunpack.c.l.b16 %v1701
  %v1718 = vunpack.c.l.b16 %v1702
  %v1719 = vunpack.c.l.b16 %v1703
  %v1720 = vunpack.c.l.b16 %v1704
  %v1721 = vunpack.c.l.b16 %v1705
  %v1722 = vunpack.c.l.b16 %v1706
  %v1723 = vunpack.c.l.b16 %v1707
  %v1724 = vunpack.c.l.b16 %v1708
  %v1725 = vpack.c.b16 %v1718, %v1717
  %v1726 = vpack.c.b16 %v1720, %v1719
  %v1727 = vpack.c.b16 %v1722, %v1721
  %v1728 = vpack.c.b16 %v1724, %v1723
  %1729 = vrot.lane.b32.xlu0 %v1167, 115
  %v1730 = vpop.permute.xlu0 %1729
  %1731 = vrot.lane.b32.xlu0 %v1168, 115
  %v1732 = vpop.permute.xlu0 %1731
  %v1736 = vsel %vm1175, %v1725, 0
  %v1739 = vsel %vm1175, %v1726, 0
  %v1742 = vsel %vm1175, %v1727, 0
  %v1745 = vsel %vm1175, %v1728, 0
  %1747 = vmatpush.bf16.msra.mxu0 0
  %1748 = vmatpush.bf16.msra.mxu0 0
  %1749 = vmatpush.bf16.msra.mxu0 0
  %1750 = vmatpush.bf16.msra.mxu0 0
  %1751 = vmatpush.bf16.msra.mxu0 0
  %1752 = vmatpush.bf16.msra.mxu0 0
  %1753 = vmatpush.bf16.msra.mxu0 %v1732
  %1754 = vmatpush.bf16.msra.mxu0 %v1730
  %1755 = vmatmul.bf16.gmra.mxu0 %v1736
  %v1756 = vpop.f32.mrf.mxu0
  %v1757 = vadd.f32 0.0, %v1756
  %v1758 = vpop.f32.mrf.mxu0
  %v1759 = vadd.f32 0.0, %v1758
  %1760 = vmatmul.bf16.gmra.mxu0 %v1739
  %v1761 = vpop.f32.mrf.mxu0
  %v1762 = vadd.f32 0.0, %v1761
  %v1763 = vpop.f32.mrf.mxu0
  %v1764 = vadd.f32 0.0, %v1763
  %1765 = vmatmul.bf16.gmra.mxu0 %v1742
  %v1766 = vpop.f32.mrf.mxu0
  %v1767 = vadd.f32 0.0, %v1766
  %v1768 = vpop.f32.mrf.mxu0
  %v1769 = vadd.f32 0.0, %v1768
  %1770 = vmatmul.bf16.gmra.mxu0 %v1745
  %v1771 = vpop.f32.mrf.mxu0
  %v1772 = vadd.f32 0.0, %v1771
  %v1773 = vpop.f32.mrf.mxu0
  %v1774 = vadd.f32 0.0, %v1773
  %1775 = vdwg.mxu0
  %v1776 = vadd.f32 %v1692, %v1757
  %v1777 = vadd.f32 %v1693, %v1759
  %v1778 = vadd.f32 %v1694, %v1762
  %v1779 = vadd.f32 %v1695, %v1764
  %v1780 = vadd.f32 %v1696, %v1767
  %v1781 = vadd.f32 %v1697, %v1769
  %v1782 = vadd.f32 %v1698, %v1772
  %v1783 = vadd.f32 %v1699, %v1774
  %s1784 = scalar_lea.vmem %s6, 256
  %v1785 = vld [vmem:[%s1784] sm:$0xf]
  %v1786 = vld [vmem:[%s1784 + $0x4] sm:$0xf]
  %v1787 = vld [vmem:[%s1784 + $0x8] sm:$0xf]
  %v1788 = vld [vmem:[%s1784 + $0xc] sm:$0xf]
  %v1789 = vld [vmem:[%s1784 + $0x10] sm:$0xf]
  %v1790 = vld [vmem:[%s1784 + $0x14] sm:$0xf]
  %v1791 = vld [vmem:[%s1784 + $0x18] sm:$0xf]
  %v1792 = vld [vmem:[%s1784 + $0x1c] sm:$0xf]
  %v1801 = vunpack.c.l.b16 %v1785
  %v1802 = vunpack.c.l.b16 %v1786
  %v1803 = vunpack.c.l.b16 %v1787
  %v1804 = vunpack.c.l.b16 %v1788
  %v1805 = vunpack.c.l.b16 %v1789
  %v1806 = vunpack.c.l.b16 %v1790
  %v1807 = vunpack.c.l.b16 %v1791
  %v1808 = vunpack.c.l.b16 %v1792
  %v1809 = vpack.c.b16 %v1802, %v1801
  %v1810 = vpack.c.b16 %v1804, %v1803
  %v1811 = vpack.c.b16 %v1806, %v1805
  %v1812 = vpack.c.b16 %v1808, %v1807
  %1813 = vrot.lane.b32.xlu0 %v1167, 114
  %v1814 = vpop.permute.xlu0 %1813
  %1815 = vrot.lane.b32.xlu0 %v1168, 114
  %v1816 = vpop.permute.xlu0 %1815
  %v1820 = vsel %vm1175, %v1809, 0
  %v1823 = vsel %vm1175, %v1810, 0
  %v1826 = vsel %vm1175, %v1811, 0
  %v1829 = vsel %vm1175, %v1812, 0
  %1831 = vmatpush.bf16.msra.mxu0 0
  %1832 = vmatpush.bf16.msra.mxu0 0
  %1833 = vmatpush.bf16.msra.mxu0 0
  %1834 = vmatpush.bf16.msra.mxu0 0
  %1835 = vmatpush.bf16.msra.mxu0 0
  %1836 = vmatpush.bf16.msra.mxu0 0
  %1837 = vmatpush.bf16.msra.mxu0 %v1816
  %1838 = vmatpush.bf16.msra.mxu0 %v1814
  %1839 = vmatmul.bf16.gmra.mxu0 %v1820
  %v1840 = vpop.f32.mrf.mxu0
  %v1841 = vadd.f32 0.0, %v1840
  %v1842 = vpop.f32.mrf.mxu0
  %v1843 = vadd.f32 0.0, %v1842
  %1844 = vmatmul.bf16.gmra.mxu0 %v1823
  %v1845 = vpop.f32.mrf.mxu0
  %v1846 = vadd.f32 0.0, %v1845
  %v1847 = vpop.f32.mrf.mxu0
  %v1848 = vadd.f32 0.0, %v1847
  %1849 = vmatmul.bf16.gmra.mxu0 %v1826
  %v1850 = vpop.f32.mrf.mxu0
  %v1851 = vadd.f32 0.0, %v1850
  %v1852 = vpop.f32.mrf.mxu0
  %v1853 = vadd.f32 0.0, %v1852
  %1854 = vmatmul.bf16.gmra.mxu0 %v1829
  %v1855 = vpop.f32.mrf.mxu0
  %v1856 = vadd.f32 0.0, %v1855
  %v1857 = vpop.f32.mrf.mxu0
  %v1858 = vadd.f32 0.0, %v1857
  %1859 = vdwg.mxu0
  %v1860 = vadd.f32 %v1776, %v1841
  %v1861 = vadd.f32 %v1777, %v1843
  %v1862 = vadd.f32 %v1778, %v1846
  %v1863 = vadd.f32 %v1779, %v1848
  %v1864 = vadd.f32 %v1780, %v1851
  %v1865 = vadd.f32 %v1781, %v1853
  %v1866 = vadd.f32 %v1782, %v1856
  %v1867 = vadd.f32 %v1783, %v1858
  %v1868 = vld [vmem:[%s7] sm:$0xff]
  %v1869 = vld [vmem:[%s7 + $0x8] sm:$0xff]
  %v1870 = vld [vmem:[%s7 + $0x10] sm:$0xff]
  %v1871 = vld [vmem:[%s7 + $0x18] sm:$0xff]
  %v1872 = vld [vmem:[%s7 + $0x20] sm:$0xff]
  %v1873 = vld [vmem:[%s7 + $0x28] sm:$0xff]
  %v1874 = vld [vmem:[%s7 + $0x30] sm:$0xff]
  %v1875 = vld [vmem:[%s7 + $0x38] sm:$0xff]
  %1877 = vset.pattern.permute.xlu0 0
  %1878 = vperm.xlu0 %1877, %v1868
  %v1879 = vpop.permute.xlu0 %1878
  %1882 = vset.pattern.permute.xlu0 0
  %1883 = vperm.xlu0 %1882, %v1869
  %v1884 = vpop.permute.xlu0 %1883
  %1887 = vset.pattern.permute.xlu0 0
  %1888 = vperm.xlu0 %1887, %v1870
  %v1889 = vpop.permute.xlu0 %1888
  %1892 = vset.pattern.permute.xlu0 0
  %1893 = vperm.xlu0 %1892, %v1871
  %v1894 = vpop.permute.xlu0 %1893
  %1897 = vset.pattern.permute.xlu0 0
  %1898 = vperm.xlu0 %1897, %v1872
  %v1899 = vpop.permute.xlu0 %1898
  %1902 = vset.pattern.permute.xlu0 0
  %1903 = vperm.xlu0 %1902, %v1873
  %v1904 = vpop.permute.xlu0 %1903
  %1907 = vset.pattern.permute.xlu0 0
  %1908 = vperm.xlu0 %1907, %v1874
  %v1909 = vpop.permute.xlu0 %1908
  %1912 = vset.pattern.permute.xlu0 0
  %1913 = vperm.xlu0 %1912, %v1875
  %v1914 = vpop.permute.xlu0 %1913
  %v1916 = vadd.f32 %v1860, %v1879
  %v1917 = vadd.f32 %v1861, %v1884
  %v1918 = vadd.f32 %v1862, %v1889
  %v1919 = vadd.f32 %v1863, %v1894
  %v1920 = vadd.f32 %v1864, %v1899
  %v1921 = vadd.f32 %v1865, %v1904
  %v1922 = vadd.f32 %v1866, %v1909
  %v1923 = vadd.f32 %v1867, %v1914
  %v1924 = vmax.f32 %v1916, 0.0
  %v1925 = vmax.f32 %v1917, 0.0
  %v1926 = vmax.f32 %v1918, 0.0
  %v1927 = vmax.f32 %v1919, 0.0
  %v1928 = vmax.f32 %v1920, 0.0
  %v1929 = vmax.f32 %v1921, 0.0
  %v1930 = vmax.f32 %v1922, 0.0
  %v1931 = vmax.f32 %v1923, 0.0
  %v1932 = vld [vmem:[%s10] sm:$0x1]
  %v1933 = vld [vmem:[%s8] sm:$0xff]
  %v1934 = vld [vmem:[%s8 + $0x8] sm:$0xff]
  %v1935 = vld [vmem:[%s9] sm:$0xff]
  %v1936 = vld [vmem:[%s9 + $0x8] sm:$0xff]
  %v1938 = vperm.slane %v1932, 0
  %v1940 = vmul.f32 %v1924, %v1938
  %v1941 = vmul.f32 %v1925, %v1938
  %v1942 = vmul.f32 %v1926, %v1938
  %v1943 = vmul.f32 %v1927, %v1938
  %v1944 = vmul.f32 %v1928, %v1938
  %v1945 = vmul.f32 %v1929, %v1938
  %v1946 = vmul.f32 %v1930, %v1938
  %v1947 = vmul.f32 %v1931, %v1938
  %vm1948 = vcmask 588800
  %v1949 = vsel %vm1948, %v1940, 0.0
  %1950 = vadd.xlane.f32.xlu0 %v1949
  %v1951 = vpop.xlane.xlu0 %1950
  %v1952 = vsel %vm1948, %v1941, 0.0
  %1953 = vadd.xlane.f32.xlu0 %v1952
  %v1954 = vpop.xlane.xlu0 %1953
  %v1955 = vsel %vm1948, %v1942, 0.0
  %1956 = vadd.xlane.f32.xlu0 %v1955
  %v1957 = vpop.xlane.xlu0 %1956
  %v1958 = vsel %vm1948, %v1943, 0.0
  %1959 = vadd.xlane.f32.xlu0 %v1958
  %v1960 = vpop.xlane.xlu0 %1959
  %v1961 = vsel %vm1948, %v1944, 0.0
  %1962 = vadd.xlane.f32.xlu0 %v1961
  %v1963 = vpop.xlane.xlu0 %1962
  %v1964 = vsel %vm1948, %v1945, 0.0
  %1965 = vadd.xlane.f32.xlu0 %v1964
  %v1966 = vpop.xlane.xlu0 %1965
  %v1967 = vsel %vm1948, %v1946, 0.0
  %1968 = vadd.xlane.f32.xlu0 %v1967
  %v1969 = vpop.xlane.xlu0 %1968
  %v1970 = vsel %vm1948, %v1947, 0.0
  %1971 = vadd.xlane.f32.xlu0 %v1970
  %v1972 = vpop.xlane.xlu0 %1971
  %v1973 = vmul.f32 %v1924, %v1924
  %v1974 = vmul.f32 %v1925, %v1925
  %v1975 = vmul.f32 %v1926, %v1926
  %v1976 = vmul.f32 %v1927, %v1927
  %v1977 = vmul.f32 %v1928, %v1928
  %v1978 = vmul.f32 %v1929, %v1929
  %v1979 = vmul.f32 %v1930, %v1930
  %v1980 = vmul.f32 %v1931, %v1931
  %v1981 = vmul.f32 %v1973, %v1938
  %v1982 = vmul.f32 %v1974, %v1938
  %v1983 = vmul.f32 %v1975, %v1938
  %v1984 = vmul.f32 %v1976, %v1938
  %v1985 = vmul.f32 %v1977, %v1938
  %v1986 = vmul.f32 %v1978, %v1938
  %v1987 = vmul.f32 %v1979, %v1938
  %v1988 = vmul.f32 %v1980, %v1938
  %v1989 = vsel %vm1948, %v1981, 0.0
  %1990 = vadd.xlane.f32.xlu0 %v1989
  %v1991 = vpop.xlane.xlu0 %1990
  %v1992 = vsel %vm1948, %v1982, 0.0
  %1993 = vadd.xlane.f32.xlu0 %v1992
  %v1994 = vpop.xlane.xlu0 %1993
  %v1995 = vsel %vm1948, %v1983, 0.0
  %1996 = vadd.xlane.f32.xlu0 %v1995
  %v1997 = vpop.xlane.xlu0 %1996
  %v1998 = vsel %vm1948, %v1984, 0.0
  %1999 = vadd.xlane.f32.xlu0 %v1998
  %v2000 = vpop.xlane.xlu0 %1999
  %v2001 = vsel %vm1948, %v1985, 0.0
  %2002 = vadd.xlane.f32.xlu0 %v2001
  %v2003 = vpop.xlane.xlu0 %2002
  %v2004 = vsel %vm1948, %v1986, 0.0
  %2005 = vadd.xlane.f32.xlu0 %v2004
  %v2006 = vpop.xlane.xlu0 %2005
  %v2007 = vsel %vm1948, %v1987, 0.0
  %2008 = vadd.xlane.f32.xlu0 %v2007
  %v2009 = vpop.xlane.xlu0 %2008
  %v2010 = vsel %vm1948, %v1988, 0.0
  %2011 = vadd.xlane.f32.xlu0 %v2010
  %v2012 = vpop.xlane.xlu0 %2011
  %v2013 = vadd.f32 %v1951, %v1957
  %v2014 = vadd.f32 %v1954, %v1960
  %v2015 = vadd.f32 %v2013, %v1963
  %v2016 = vadd.f32 %v2014, %v1966
  %v2017 = vadd.f32 %v2015, %v1969
  %v2018 = vadd.f32 %v2016, %v1972
  %v2019 = vadd.f32 %v1991, %v1997
  %v2020 = vadd.f32 %v1994, %v2000
  %v2021 = vadd.f32 %v2019, %v2003
  %v2022 = vadd.f32 %v2020, %v2006
  %v2023 = vadd.f32 %v2021, %v2009
  %v2024 = vadd.f32 %v2022, %v2012
  %v2025 = vmul.f32 %v2017, 0.0078125
  %v2026 = vmul.f32 %v2018, 0.0078125
  %v2027 = vmul.f32 %v2023, 0.0078125
  %v2028 = vmul.f32 %v2024, 0.0078125
  %v2029 = vmul.f32 %v2025, %v2025
  %v2030 = vmul.f32 %v2026, %v2026
  %v2031 = vsub.f32 %v2027, %v2029
  %v2032 = vsub.f32 %v2028, %v2030
  %v2033 = vadd.f32 %v2031, 1e-05
  %v2034 = vadd.f32 %v2032, 1e-05
  %v2035 = vrsqrt.pop %v2033
  %v2036 = vmul.f32 %v2035, %v2033
  %v2037 = vmul.f32 %v2036, %v2035
  %v2038 = vmul.f32 0.5, %v2037
  %v2039 = vsub.f32 1.5, %v2038
  %v2040 = vmul.f32 %v2035, %v2039
  %vm2041 = vweird.f32 %v2033
  %vm2042 = vweird.f32 %v2035
  %vm2043 = vmor %vm2041, %vm2042
  %v2044 = vsel %vm2043, %v2035, %v2040
  %v2045 = vrsqrt.pop %v2034
  %v2046 = vmul.f32 %v2045, %v2034
  %v2047 = vmul.f32 %v2046, %v2045
  %v2048 = vmul.f32 0.5, %v2047
  %v2049 = vsub.f32 1.5, %v2048
  %v2050 = vmul.f32 %v2045, %v2049
  %vm2051 = vweird.f32 %v2034
  %vm2052 = vweird.f32 %v2045
  %vm2053 = vmor %vm2051, %vm2052
  %v2054 = vsel %vm2053, %v2045, %v2050
  %v2055 = vmul.f32 %v1933, %v2044
  %v2056 = vmul.f32 %v1934, %v2054
  %v2057 = vmul.f32 %v2025, %v2055
  %v2058 = vmul.f32 %v2026, %v2056
  %v2059 = vsub.f32 %v1935, %v2057
  %v2060 = vsub.f32 %v1936, %v2058
  %2062 = vset.pattern.permute.xlu0 0
  %2063 = vperm.xlu0 %2062, %v2055
  %v2064 = vpop.permute.xlu0 %2063
  %2067 = vset.pattern.permute.xlu0 0
  %2068 = vperm.xlu0 %2067, %v2056
  %v2069 = vpop.permute.xlu0 %2068
  %v2071 = vmul.f32 %v1924, %v2064
  %v2072 = vmul.f32 %v1925, %v2069
  %2074 = vset.pattern.permute.xlu0 0
  %2075 = vperm.xlu0 %2074, %v2059
  %v2076 = vpop.permute.xlu0 %2075
  %2079 = vset.pattern.permute.xlu0 0
  %2080 = vperm.xlu0 %2079, %v2060
  %v2081 = vpop.permute.xlu0 %2080
  %v2083 = vadd.f32 %v2071, %v2076
  %v2084 = vadd.f32 %v2072, %v2081
  %v2085 = vpack.c.bf16 %v2084, %v2083
  %v2086 = vld [vmem:[%s11] sm:$0xff]
  %v2087 = vld [vmem:[%s11 + $0x8] sm:$0xff]
  %v2088 = vld [vmem:[%s11 + $0x10] sm:$0xff]
  %v2089 = vld [vmem:[%s11 + $0x18] sm:$0xff]
  %v2090 = vld [vmem:[%s11 + $0x20] sm:$0xff]
  %v2091 = vld [vmem:[%s11 + $0x28] sm:$0xff]
  %v2092 = vld [vmem:[%s11 + $0x30] sm:$0xff]
  %v2093 = vld [vmem:[%s11 + $0x38] sm:$0xff]
  %v2094 = vld [vmem:[%s11 + $0x40] sm:$0xff]
  %v2095 = vmul.f32 %v1926, %v2064
  %v2096 = vmul.f32 %v1927, %v2069
  %v2097 = vadd.f32 %v2095, %v2076
  %v2098 = vadd.f32 %v2096, %v2081
  %v2099 = vpack.c.bf16 %v2098, %v2097
  %s2100 = scalar_lea.vmem %s11, 72
  %v2101 = vld [vmem:[%s2100] sm:$0xff]
  %v2102 = vld [vmem:[%s2100 + $0x8] sm:$0xff]
  %v2103 = vld [vmem:[%s2100 + $0x10] sm:$0xff]
  %v2104 = vld [vmem:[%s2100 + $0x18] sm:$0xff]
  %v2105 = vld [vmem:[%s2100 + $0x20] sm:$0xff]
  %v2106 = vld [vmem:[%s2100 + $0x28] sm:$0xff]
  %v2107 = vld [vmem:[%s2100 + $0x30] sm:$0xff]
  %v2108 = vld [vmem:[%s2100 + $0x38] sm:$0xff]
  %v2109 = vld [vmem:[%s2100 + $0x40] sm:$0xff]
  %v2119 = vunpack.c.l.b16 %v2101
  %v2120 = vunpack.c.h.b16 %v2101
  %v2121 = vunpack.c.l.b16 %v2102
  %v2122 = vunpack.c.h.b16 %v2102
  %v2123 = vunpack.c.l.b16 %v2103
  %v2124 = vunpack.c.h.b16 %v2103
  %v2125 = vunpack.c.l.b16 %v2104
  %v2126 = vunpack.c.h.b16 %v2104
  %v2127 = vunpack.c.l.b16 %v2105
  %v2128 = vunpack.c.h.b16 %v2105
  %v2129 = vunpack.c.l.b16 %v2106
  %v2130 = vunpack.c.h.b16 %v2106
  %v2131 = vunpack.c.l.b16 %v2107
  %v2132 = vunpack.c.h.b16 %v2107
  %v2133 = vunpack.c.l.b16 %v2108
  %v2134 = vunpack.c.h.b16 %v2108
  %v2135 = vunpack.c.l.b16 %v2109
  %v2136 = vunpack.c.h.b16 %v2109
  %v2137 = vpack.c.b16 %v2121, %v2119
  %v2138 = vpack.c.b16 %v2122, %v2120
  %v2139 = vpack.c.b16 %v2125, %v2123
  %v2140 = vpack.c.b16 %v2126, %v2124
  %v2141 = vpack.c.b16 %v2129, %v2127
  %v2142 = vpack.c.b16 %v2130, %v2128
  %v2143 = vpack.c.b16 %v2133, %v2131
  %v2144 = vpack.c.b16 %v2134, %v2132
  %v2145 = vpack.c.b16 %v2135, %v2135
  %v2146 = vpack.c.b16 %v2136, %v2136
  %v2156 = vsel %vm1948, %v2099, 0
  %vm2158 = vcmask 1043456
  %v2160 = vsel %vm2158, %v2145, 0
  %v2163 = vsel %vm2158, %v2146, 0
  %2165 = vmatpush.bf16.msra.mxu0 0
  %2166 = vmatpush.bf16.msra.mxu0 0
  %2167 = vmatpush.bf16.msra.mxu0 0
  %2168 = vmatpush.bf16.msra.mxu0 %v2160
  %2169 = vmatpush.bf16.msra.mxu0 %v2143
  %2170 = vmatpush.bf16.msra.mxu0 %v2141
  %2171 = vmatpush.bf16.msra.mxu0 %v2139
  %2172 = vmatpush.bf16.msra.mxu0 %v2137
  %2173 = vmatmul.bf16.gmra.mxu0 %v2156
  %v2174 = vpop.f32.mrf.mxu0
  %v2175 = vadd.f32 0.0, %v2174
  %v2176 = vpop.f32.mrf.mxu0
  %v2177 = vadd.f32 0.0, %v2176
  %2178 = vdwg.mxu0
  %2179 = vmatpush.bf16.msra.mxu0 0
  %2180 = vmatpush.bf16.msra.mxu0 0
  %2181 = vmatpush.bf16.msra.mxu0 0
  %2182 = vmatpush.bf16.msra.mxu0 %v2163
  %2183 = vmatpush.bf16.msra.mxu0 %v2144
  %2184 = vmatpush.bf16.msra.mxu0 %v2142
  %2185 = vmatpush.bf16.msra.mxu0 %v2140
  %2186 = vmatpush.bf16.msra.mxu0 %v2138
  %2187 = vmatmul.bf16.gmra.mxu0 %v2156
  %v2188 = vpop.f32.mrf.mxu0
  %v2189 = vadd.f32 0.0, %v2188
  %v2190 = vpop.f32.mrf.mxu0
  %v2191 = vadd.f32 0.0, %v2190
  %2192 = vdwg.mxu0
  %v2202 = vunpack.c.l.b16 %v2086
  %v2203 = vunpack.c.h.b16 %v2086
  %v2204 = vunpack.c.l.b16 %v2087
  %v2205 = vunpack.c.h.b16 %v2087
  %v2206 = vunpack.c.l.b16 %v2088
  %v2207 = vunpack.c.h.b16 %v2088
  %v2208 = vunpack.c.l.b16 %v2089
  %v2209 = vunpack.c.h.b16 %v2089
  %v2210 = vunpack.c.l.b16 %v2090
  %v2211 = vunpack.c.h.b16 %v2090
  %v2212 = vunpack.c.l.b16 %v2091
  %v2213 = vunpack.c.h.b16 %v2091
  %v2214 = vunpack.c.l.b16 %v2092
  %v2215 = vunpack.c.h.b16 %v2092
  %v2216 = vunpack.c.l.b16 %v2093
  %v2217 = vunpack.c.h.b16 %v2093
  %v2218 = vunpack.c.l.b16 %v2094
  %v2219 = vunpack.c.h.b16 %v2094
  %v2220 = vpack.c.b16 %v2204, %v2202
  %v2221 = vpack.c.b16 %v2205, %v2203
  %v2222 = vpack.c.b16 %v2208, %v2206
  %v2223 = vpack.c.b16 %v2209, %v2207
  %v2224 = vpack.c.b16 %v2212, %v2210
  %v2225 = vpack.c.b16 %v2213, %v2211
  %v2226 = vpack.c.b16 %v2216, %v2214
  %v2227 = vpack.c.b16 %v2217, %v2215
  %v2228 = vpack.c.b16 %v2218, %v2218
  %v2229 = vpack.c.b16 %v2219, %v2219
  %v2239 = vsel %vm1948, %v2085, 0
  %v2242 = vsel %vm2158, %v2228, 0
  %v2245 = vsel %vm2158, %v2229, 0
  %2247 = vmatpush.bf16.msra.mxu0 0
  %2248 = vmatpush.bf16.msra.mxu0 0
  %2249 = vmatpush.bf16.msra.mxu0 0
  %2250 = vmatpush.bf16.msra.mxu0 %v2242
  %2251 = vmatpush.bf16.msra.mxu0 %v2226
  %2252 = vmatpush.bf16.msra.mxu0 %v2224
  %2253 = vmatpush.bf16.msra.mxu0 %v2222
  %2254 = vmatpush.bf16.msra.mxu0 %v2220
  %2255 = vmatmul.bf16.gmra.mxu0 %v2239
  %v2256 = vpop.f32.mrf.mxu0
  %v2257 = vadd.f32 %v2175, %v2256
  %v2258 = vpop.f32.mrf.mxu0
  %v2259 = vadd.f32 %v2177, %v2258
  %2260 = vdwg.mxu0
  %2261 = vmatpush.bf16.msra.mxu0 0
  %2262 = vmatpush.bf16.msra.mxu0 0
  %2263 = vmatpush.bf16.msra.mxu0 0
  %2264 = vmatpush.bf16.msra.mxu0 %v2245
  %2265 = vmatpush.bf16.msra.mxu0 %v2227
  %2266 = vmatpush.bf16.msra.mxu0 %v2225
  %2267 = vmatpush.bf16.msra.mxu0 %v2223
  %2268 = vmatpush.bf16.msra.mxu0 %v2221
  %2269 = vmatmul.bf16.gmra.mxu0 %v2239
  %v2270 = vpop.f32.mrf.mxu0
  %v2271 = vadd.f32 %v2189, %v2270
  %v2272 = vpop.f32.mrf.mxu0
  %v2273 = vadd.f32 %v2191, %v2272
  %2274 = vdwg.mxu0
  %v2275 = vmul.f32 %v1928, %v2064
  %v2276 = vmul.f32 %v1929, %v2069
  %v2277 = vadd.f32 %v2275, %v2076
  %v2278 = vadd.f32 %v2276, %v2081
  %v2279 = vpack.c.bf16 %v2278, %v2277
  %s2280 = scalar_lea.vmem %s11, 144
  %v2281 = vld [vmem:[%s2280] sm:$0xff]
  %v2282 = vld [vmem:[%s2280 + $0x8] sm:$0xff]
  %v2283 = vld [vmem:[%s2280 + $0x10] sm:$0xff]
  %v2284 = vld [vmem:[%s2280 + $0x18] sm:$0xff]
  %v2285 = vld [vmem:[%s2280 + $0x20] sm:$0xff]
  %v2286 = vld [vmem:[%s2280 + $0x28] sm:$0xff]
  %v2287 = vld [vmem:[%s2280 + $0x30] sm:$0xff]
  %v2288 = vld [vmem:[%s2280 + $0x38] sm:$0xff]
  %v2289 = vld [vmem:[%s2280 + $0x40] sm:$0xff]
  %v2299 = vunpack.c.l.b16 %v2281
  %v2300 = vunpack.c.h.b16 %v2281
  %v2301 = vunpack.c.l.b16 %v2282
  %v2302 = vunpack.c.h.b16 %v2282
  %v2303 = vunpack.c.l.b16 %v2283
  %v2304 = vunpack.c.h.b16 %v2283
  %v2305 = vunpack.c.l.b16 %v2284
  %v2306 = vunpack.c.h.b16 %v2284
  %v2307 = vunpack.c.l.b16 %v2285
  %v2308 = vunpack.c.h.b16 %v2285
  %v2309 = vunpack.c.l.b16 %v2286
  %v2310 = vunpack.c.h.b16 %v2286
  %v2311 = vunpack.c.l.b16 %v2287
  %v2312 = vunpack.c.h.b16 %v2287
  %v2313 = vunpack.c.l.b16 %v2288
  %v2314 = vunpack.c.h.b16 %v2288
  %v2315 = vunpack.c.l.b16 %v2289
  %v2316 = vunpack.c.h.b16 %v2289
  %v2317 = vpack.c.b16 %v2301, %v2299
  %v2318 = vpack.c.b16 %v2302, %v2300
  %v2319 = vpack.c.b16 %v2305, %v2303
  %v2320 = vpack.c.b16 %v2306, %v2304
  %v2321 = vpack.c.b16 %v2309, %v2307
  %v2322 = vpack.c.b16 %v2310, %v2308
  %v2323 = vpack.c.b16 %v2313, %v2311
  %v2324 = vpack.c.b16 %v2314, %v2312
  %v2325 = vpack.c.b16 %v2315, %v2315
  %v2326 = vpack.c.b16 %v2316, %v2316
  %v2336 = vsel %vm1948, %v2279, 0
  %v2339 = vsel %vm2158, %v2325, 0
  %v2342 = vsel %vm2158, %v2326, 0
  %2344 = vmatpush.bf16.msra.mxu0 0
  %2345 = vmatpush.bf16.msra.mxu0 0
  %2346 = vmatpush.bf16.msra.mxu0 0
  %2347 = vmatpush.bf16.msra.mxu0 %v2339
  %2348 = vmatpush.bf16.msra.mxu0 %v2323
  %2349 = vmatpush.bf16.msra.mxu0 %v2321
  %2350 = vmatpush.bf16.msra.mxu0 %v2319
  %2351 = vmatpush.bf16.msra.mxu0 %v2317
  %2352 = vmatmul.bf16.gmra.mxu0 %v2336
  %v2353 = vpop.f32.mrf.mxu0
  %v2354 = vadd.f32 0.0, %v2353
  %v2355 = vpop.f32.mrf.mxu0
  %v2356 = vadd.f32 0.0, %v2355
  %2357 = vdwg.mxu0
  %2358 = vmatpush.bf16.msra.mxu0 0
  %2359 = vmatpush.bf16.msra.mxu0 0
  %2360 = vmatpush.bf16.msra.mxu0 0
  %2361 = vmatpush.bf16.msra.mxu0 %v2342
  %2362 = vmatpush.bf16.msra.mxu0 %v2324
  %2363 = vmatpush.bf16.msra.mxu0 %v2322
  %2364 = vmatpush.bf16.msra.mxu0 %v2320
  %2365 = vmatpush.bf16.msra.mxu0 %v2318
  %2366 = vmatmul.bf16.gmra.mxu0 %v2336
  %v2367 = vpop.f32.mrf.mxu0
  %v2368 = vadd.f32 0.0, %v2367
  %v2369 = vpop.f32.mrf.mxu0
  %v2370 = vadd.f32 0.0, %v2369
  %2371 = vdwg.mxu0
  %v2372 = vadd.f32 %v2257, %v2354
  %v2373 = vadd.f32 %v2271, %v2368
  %v2374 = vadd.f32 %v2259, %v2356
  %v2375 = vadd.f32 %v2273, %v2370
  %v2376 = vmul.f32 %v1930, %v2064
  %v2377 = vmul.f32 %v1931, %v2069
  %v2378 = vadd.f32 %v2376, %v2076
  %v2379 = vadd.f32 %v2377, %v2081
  %v2380 = vpack.c.bf16 %v2379, %v2378
  %s2381 = scalar_lea.vmem %s11, 216
  %v2382 = vld [vmem:[%s2381] sm:$0xff]
  %v2383 = vld [vmem:[%s2381 + $0x8] sm:$0xff]
  %v2384 = vld [vmem:[%s2381 + $0x10] sm:$0xff]
  %v2385 = vld [vmem:[%s2381 + $0x18] sm:$0xff]
  %v2386 = vld [vmem:[%s2381 + $0x20] sm:$0xff]
  %v2387 = vld [vmem:[%s2381 + $0x28] sm:$0xff]
  %v2388 = vld [vmem:[%s2381 + $0x30] sm:$0xff]
  %v2389 = vld [vmem:[%s2381 + $0x38] sm:$0xff]
  %v2390 = vld [vmem:[%s2381 + $0x40] sm:$0xff]
  %v2400 = vunpack.c.l.b16 %v2382
  %v2401 = vunpack.c.h.b16 %v2382
  %v2402 = vunpack.c.l.b16 %v2383
  %v2403 = vunpack.c.h.b16 %v2383
  %v2404 = vunpack.c.l.b16 %v2384
  %v2405 = vunpack.c.h.b16 %v2384
  %v2406 = vunpack.c.l.b16 %v2385
  %v2407 = vunpack.c.h.b16 %v2385
  %v2408 = vunpack.c.l.b16 %v2386
  %v2409 = vunpack.c.h.b16 %v2386
  %v2410 = vunpack.c.l.b16 %v2387
  %v2411 = vunpack.c.h.b16 %v2387
  %v2412 = vunpack.c.l.b16 %v2388
  %v2413 = vunpack.c.h.b16 %v2388
  %v2414 = vunpack.c.l.b16 %v2389
  %v2415 = vunpack.c.h.b16 %v2389
  %v2416 = vunpack.c.l.b16 %v2390
  %v2417 = vunpack.c.h.b16 %v2390
  %v2418 = vpack.c.b16 %v2402, %v2400
  %v2419 = vpack.c.b16 %v2403, %v2401
  %v2420 = vpack.c.b16 %v2406, %v2404
  %v2421 = vpack.c.b16 %v2407, %v2405
  %v2422 = vpack.c.b16 %v2410, %v2408
  %v2423 = vpack.c.b16 %v2411, %v2409
  %v2424 = vpack.c.b16 %v2414, %v2412
  %v2425 = vpack.c.b16 %v2415, %v2413
  %v2426 = vpack.c.b16 %v2416, %v2416
  %v2427 = vpack.c.b16 %v2417, %v2417
  %v2437 = vsel %vm1948, %v2380, 0
  %v2440 = vsel %vm2158, %v2426, 0
  %v2443 = vsel %vm2158, %v2427, 0
  %2445 = vmatpush.bf16.msra.mxu0 0
  %2446 = vmatpush.bf16.msra.mxu0 0
  %2447 = vmatpush.bf16.msra.mxu0 0
  %2448 = vmatpush.bf16.msra.mxu0 %v2440
  %2449 = vmatpush.bf16.msra.mxu0 %v2424
  %2450 = vmatpush.bf16.msra.mxu0 %v2422
  %2451 = vmatpush.bf16.msra.mxu0 %v2420
  %2452 = vmatpush.bf16.msra.mxu0 %v2418
  %2453 = vmatmul.bf16.gmra.mxu0 %v2437
  %v2454 = vpop.f32.mrf.mxu0
  %v2455 = vadd.f32 0.0, %v2454
  %v2456 = vpop.f32.mrf.mxu0
  %v2457 = vadd.f32 0.0, %v2456
  %2458 = vdwg.mxu0
  %2459 = vmatpush.bf16.msra.mxu0 0
  %2460 = vmatpush.bf16.msra.mxu0 0
  %2461 = vmatpush.bf16.msra.mxu0 0
  %2462 = vmatpush.bf16.msra.mxu0 %v2443
  %2463 = vmatpush.bf16.msra.mxu0 %v2425
  %2464 = vmatpush.bf16.msra.mxu0 %v2423
  %2465 = vmatpush.bf16.msra.mxu0 %v2421
  %2466 = vmatpush.bf16.msra.mxu0 %v2419
  %2467 = vmatmul.bf16.gmra.mxu0 %v2437
  %v2468 = vpop.f32.mrf.mxu0
  %v2469 = vadd.f32 0.0, %v2468
  %v2470 = vpop.f32.mrf.mxu0
  %v2471 = vadd.f32 0.0, %v2470
  %2472 = vdwg.mxu0
  %v2473 = vadd.f32 %v2372, %v2455
  %v2474 = vadd.f32 %v2373, %v2469
  %v2475 = vadd.f32 %v2374, %v2457
  %v2476 = vadd.f32 %v2375, %v2471
  %vm2477 = vcmask 441348
  %vm2478 = vmor %vm2477, %vm2158
  %2479 = vst.msk [vmem:[#allocation3] sm:$0xff] %vm2478, 0
  %2480 = vst.msk [vmem:[#allocation3 + $0x8] sm:$0xff] %vm2478, 0
  %v2481 = vpack.c.bf16 %v2474, %v2473
  %v2482 = vpack.c.bf16 %v2476, %v2475
  %2485 = vrot.lane.b32.xlu0 %v2481, 10
  %v2486 = vpop.permute.xlu0 %2485
  %2487 = vrot.lane.b32.xlu0 %v2482, 10
  %v2488 = vpop.permute.xlu0 %2487
  %v2489 = vrot.slane %v2486, 4
  %v2490 = vrot.slane %v2488, 4
  %vm2491 = vcmask 80896
  %v2492 = vsel %vm2491, %v2489, %v2486
  %v2493 = vsel %vm2491, %v2490, %v2488
  %vm2496 = vcmask 1043536
  %vm2497 = vcmask 359428
  %vm2498 = vmor %vm2497, %vm2496
  %2499 = vst.msk [vmem:[#allocation3] sm:$0xff] %vm2498, %v2492
  %2500 = vst.msk [vmem:[#allocation3 + $0x8] sm:$0xff] %vm2498, %v2493
  %v2501 = vld [vmem:[#allocation3] sm:$0xff]
  %v2502 = vld [vmem:[#allocation3 + $0x8] sm:$0xff]
  %v2503 = vld [vmem:[%s12] sm:$0xf]
  %v2504 = vld [vmem:[%s12 + $0x4] sm:$0xf]
  %v2505 = vld [vmem:[%s12 + $0x8] sm:$0xf]
  %v2506 = vld [vmem:[%s12 + $0xc] sm:$0xf]
  %s2507 = scalar_lea.vmem %s12, 16
  %v2508 = vld [vmem:[%s2507] sm:$0xf]
  %v2509 = vld [vmem:[%s2507 + $0x4] sm:$0xf]
  %v2510 = vld [vmem:[%s2507 + $0x8] sm:$0xf]
  %v2511 = vld [vmem:[%s2507 + $0xc] sm:$0xf]
  %v2516 = vunpack.c.l.b16 %v2508
  %v2517 = vunpack.c.l.b16 %v2509
  %v2518 = vunpack.c.l.b16 %v2510
  %v2519 = vunpack.c.l.b16 %v2511
  %v2520 = vpack.c.b16 %v2517, %v2516
  %v2521 = vpack.c.b16 %v2519, %v2518
  %v2524 = vunpack.c.l.b16 %v2501
  %v2525 = vunpack.c.h.b16 %v2501
  %v2526 = vunpack.c.l.b16 %v2502
  %v2527 = vunpack.c.h.b16 %v2502
  %v2528 = vpack.c.b16 %v2526, %v2524
  %v2529 = vpack.c.b16 %v2527, %v2525
  %2530 = vrot.lane.b32.xlu0 %v2528, 127
  %v2531 = vpop.permute.xlu0 %2530
  %2532 = vrot.lane.b32.xlu0 %v2529, 127
  %v2533 = vpop.permute.xlu0 %2532
  %vm2534 = vcmask 1039360
  %v2535 = vsel %vm2534, %v2531, %v2533
  %vm2538 = vcmask 130048
  %v2540 = vsel %vm2538, %v2520, 0
  %v2543 = vsel %vm2538, %v2521, 0
  %2545 = vmatpush.bf16.msra.mxu0 0
  %2546 = vmatpush.bf16.msra.mxu0 0
  %2547 = vmatpush.bf16.msra.mxu0 0
  %2548 = vmatpush.bf16.msra.mxu0 0
  %2549 = vmatpush.bf16.msra.mxu0 0
  %2550 = vmatpush.bf16.msra.mxu0 0
  %2551 = vmatpush.bf16.msra.mxu0 0
  %2552 = vmatpush.bf16.msra.mxu0 %v2535
  %2553 = vmatmul.bf16.gmra.mxu0 %v2540
  %v2554 = vpop.f32.mrf.mxu0
  %v2555 = vadd.f32 0.0, %v2554
  %v2556 = vpop.f32.mrf.mxu0
  %v2557 = vadd.f32 0.0, %v2556
  %2558 = vmatmul.bf16.gmra.mxu0 %v2543
  %v2559 = vpop.f32.mrf.mxu0
  %v2560 = vadd.f32 0.0, %v2559
  %v2561 = vpop.f32.mrf.mxu0
  %v2562 = vadd.f32 0.0, %v2561
  %2563 = vdwg.mxu0
  %2564 = vmatpush.bf16.msra.mxu0 0
  %2565 = vmatpush.bf16.msra.mxu0 0
  %2566 = vmatpush.bf16.msra.mxu0 0
  %2567 = vmatpush.bf16.msra.mxu0 0
  %2568 = vmatpush.bf16.msra.mxu0 0
  %2569 = vmatpush.bf16.msra.mxu0 0
  %2570 = vmatpush.bf16.msra.mxu0 0
  %2571 = vmatpush.bf16.msra.mxu0 %v2533
  %2572 = vmatmul.bf16.gmra.mxu0 %v2540
  %v2573 = vpop.f32.mrf.mxu0
  %v2574 = vadd.f32 0.0, %v2573
  %v2575 = vpop.f32.mrf.mxu0
  %v2576 = vadd.f32 0.0, %v2575
  %2577 = vmatmul.bf16.gmra.mxu0 %v2543
  %v2578 = vpop.f32.mrf.mxu0
  %v2579 = vadd.f32 0.0, %v2578
  %v2580 = vpop.f32.mrf.mxu0
  %v2581 = vadd.f32 0.0, %v2580
  %2582 = vdwg.mxu0
  %v2587 = vunpack.c.l.b16 %v2503
  %v2588 = vunpack.c.l.b16 %v2504
  %v2589 = vunpack.c.l.b16 %v2505
  %v2590 = vunpack.c.l.b16 %v2506
  %v2591 = vpack.c.b16 %v2588, %v2587
  %v2592 = vpack.c.b16 %v2590, %v2589
  %v2596 = vsel %vm2538, %v2591, 0
  %v2599 = vsel %vm2538, %v2592, 0
  %2601 = vmatpush.bf16.msra.mxu0 0
  %2602 = vmatpush.bf16.msra.mxu0 0
  %2603 = vmatpush.bf16.msra.mxu0 0
  %2604 = vmatpush.bf16.msra.mxu0 0
  %2605 = vmatpush.bf16.msra.mxu0 0
  %2606 = vmatpush.bf16.msra.mxu0 0
  %2607 = vmatpush.bf16.msra.mxu0 0
  %2608 = vmatpush.bf16.msra.mxu0 %v2528
  %2609 = vmatmul.bf16.gmra.mxu0 %v2596
  %v2610 = vpop.f32.mrf.mxu0
  %v2611 = vadd.f32 %v2555, %v2610
  %v2612 = vpop.f32.mrf.mxu0
  %v2613 = vadd.f32 %v2557, %v2612
  %2614 = vmatmul.bf16.gmra.mxu0 %v2599
  %v2615 = vpop.f32.mrf.mxu0
  %v2616 = vadd.f32 %v2560, %v2615
  %v2617 = vpop.f32.mrf.mxu0
  %v2618 = vadd.f32 %v2562, %v2617
  %2619 = vdwg.mxu0
  %2620 = vmatpush.bf16.msra.mxu0 0
  %2621 = vmatpush.bf16.msra.mxu0 0
  %2622 = vmatpush.bf16.msra.mxu0 0
  %2623 = vmatpush.bf16.msra.mxu0 0
  %2624 = vmatpush.bf16.msra.mxu0 0
  %2625 = vmatpush.bf16.msra.mxu0 0
  %2626 = vmatpush.bf16.msra.mxu0 0
  %2627 = vmatpush.bf16.msra.mxu0 %v2529
  %2628 = vmatmul.bf16.gmra.mxu0 %v2596
  %v2629 = vpop.f32.mrf.mxu0
  %v2630 = vadd.f32 %v2574, %v2629
  %v2631 = vpop.f32.mrf.mxu0
  %v2632 = vadd.f32 %v2576, %v2631
  %2633 = vmatmul.bf16.gmra.mxu0 %v2599
  %v2634 = vpop.f32.mrf.mxu0
  %v2635 = vadd.f32 %v2579, %v2634
  %v2636 = vpop.f32.mrf.mxu0
  %v2637 = vadd.f32 %v2581, %v2636
  %2638 = vdwg.mxu0
  %s2639 = scalar_lea.vmem %s12, 32
  %v2640 = vld [vmem:[%s2639] sm:$0xf]
  %v2641 = vld [vmem:[%s2639 + $0x4] sm:$0xf]
  %v2642 = vld [vmem:[%s2639 + $0x8] sm:$0xf]
  %v2643 = vld [vmem:[%s2639 + $0xc] sm:$0xf]
  %v2648 = vunpack.c.l.b16 %v2640
  %v2649 = vunpack.c.l.b16 %v2641
  %v2650 = vunpack.c.l.b16 %v2642
  %v2651 = vunpack.c.l.b16 %v2643
  %v2652 = vpack.c.b16 %v2649, %v2648
  %v2653 = vpack.c.b16 %v2651, %v2650
  %2654 = vrot.lane.b32.xlu0 %v2528, 126
  %v2655 = vpop.permute.xlu0 %2654
  %2656 = vrot.lane.b32.xlu0 %v2529, 126
  %v2657 = vpop.permute.xlu0 %2656
  %vm2658 = vcmask 1031168
  %v2659 = vsel %vm2658, %v2655, %v2657
  %v2663 = vsel %vm2538, %v2652, 0
  %v2666 = vsel %vm2538, %v2653, 0
  %2668 = vmatpush.bf16.msra.mxu0 0
  %2669 = vmatpush.bf16.msra.mxu0 0
  %2670 = vmatpush.bf16.msra.mxu0 0
  %2671 = vmatpush.bf16.msra.mxu0 0
  %2672 = vmatpush.bf16.msra.mxu0 0
  %2673 = vmatpush.bf16.msra.mxu0 0
  %2674 = vmatpush.bf16.msra.mxu0 0
  %2675 = vmatpush.bf16.msra.mxu0 %v2659
  %2676 = vmatmul.bf16.gmra.mxu0 %v2663
  %v2677 = vpop.f32.mrf.mxu0
  %v2678 = vadd.f32 0.0, %v2677
  %v2679 = vpop.f32.mrf.mxu0
  %v2680 = vadd.f32 0.0, %v2679
  %2681 = vmatmul.bf16.gmra.mxu0 %v2666
  %v2682 = vpop.f32.mrf.mxu0
  %v2683 = vadd.f32 0.0, %v2682
  %v2684 = vpop.f32.mrf.mxu0
  %v2685 = vadd.f32 0.0, %v2684
  %2686 = vdwg.mxu0
  %2687 = vmatpush.bf16.msra.mxu0 0
  %2688 = vmatpush.bf16.msra.mxu0 0
  %2689 = vmatpush.bf16.msra.mxu0 0
  %2690 = vmatpush.bf16.msra.mxu0 0
  %2691 = vmatpush.bf16.msra.mxu0 0
  %2692 = vmatpush.bf16.msra.mxu0 0
  %2693 = vmatpush.bf16.msra.mxu0 0
  %2694 = vmatpush.bf16.msra.mxu0 %v2657
  %2695 = vmatmul.bf16.gmra.mxu0 %v2663
  %v2696 = vpop.f32.mrf.mxu0
  %v2697 = vadd.f32 0.0, %v2696
  %v2698 = vpop.f32.mrf.mxu0
  %v2699 = vadd.f32 0.0, %v2698
  %2700 = vmatmul.bf16.gmra.mxu0 %v2666
  %v2701 = vpop.f32.mrf.mxu0
  %v2702 = vadd.f32 0.0, %v2701
  %v2703 = vpop.f32.mrf.mxu0
  %v2704 = vadd.f32 0.0, %v2703
  %2705 = vdwg.mxu0
  %v2706 = vadd.f32 %v2611, %v2678
  %v2707 = vadd.f32 %v2630, %v2697
  %v2708 = vadd.f32 %v2613, %v2680
  %v2709 = vadd.f32 %v2632, %v2699
  %v2710 = vadd.f32 %v2616, %v2683
  %v2711 = vadd.f32 %v2635, %v2702
  %v2712 = vadd.f32 %v2618, %v2685
  %v2713 = vadd.f32 %v2637, %v2704
  %s2714 = scalar_lea.vmem %s12, 48
  %v2715 = vld [vmem:[%s2714] sm:$0xf]
  %v2716 = vld [vmem:[%s2714 + $0x4] sm:$0xf]
  %v2717 = vld [vmem:[%s2714 + $0x8] sm:$0xf]
  %v2718 = vld [vmem:[%s2714 + $0xc] sm:$0xf]
  %v2723 = vunpack.c.l.b16 %v2715
  %v2724 = vunpack.c.l.b16 %v2716
  %v2725 = vunpack.c.l.b16 %v2717
  %v2726 = vunpack.c.l.b16 %v2718
  %v2727 = vpack.c.b16 %v2724, %v2723
  %v2728 = vpack.c.b16 %v2726, %v2725
  %2729 = vrot.lane.b32.xlu0 %v2528, 119
  %v2730 = vpop.permute.xlu0 %2729
  %2731 = vrot.lane.b32.xlu0 %v2529, 119
  %v2732 = vpop.permute.xlu0 %2731
  %vm2733 = vcmask 973824
  %v2734 = vsel %vm2733, %v2730, %v2732
  %v2738 = vsel %vm2538, %v2727, 0
  %v2741 = vsel %vm2538, %v2728, 0
  %2743 = vmatpush.bf16.msra.mxu0 0
  %2744 = vmatpush.bf16.msra.mxu0 0
  %2745 = vmatpush.bf16.msra.mxu0 0
  %2746 = vmatpush.bf16.msra.mxu0 0
  %2747 = vmatpush.bf16.msra.mxu0 0
  %2748 = vmatpush.bf16.msra.mxu0 0
  %2749 = vmatpush.bf16.msra.mxu0 0
  %2750 = vmatpush.bf16.msra.mxu0 %v2734
  %2751 = vmatmul.bf16.gmra.mxu0 %v2738
  %v2752 = vpop.f32.mrf.mxu0
  %v2753 = vadd.f32 0.0, %v2752
  %v2754 = vpop.f32.mrf.mxu0
  %v2755 = vadd.f32 0.0, %v2754
  %2756 = vmatmul.bf16.gmra.mxu0 %v2741
  %v2757 = vpop.f32.mrf.mxu0
  %v2758 = vadd.f32 0.0, %v2757
  %v2759 = vpop.f32.mrf.mxu0
  %v2760 = vadd.f32 0.0, %v2759
  %2761 = vdwg.mxu0
  %2762 = vmatpush.bf16.msra.mxu0 0
  %2763 = vmatpush.bf16.msra.mxu0 0
  %2764 = vmatpush.bf16.msra.mxu0 0
  %2765 = vmatpush.bf16.msra.mxu0 0
  %2766 = vmatpush.bf16.msra.mxu0 0
  %2767 = vmatpush.bf16.msra.mxu0 0
  %2768 = vmatpush.bf16.msra.mxu0 0
  %2769 = vmatpush.bf16.msra.mxu0 %v2732
  %2770 = vmatmul.bf16.gmra.mxu0 %v2738
  %v2771 = vpop.f32.mrf.mxu0
  %v2772 = vadd.f32 0.0, %v2771
  %v2773 = vpop.f32.mrf.mxu0
  %v2774 = vadd.f32 0.0, %v2773
  %2775 = vmatmul.bf16.gmra.mxu0 %v2741
  %v2776 = vpop.f32.mrf.mxu0
  %v2777 = vadd.f32 0.0, %v2776
  %v2778 = vpop.f32.mrf.mxu0
  %v2779 = vadd.f32 0.0, %v2778
  %2780 = vdwg.mxu0
  %v2781 = vadd.f32 %v2706, %v2753
  %v2782 = vadd.f32 %v2707, %v2772
  %v2783 = vadd.f32 %v2708, %v2755
  %v2784 = vadd.f32 %v2709, %v2774
  %v2785 = vadd.f32 %v2710, %v2758
  %v2786 = vadd.f32 %v2711, %v2777
  %v2787 = vadd.f32 %v2712, %v2760
  %v2788 = vadd.f32 %v2713, %v2779
  %s2789 = scalar_lea.vmem %s12, 64
  %v2790 = vld [vmem:[%s2789] sm:$0xf]
  %v2791 = vld [vmem:[%s2789 + $0x4] sm:$0xf]
  %v2792 = vld [vmem:[%s2789 + $0x8] sm:$0xf]
  %v2793 = vld [vmem:[%s2789 + $0xc] sm:$0xf]
  %v2798 = vunpack.c.l.b16 %v2790
  %v2799 = vunpack.c.l.b16 %v2791
  %v2800 = vunpack.c.l.b16 %v2792
  %v2801 = vunpack.c.l.b16 %v2793
  %v2802 = vpack.c.b16 %v2799, %v2798
  %v2803 = vpack.c.b16 %v2801, %v2800
  %2804 = vrot.lane.b32.xlu0 %v2528, 118
  %v2805 = vpop.permute.xlu0 %2804
  %2806 = vrot.lane.b32.xlu0 %v2529, 118
  %v2807 = vpop.permute.xlu0 %2806
  %vm2808 = vcmask 965632
  %v2809 = vsel %vm2808, %v2805, %v2807
  %v2813 = vsel %vm2538, %v2802, 0
  %v2816 = vsel %vm2538, %v2803, 0
  %2818 = vmatpush.bf16.msra.mxu0 0
  %2819 = vmatpush.bf16.msra.mxu0 0
  %2820 = vmatpush.bf16.msra.mxu0 0
  %2821 = vmatpush.bf16.msra.mxu0 0
  %2822 = vmatpush.bf16.msra.mxu0 0
  %2823 = vmatpush.bf16.msra.mxu0 0
  %2824 = vmatpush.bf16.msra.mxu0 0
  %2825 = vmatpush.bf16.msra.mxu0 %v2809
  %2826 = vmatmul.bf16.gmra.mxu0 %v2813
  %v2827 = vpop.f32.mrf.mxu0
  %v2828 = vadd.f32 0.0, %v2827
  %v2829 = vpop.f32.mrf.mxu0
  %v2830 = vadd.f32 0.0, %v2829
  %2831 = vmatmul.bf16.gmra.mxu0 %v2816
  %v2832 = vpop.f32.mrf.mxu0
  %v2833 = vadd.f32 0.0, %v2832
  %v2834 = vpop.f32.mrf.mxu0
  %v2835 = vadd.f32 0.0, %v2834
  %2836 = vdwg.mxu0
  %2837 = vmatpush.bf16.msra.mxu0 0
  %2838 = vmatpush.bf16.msra.mxu0 0
  %2839 = vmatpush.bf16.msra.mxu0 0
  %2840 = vmatpush.bf16.msra.mxu0 0
  %2841 = vmatpush.bf16.msra.mxu0 0
  %2842 = vmatpush.bf16.msra.mxu0 0
  %2843 = vmatpush.bf16.msra.mxu0 0
  %2844 = vmatpush.bf16.msra.mxu0 %v2807
  %2845 = vmatmul.bf16.gmra.mxu0 %v2813
  %v2846 = vpop.f32.mrf.mxu0
  %v2847 = vadd.f32 0.0, %v2846
  %v2848 = vpop.f32.mrf.mxu0
  %v2849 = vadd.f32 0.0, %v2848
  %2850 = vmatmul.bf16.gmra.mxu0 %v2816
  %v2851 = vpop.f32.mrf.mxu0
  %v2852 = vadd.f32 0.0, %v2851
  %v2853 = vpop.f32.mrf.mxu0
  %v2854 = vadd.f32 0.0, %v2853
  %2855 = vdwg.mxu0
  %v2856 = vadd.f32 %v2781, %v2828
  %v2857 = vadd.f32 %v2782, %v2847
  %v2858 = vadd.f32 %v2783, %v2830
  %v2859 = vadd.f32 %v2784, %v2849
  %v2860 = vadd.f32 %v2785, %v2833
  %v2861 = vadd.f32 %v2786, %v2852
  %v2862 = vadd.f32 %v2787, %v2835
  %v2863 = vadd.f32 %v2788, %v2854
  %s2864 = scalar_lea.vmem %s12, 80
  %v2865 = vld [vmem:[%s2864] sm:$0xf]
  %v2866 = vld [vmem:[%s2864 + $0x4] sm:$0xf]
  %v2867 = vld [vmem:[%s2864 + $0x8] sm:$0xf]
  %v2868 = vld [vmem:[%s2864 + $0xc] sm:$0xf]
  %v2873 = vunpack.c.l.b16 %v2865
  %v2874 = vunpack.c.l.b16 %v2866
  %v2875 = vunpack.c.l.b16 %v2867
  %v2876 = vunpack.c.l.b16 %v2868
  %v2877 = vpack.c.b16 %v2874, %v2873
  %v2878 = vpack.c.b16 %v2876, %v2875
  %2879 = vrot.lane.b32.xlu0 %v2528, 117
  %v2880 = vpop.permute.xlu0 %2879
  %2881 = vrot.lane.b32.xlu0 %v2529, 117
  %v2882 = vpop.permute.xlu0 %2881
  %vm2883 = vcmask 957440
  %v2884 = vsel %vm2883, %v2880, %v2882
  %v2888 = vsel %vm2538, %v2877, 0
  %v2891 = vsel %vm2538, %v2878, 0
  %2893 = vmatpush.bf16.msra.mxu0 0
  %2894 = vmatpush.bf16.msra.mxu0 0
  %2895 = vmatpush.bf16.msra.mxu0 0
  %2896 = vmatpush.bf16.msra.mxu0 0
  %2897 = vmatpush.bf16.msra.mxu0 0
  %2898 = vmatpush.bf16.msra.mxu0 0
  %2899 = vmatpush.bf16.msra.mxu0 0
  %2900 = vmatpush.bf16.msra.mxu0 %v2884
  %2901 = vmatmul.bf16.gmra.mxu0 %v2888
  %v2902 = vpop.f32.mrf.mxu0
  %v2903 = vadd.f32 0.0, %v2902
  %v2904 = vpop.f32.mrf.mxu0
  %v2905 = vadd.f32 0.0, %v2904
  %2906 = vmatmul.bf16.gmra.mxu0 %v2891
  %v2907 = vpop.f32.mrf.mxu0
  %v2908 = vadd.f32 0.0, %v2907
  %v2909 = vpop.f32.mrf.mxu0
  %v2910 = vadd.f32 0.0, %v2909
  %2911 = vdwg.mxu0
  %2912 = vmatpush.bf16.msra.mxu0 0
  %2913 = vmatpush.bf16.msra.mxu0 0
  %2914 = vmatpush.bf16.msra.mxu0 0
  %2915 = vmatpush.bf16.msra.mxu0 0
  %2916 = vmatpush.bf16.msra.mxu0 0
  %2917 = vmatpush.bf16.msra.mxu0 0
  %2918 = vmatpush.bf16.msra.mxu0 0
  %2919 = vmatpush.bf16.msra.mxu0 %v2882
  %2920 = vmatmul.bf16.gmra.mxu0 %v2888
  %v2921 = vpop.f32.mrf.mxu0
  %v2922 = vadd.f32 0.0, %v2921
  %v2923 = vpop.f32.mrf.mxu0
  %v2924 = vadd.f32 0.0, %v2923
  %2925 = vmatmul.bf16.gmra.mxu0 %v2891
  %v2926 = vpop.f32.mrf.mxu0
  %v2927 = vadd.f32 0.0, %v2926
  %v2928 = vpop.f32.mrf.mxu0
  %v2929 = vadd.f32 0.0, %v2928
  %2930 = vdwg.mxu0
  %v2931 = vadd.f32 %v2856, %v2903
  %v2932 = vadd.f32 %v2857, %v2922
  %v2933 = vadd.f32 %v2858, %v2905
  %v2934 = vadd.f32 %v2859, %v2924
  %v2935 = vadd.f32 %v2860, %v2908
  %v2936 = vadd.f32 %v2861, %v2927
  %v2937 = vadd.f32 %v2862, %v2910
  %v2938 = vadd.f32 %v2863, %v2929
  %s2939 = scalar_lea.vmem %s12, 96
  %v2940 = vld [vmem:[%s2939] sm:$0xf]
  %v2941 = vld [vmem:[%s2939 + $0x4] sm:$0xf]
  %v2942 = vld [vmem:[%s2939 + $0x8] sm:$0xf]
  %v2943 = vld [vmem:[%s2939 + $0xc] sm:$0xf]
  %v2948 = vunpack.c.l.b16 %v2940
  %v2949 = vunpack.c.l.b16 %v2941
  %v2950 = vunpack.c.l.b16 %v2942
  %v2951 = vunpack.c.l.b16 %v2943
  %v2952 = vpack.c.b16 %v2949, %v2948
  %v2953 = vpack.c.b16 %v2951, %v2950
  %2954 = vrot.lane.b32.xlu0 %v2528, 110
  %v2955 = vpop.permute.xlu0 %2954
  %2956 = vrot.lane.b32.xlu0 %v2529, 110
  %v2957 = vpop.permute.xlu0 %2956
  %vm2958 = vcmask 900096
  %v2959 = vsel %vm2958, %v2955, %v2957
  %v2963 = vsel %vm2538, %v2952, 0
  %v2966 = vsel %vm2538, %v2953, 0
  %2968 = vmatpush.bf16.msra.mxu0 0
  %2969 = vmatpush.bf16.msra.mxu0 0
  %2970 = vmatpush.bf16.msra.mxu0 0
  %2971 = vmatpush.bf16.msra.mxu0 0
  %2972 = vmatpush.bf16.msra.mxu0 0
  %2973 = vmatpush.bf16.msra.mxu0 0
  %2974 = vmatpush.bf16.msra.mxu0 0
  %2975 = vmatpush.bf16.msra.mxu0 %v2959
  %2976 = vmatmul.bf16.gmra.mxu0 %v2963
  %v2977 = vpop.f32.mrf.mxu0
  %v2978 = vadd.f32 0.0, %v2977
  %v2979 = vpop.f32.mrf.mxu0
  %v2980 = vadd.f32 0.0, %v2979
  %2981 = vmatmul.bf16.gmra.mxu0 %v2966
  %v2982 = vpop.f32.mrf.mxu0
  %v2983 = vadd.f32 0.0, %v2982
  %v2984 = vpop.f32.mrf.mxu0
  %v2985 = vadd.f32 0.0, %v2984
  %2986 = vdwg.mxu0
  %2987 = vmatpush.bf16.msra.mxu0 0
  %2988 = vmatpush.bf16.msra.mxu0 0
  %2989 = vmatpush.bf16.msra.mxu0 0
  %2990 = vmatpush.bf16.msra.mxu0 0
  %2991 = vmatpush.bf16.msra.mxu0 0
  %2992 = vmatpush.bf16.msra.mxu0 0
  %2993 = vmatpush.bf16.msra.mxu0 0
  %2994 = vmatpush.bf16.msra.mxu0 %v2957
  %2995 = vmatmul.bf16.gmra.mxu0 %v2963
  %v2996 = vpop.f32.mrf.mxu0
  %v2997 = vadd.f32 0.0, %v2996
  %v2998 = vpop.f32.mrf.mxu0
  %v2999 = vadd.f32 0.0, %v2998
  %3000 = vmatmul.bf16.gmra.mxu0 %v2966
  %v3001 = vpop.f32.mrf.mxu0
  %v3002 = vadd.f32 0.0, %v3001
  %v3003 = vpop.f32.mrf.mxu0
  %v3004 = vadd.f32 0.0, %v3003
  %3005 = vdwg.mxu0
  %v3006 = vadd.f32 %v2931, %v2978
  %v3007 = vadd.f32 %v2932, %v2997
  %v3008 = vadd.f32 %v2933, %v2980
  %v3009 = vadd.f32 %v2934, %v2999
  %v3010 = vadd.f32 %v2935, %v2983
  %v3011 = vadd.f32 %v2936, %v3002
  %v3012 = vadd.f32 %v2937, %v2985
  %v3013 = vadd.f32 %v2938, %v3004
  %s3014 = scalar_lea.vmem %s12, 112
  %v3015 = vld [vmem:[%s3014] sm:$0xf]
  %v3016 = vld [vmem:[%s3014 + $0x4] sm:$0xf]
  %v3017 = vld [vmem:[%s3014 + $0x8] sm:$0xf]
  %v3018 = vld [vmem:[%s3014 + $0xc] sm:$0xf]
  %v3023 = vunpack.c.l.b16 %v3015
  %v3024 = vunpack.c.l.b16 %v3016
  %v3025 = vunpack.c.l.b16 %v3017
  %v3026 = vunpack.c.l.b16 %v3018
  %v3027 = vpack.c.b16 %v3024, %v3023
  %v3028 = vpack.c.b16 %v3026, %v3025
  %3029 = vrot.lane.b32.xlu0 %v2528, 109
  %v3030 = vpop.permute.xlu0 %3029
  %3031 = vrot.lane.b32.xlu0 %v2529, 109
  %v3032 = vpop.permute.xlu0 %3031
  %vm3033 = vcmask 891904
  %v3034 = vsel %vm3033, %v3030, %v3032
  %v3038 = vsel %vm2538, %v3027, 0
  %v3041 = vsel %vm2538, %v3028, 0
  %3043 = vmatpush.bf16.msra.mxu0 0
  %3044 = vmatpush.bf16.msra.mxu0 0
  %3045 = vmatpush.bf16.msra.mxu0 0
  %3046 = vmatpush.bf16.msra.mxu0 0
  %3047 = vmatpush.bf16.msra.mxu0 0
  %3048 = vmatpush.bf16.msra.mxu0 0
  %3049 = vmatpush.bf16.msra.mxu0 0
  %3050 = vmatpush.bf16.msra.mxu0 %v3034
  %3051 = vmatmul.bf16.gmra.mxu0 %v3038
  %v3052 = vpop.f32.mrf.mxu0
  %v3053 = vadd.f32 0.0, %v3052
  %v3054 = vpop.f32.mrf.mxu0
  %v3055 = vadd.f32 0.0, %v3054
  %3056 = vmatmul.bf16.gmra.mxu0 %v3041
  %v3057 = vpop.f32.mrf.mxu0
  %v3058 = vadd.f32 0.0, %v3057
  %v3059 = vpop.f32.mrf.mxu0
  %v3060 = vadd.f32 0.0, %v3059
  %3061 = vdwg.mxu0
  %3062 = vmatpush.bf16.msra.mxu0 0
  %3063 = vmatpush.bf16.msra.mxu0 0
  %3064 = vmatpush.bf16.msra.mxu0 0
  %3065 = vmatpush.bf16.msra.mxu0 0
  %3066 = vmatpush.bf16.msra.mxu0 0
  %3067 = vmatpush.bf16.msra.mxu0 0
  %3068 = vmatpush.bf16.msra.mxu0 0
  %3069 = vmatpush.bf16.msra.mxu0 %v3032
  %3070 = vmatmul.bf16.gmra.mxu0 %v3038
  %v3071 = vpop.f32.mrf.mxu0
  %v3072 = vadd.f32 0.0, %v3071
  %v3073 = vpop.f32.mrf.mxu0
  %v3074 = vadd.f32 0.0, %v3073
  %3075 = vmatmul.bf16.gmra.mxu0 %v3041
  %v3076 = vpop.f32.mrf.mxu0
  %v3077 = vadd.f32 0.0, %v3076
  %v3078 = vpop.f32.mrf.mxu0
  %v3079 = vadd.f32 0.0, %v3078
  %3080 = vdwg.mxu0
  %v3081 = vadd.f32 %v3006, %v3053
  %v3082 = vadd.f32 %v3007, %v3072
  %v3083 = vadd.f32 %v3008, %v3055
  %v3084 = vadd.f32 %v3009, %v3074
  %v3085 = vadd.f32 %v3010, %v3058
  %v3086 = vadd.f32 %v3011, %v3077
  %v3087 = vadd.f32 %v3012, %v3060
  %v3088 = vadd.f32 %v3013, %v3079
  %s3089 = scalar_lea.vmem %s12, 128
  %v3090 = vld [vmem:[%s3089] sm:$0xf]
  %v3091 = vld [vmem:[%s3089 + $0x4] sm:$0xf]
  %v3092 = vld [vmem:[%s3089 + $0x8] sm:$0xf]
  %v3093 = vld [vmem:[%s3089 + $0xc] sm:$0xf]
  %v3098 = vunpack.c.l.b16 %v3090
  %v3099 = vunpack.c.l.b16 %v3091
  %v3100 = vunpack.c.l.b16 %v3092
  %v3101 = vunpack.c.l.b16 %v3093
  %v3102 = vpack.c.b16 %v3099, %v3098
  %v3103 = vpack.c.b16 %v3101, %v3100
  %3104 = vrot.lane.b32.xlu0 %v2528, 108
  %v3105 = vpop.permute.xlu0 %3104
  %3106 = vrot.lane.b32.xlu0 %v2529, 108
  %v3107 = vpop.permute.xlu0 %3106
  %vm3108 = vcmask 883712
  %v3109 = vsel %vm3108, %v3105, %v3107
  %v3113 = vsel %vm2538, %v3102, 0
  %v3116 = vsel %vm2538, %v3103, 0
  %3118 = vmatpush.bf16.msra.mxu0 0
  %3119 = vmatpush.bf16.msra.mxu0 0
  %3120 = vmatpush.bf16.msra.mxu0 0
  %3121 = vmatpush.bf16.msra.mxu0 0
  %3122 = vmatpush.bf16.msra.mxu0 0
  %3123 = vmatpush.bf16.msra.mxu0 0
  %3124 = vmatpush.bf16.msra.mxu0 0
  %3125 = vmatpush.bf16.msra.mxu0 %v3109
  %3126 = vmatmul.bf16.gmra.mxu0 %v3113
  %v3127 = vpop.f32.mrf.mxu0
  %v3128 = vadd.f32 0.0, %v3127
  %v3129 = vpop.f32.mrf.mxu0
  %v3130 = vadd.f32 0.0, %v3129
  %3131 = vmatmul.bf16.gmra.mxu0 %v3116
  %v3132 = vpop.f32.mrf.mxu0
  %v3133 = vadd.f32 0.0, %v3132
  %v3134 = vpop.f32.mrf.mxu0
  %v3135 = vadd.f32 0.0, %v3134
  %3136 = vdwg.mxu0
  %3137 = vmatpush.bf16.msra.mxu0 0
  %3138 = vmatpush.bf16.msra.mxu0 0
  %3139 = vmatpush.bf16.msra.mxu0 0
  %3140 = vmatpush.bf16.msra.mxu0 0
  %3141 = vmatpush.bf16.msra.mxu0 0
  %3142 = vmatpush.bf16.msra.mxu0 0
  %3143 = vmatpush.bf16.msra.mxu0 0
  %3144 = vmatpush.bf16.msra.mxu0 %v3107
  %3145 = vmatmul.bf16.gmra.mxu0 %v3113
  %v3146 = vpop.f32.mrf.mxu0
  %v3147 = vadd.f32 0.0, %v3146
  %v3148 = vpop.f32.mrf.mxu0
  %v3149 = vadd.f32 0.0, %v3148
  %3150 = vmatmul.bf16.gmra.mxu0 %v3116
  %v3151 = vpop.f32.mrf.mxu0
  %v3152 = vadd.f32 0.0, %v3151
  %v3153 = vpop.f32.mrf.mxu0
  %v3154 = vadd.f32 0.0, %v3153
  %3155 = vdwg.mxu0
  %v3156 = vadd.f32 %v3081, %v3128
  %v3157 = vadd.f32 %v3082, %v3147
  %v3158 = vadd.f32 %v3083, %v3130
  %v3159 = vadd.f32 %v3084, %v3149
  %v3160 = vadd.f32 %v3085, %v3133
  %v3161 = vadd.f32 %v3086, %v3152
  %v3162 = vadd.f32 %v3087, %v3135
  %v3163 = vadd.f32 %v3088, %v3154
  %v3164 = vld [vmem:[%s13] sm:$0xff]
  %v3165 = vld [vmem:[%s13 + $0x8] sm:$0xff]
  %v3166 = vld [vmem:[%s13 + $0x10] sm:$0xff]
  %v3167 = vld [vmem:[%s13 + $0x18] sm:$0xff]
  %3169 = vset.pattern.permute.xlu0 0
  %3170 = vperm.xlu0 %3169, %v3164
  %v3171 = vpop.permute.xlu0 %3170
  %3174 = vset.pattern.permute.xlu0 0
  %3175 = vperm.xlu0 %3174, %v3165
  %v3176 = vpop.permute.xlu0 %3175
  %3179 = vset.pattern.permute.xlu0 0
  %3180 = vperm.xlu0 %3179, %v3166
  %v3181 = vpop.permute.xlu0 %3180
  %3184 = vset.pattern.permute.xlu0 0
  %3185 = vperm.xlu0 %3184, %v3167
  %v3186 = vpop.permute.xlu0 %3185
  %v3188 = vadd.f32 %v3156, %v3171
  %v3189 = vadd.f32 %v3157, %v3171
  %v3190 = vadd.f32 %v3158, %v3176
  %v3191 = vadd.f32 %v3159, %v3176
  %v3192 = vadd.f32 %v3160, %v3181
  %v3193 = vadd.f32 %v3161, %v3181
  %v3194 = vadd.f32 %v3162, %v3186
  %v3195 = vadd.f32 %v3163, %v3186
  %v3196 = vmax.f32 %v3188, 0.0
  %v3197 = vmax.f32 %v3189, 0.0
  %v3198 = vmax.f32 %v3190, 0.0
  %v3199 = vmax.f32 %v3191, 0.0
  %v3200 = vmax.f32 %v3192, 0.0
  %v3201 = vmax.f32 %v3193, 0.0
  %v3202 = vmax.f32 %v3194, 0.0
  %v3203 = vmax.f32 %v3195, 0.0
  %v3204 = vld [vmem:[%s16] sm:$0x3]
  %v3205 = vld [vmem:[%s14] sm:$0xff]
  %v3206 = vld [vmem:[%s15] sm:$0xff]
  %v3208 = vperm.slane %v3204, 0
  %v3209 = vperm.slane %v3204, 1
  %v3212 = vmul.f32 %v3196, %v3208
  %v3213 = vmul.f32 %v3197, %v3209
  %v3214 = vmul.f32 %v3198, %v3208
  %v3215 = vmul.f32 %v3199, %v3209
  %v3216 = vmul.f32 %v3200, %v3208
  %v3217 = vmul.f32 %v3201, %v3209
  %v3218 = vmul.f32 %v3202, %v3208
  %v3219 = vmul.f32 %v3203, %v3209
  %vm3220 = vcmask 277504
  %v3221 = vsel %vm3220, %v3213, 0.0
  %v3222 = vadd.f32 %v3212, %v3221
  %3223 = vadd.xlane.f32.xlu0 %v3222
  %v3224 = vpop.xlane.xlu0 %3223
  %v3225 = vsel %vm3220, %v3215, 0.0
  %v3226 = vadd.f32 %v3214, %v3225
  %3227 = vadd.xlane.f32.xlu0 %v3226
  %v3228 = vpop.xlane.xlu0 %3227
  %v3229 = vsel %vm3220, %v3217, 0.0
  %v3230 = vadd.f32 %v3216, %v3229
  %3231 = vadd.xlane.f32.xlu0 %v3230
  %v3232 = vpop.xlane.xlu0 %3231
  %v3233 = vsel %vm3220, %v3219, 0.0
  %v3234 = vadd.f32 %v3218, %v3233
  %3235 = vadd.xlane.f32.xlu0 %v3234
  %v3236 = vpop.xlane.xlu0 %3235
  %v3237 = vmul.f32 %v3196, %v3196
  %v3238 = vmul.f32 %v3197, %v3197
  %v3239 = vmul.f32 %v3198, %v3198
  %v3240 = vmul.f32 %v3199, %v3199
  %v3241 = vmul.f32 %v3200, %v3200
  %v3242 = vmul.f32 %v3201, %v3201
  %v3243 = vmul.f32 %v3202, %v3202
  %v3244 = vmul.f32 %v3203, %v3203
  %v3245 = vmul.f32 %v3237, %v3208
  %v3246 = vmul.f32 %v3238, %v3209
  %v3247 = vmul.f32 %v3239, %v3208
  %v3248 = vmul.f32 %v3240, %v3209
  %v3249 = vmul.f32 %v3241, %v3208
  %v3250 = vmul.f32 %v3242, %v3209
  %v3251 = vmul.f32 %v3243, %v3208
  %v3252 = vmul.f32 %v3244, %v3209
  %v3253 = vsel %vm3220, %v3246, 0.0
  %v3254 = vadd.f32 %v3245, %v3253
  %3255 = vadd.xlane.f32.xlu0 %v3254
  %v3256 = vpop.xlane.xlu0 %3255
  %v3257 = vsel %vm3220, %v3248, 0.0
  %v3258 = vadd.f32 %v3247, %v3257
  %3259 = vadd.xlane.f32.xlu0 %v3258
  %v3260 = vpop.xlane.xlu0 %3259
  %v3261 = vsel %vm3220, %v3250, 0.0
  %v3262 = vadd.f32 %v3249, %v3261
  %3263 = vadd.xlane.f32.xlu0 %v3262
  %v3264 = vpop.xlane.xlu0 %3263
  %v3265 = vsel %vm3220, %v3252, 0.0
  %v3266 = vadd.f32 %v3251, %v3265
  %3267 = vadd.xlane.f32.xlu0 %v3266
  %v3268 = vpop.xlane.xlu0 %3267
  %v3269 = vadd.f32 %v3224, %v3228
  %v3270 = vadd.f32 %v3269, %v3232
  %v3271 = vadd.f32 %v3270, %v3236
  %v3272 = vadd.f32 %v3256, %v3260
  %v3273 = vadd.f32 %v3272, %v3264
  %v3274 = vadd.f32 %v3273, %v3268
  %v3275 = vmul.f32 %v3271, 0.0025510204
  %v3276 = vmul.f32 %v3274, 0.0025510204
  %v3277 = vmul.f32 %v3275, %v3275
  %v3278 = vsub.f32 %v3276, %v3277
  %v3279 = vadd.f32 %v3278, 1e-05
  %v3280 = vrsqrt.pop %v3279
  %v3281 = vmul.f32 %v3280, %v3279
  %v3282 = vmul.f32 %v3281, %v3280
  %v3283 = vmul.f32 0.5, %v3282
  %v3284 = vsub.f32 1.5, %v3283
  %v3285 = vmul.f32 %v3280, %v3284
  %vm3286 = vweird.f32 %v3279
  %vm3287 = vweird.f32 %v3280
  %vm3288 = vmor %vm3286, %vm3287
  %v3289 = vsel %vm3288, %v3280, %v3285
  %v3290 = vmul.f32 %v3205, %v3289
  %v3291 = vmul.f32 %v3275, %v3290
  %v3292 = vsub.f32 %v3206, %v3291
  %3294 = vset.pattern.permute.xlu0 0
  %3295 = vperm.xlu0 %3294, %v3290
  %v3296 = vpop.permute.xlu0 %3295
  %v3298 = vmul.f32 %v3196, %v3296
  %v3299 = vmul.f32 %v3197, %v3296
  %3301 = vset.pattern.permute.xlu0 0
  %3302 = vperm.xlu0 %3301, %v3292
  %v3303 = vpop.permute.xlu0 %3302
  %v3305 = vadd.f32 %v3298, %v3303
  %v3306 = vadd.f32 %v3299, %v3303
  %v3307 = vpack.c.bf16 %v3305, %v3305
  %v3308 = vpack.c.bf16 %v3306, %v3306
  %v3309 = vld [vmem:[%s17] sm:$0xff]
  %v3310 = vld [vmem:[%s17 + $0x8] sm:$0xff]
  %v3311 = vld [vmem:[%s17 + $0x10] sm:$0xff]
  %v3312 = vld [vmem:[%s17 + $0x18] sm:$0xff]
  %v3313 = vld [vmem:[%s17 + $0x20] sm:$0xff]
  %v3314 = vld [vmem:[%s17 + $0x28] sm:$0xff]
  %v3315 = vld [vmem:[%s17 + $0x30] sm:$0xff]
  %v3316 = vld [vmem:[%s17 + $0x38] sm:$0xff]
  %v3317 = vld [vmem:[%s17 + $0x40] sm:$0xff]
  %v3318 = vld [vmem:[%s17 + $0x48] sm:$0xff]
  %v3319 = vld [vmem:[%s17 + $0x50] sm:$0xff]
  %v3320 = vld [vmem:[%s17 + $0x58] sm:$0xff]
  %v3321 = vld [vmem:[%s17 + $0x60] sm:$0xff]
  %v3322 = vld [vmem:[%s17 + $0x68] sm:$0xff]
  %v3323 = vld [vmem:[%s17 + $0x70] sm:$0xff]
  %v3324 = vld [vmem:[%s17 + $0x78] sm:$0xff]
  %v3325 = vld [vmem:[%s17 + $0x80] sm:$0xff]
  %v3326 = vld [vmem:[%s17 + $0x88] sm:$0xff]
  %v3327 = vld [vmem:[%s17 + $0x90] sm:$0xff]
  %v3328 = vld [vmem:[%s17 + $0x98] sm:$0xff]
  %v3329 = vld [vmem:[%s17 + $0xa0] sm:$0xff]
  %v3330 = vld [vmem:[%s17 + $0xa8] sm:$0xff]
  %v3331 = vld [vmem:[%s17 + $0xb0] sm:$0xff]
  %v3332 = vld [vmem:[%s17 + $0xb8] sm:$0xff]
  %v3333 = vld [vmem:[%s17 + $0xc0] sm:$0xff]
  %v3334 = vld [vmem:[%s17 + $0xc8] sm:$0xff]
  %v3335 = vld [vmem:[%s17 + $0xd0] sm:$0xff]
  %v3336 = vld [vmem:[%s17 + $0xd8] sm:$0xff]
  %v3337 = vld [vmem:[%s17 + $0xe0] sm:$0xff]
  %v3338 = vld [vmem:[%s17 + $0xe8] sm:$0xff]
  %v3339 = vld [vmem:[%s17 + $0xf0] sm:$0xff]
  %v3340 = vld [vmem:[%s17 + $0xf8] sm:$0xff]
  %v3341 = vld [vmem:[%s17 + $0x100] sm:$0xff]
  %v3342 = vld [vmem:[%s17 + $0x108] sm:$0xff]
  %v3343 = vld [vmem:[%s17 + $0x110] sm:$0xff]
  %v3344 = vld [vmem:[%s17 + $0x118] sm:$0xff]
  %v3345 = vld [vmem:[%s17 + $0x120] sm:$0xff]
  %v3346 = vld [vmem:[%s17 + $0x128] sm:$0xff]
  %v3347 = vld [vmem:[%s17 + $0x130] sm:$0xff]
  %v3348 = vld [vmem:[%s17 + $0x138] sm:$0xff]
  %v3349 = vld [vmem:[%s17 + $0x140] sm:$0x11]
  %v3350 = vld [vmem:[%s17 + $0x148] sm:$0x11]
  %v3351 = vmul.f32 %v3198, %v3296
  %v3352 = vmul.f32 %v3199, %v3296
  %v3353 = vadd.f32 %v3351, %v3303
  %v3354 = vadd.f32 %v3352, %v3303
  %v3355 = vpack.c.bf16 %v3353, %v3353
  %v3356 = vpack.c.bf16 %v3354, %v3354
  %s3357 = scalar_lea.vmem %s17, 336
  %v3358 = vld [vmem:[%s3357] sm:$0xff]
  %v3359 = vld [vmem:[%s3357 + $0x8] sm:$0xff]
  %v3360 = vld [vmem:[%s3357 + $0x10] sm:$0xff]
  %v3361 = vld [vmem:[%s3357 + $0x18] sm:$0xff]
  %v3362 = vld [vmem:[%s3357 + $0x20] sm:$0xff]
  %v3363 = vld [vmem:[%s3357 + $0x28] sm:$0xff]
  %v3364 = vld [vmem:[%s3357 + $0x30] sm:$0xff]
  %v3365 = vld [vmem:[%s3357 + $0x38] sm:$0xff]
  %v3366 = vld [vmem:[%s3357 + $0x40] sm:$0xff]
  %v3367 = vld [vmem:[%s3357 + $0x48] sm:$0xff]
  %v3368 = vld [vmem:[%s3357 + $0x50] sm:$0xff]
  %v3369 = vld [vmem:[%s3357 + $0x58] sm:$0xff]
  %v3370 = vld [vmem:[%s3357 + $0x60] sm:$0xff]
  %v3371 = vld [vmem:[%s3357 + $0x68] sm:$0xff]
  %v3372 = vld [vmem:[%s3357 + $0x70] sm:$0xff]
  %v3373 = vld [vmem:[%s3357 + $0x78] sm:$0xff]
  %v3374 = vld [vmem:[%s3357 + $0x80] sm:$0xff]
  %v3375 = vld [vmem:[%s3357 + $0x88] sm:$0xff]
  %v3376 = vld [vmem:[%s3357 + $0x90] sm:$0xff]
  %v3377 = vld [vmem:[%s3357 + $0x98] sm:$0xff]
  %v3378 = vld [vmem:[%s3357 + $0xa0] sm:$0xff]
  %v3379 = vld [vmem:[%s3357 + $0xa8] sm:$0xff]
  %v3380 = vld [vmem:[%s3357 + $0xb0] sm:$0xff]
  %v3381 = vld [vmem:[%s3357 + $0xb8] sm:$0xff]
  %v3382 = vld [vmem:[%s3357 + $0xc0] sm:$0xff]
  %v3383 = vld [vmem:[%s3357 + $0xc8] sm:$0xff]
  %v3384 = vld [vmem:[%s3357 + $0xd0] sm:$0xff]
  %v3385 = vld [vmem:[%s3357 + $0xd8] sm:$0xff]
  %v3386 = vld [vmem:[%s3357 + $0xe0] sm:$0xff]
  %v3387 = vld [vmem:[%s3357 + $0xe8] sm:$0xff]
  %v3388 = vld [vmem:[%s3357 + $0xf0] sm:$0xff]
  %v3389 = vld [vmem:[%s3357 + $0xf8] sm:$0xff]
  %v3390 = vld [vmem:[%s3357 + $0x100] sm:$0xff]
  %v3391 = vld [vmem:[%s3357 + $0x108] sm:$0xff]
  %v3392 = vld [vmem:[%s3357 + $0x110] sm:$0xff]
  %v3393 = vld [vmem:[%s3357 + $0x118] sm:$0xff]
  %v3394 = vld [vmem:[%s3357 + $0x120] sm:$0xff]
  %v3395 = vld [vmem:[%s3357 + $0x128] sm:$0xff]
  %v3396 = vld [vmem:[%s3357 + $0x130] sm:$0xff]
  %v3397 = vld [vmem:[%s3357 + $0x138] sm:$0xff]
  %v3398 = vld [vmem:[%s3357 + $0x140] sm:$0x11]
  %v3399 = vld [vmem:[%s3357 + $0x148] sm:$0x11]
  %v3442 = vunpack.c.l.b16 %v3358
  %v3443 = vunpack.c.h.b16 %v3358
  %v3444 = vunpack.c.l.b16 %v3359
  %v3445 = vunpack.c.h.b16 %v3359
  %v3446 = vunpack.c.l.b16 %v3360
  %v3447 = vunpack.c.h.b16 %v3360
  %v3448 = vunpack.c.l.b16 %v3361
  %v3449 = vunpack.c.h.b16 %v3361
  %v3450 = vunpack.c.l.b16 %v3362
  %v3451 = vunpack.c.h.b16 %v3362
  %v3452 = vunpack.c.l.b16 %v3363
  %v3453 = vunpack.c.h.b16 %v3363
  %v3454 = vunpack.c.l.b16 %v3364
  %v3455 = vunpack.c.h.b16 %v3364
  %v3456 = vunpack.c.l.b16 %v3365
  %v3457 = vunpack.c.h.b16 %v3365
  %v3458 = vunpack.c.l.b16 %v3366
  %v3459 = vunpack.c.h.b16 %v3366
  %v3460 = vunpack.c.l.b16 %v3367
  %v3461 = vunpack.c.h.b16 %v3367
  %v3462 = vunpack.c.l.b16 %v3368
  %v3463 = vunpack.c.h.b16 %v3368
  %v3464 = vunpack.c.l.b16 %v3369
  %v3465 = vunpack.c.h.b16 %v3369
  %v3466 = vunpack.c.l.b16 %v3370
  %v3467 = vunpack.c.h.b16 %v3370
  %v3468 = vunpack.c.l.b16 %v3371
  %v3469 = vunpack.c.h.b16 %v3371
  %v3470 = vunpack.c.l.b16 %v3372
  %v3471 = vunpack.c.h.b16 %v3372
  %v3472 = vunpack.c.l.b16 %v3373
  %v3473 = vunpack.c.h.b16 %v3373
  %v3474 = vunpack.c.l.b16 %v3374
  %v3475 = vunpack.c.h.b16 %v3374
  %v3476 = vunpack.c.l.b16 %v3375
  %v3477 = vunpack.c.h.b16 %v3375
  %v3478 = vunpack.c.l.b16 %v3376
  %v3479 = vunpack.c.h.b16 %v3376
  %v3480 = vunpack.c.l.b16 %v3377
  %v3481 = vunpack.c.h.b16 %v3377
  %v3482 = vunpack.c.l.b16 %v3378
  %v3483 = vunpack.c.h.b16 %v3378
  %v3484 = vunpack.c.l.b16 %v3379
  %v3485 = vunpack.c.h.b16 %v3379
  %v3486 = vunpack.c.l.b16 %v3380
  %v3487 = vunpack.c.h.b16 %v3380
  %v3488 = vunpack.c.l.b16 %v3381
  %v3489 = vunpack.c.h.b16 %v3381
  %v3490 = vunpack.c.l.b16 %v3382
  %v3491 = vunpack.c.h.b16 %v3382
  %v3492 = vunpack.c.l.b16 %v3383
  %v3493 = vunpack.c.h.b16 %v3383
  %v3494 = vunpack.c.l.b16 %v3384
  %v3495 = vunpack.c.h.b16 %v3384
  %v3496 = vunpack.c.l.b16 %v3385
  %v3497 = vunpack.c.h.b16 %v3385
  %v3498 = vunpack.c.l.b16 %v3386
  %v3499 = vunpack.c.h.b16 %v3386
  %v3500 = vunpack.c.l.b16 %v3387
  %v3501 = vunpack.c.h.b16 %v3387
  %v3502 = vunpack.c.l.b16 %v3388
  %v3503 = vunpack.c.h.b16 %v3388
  %v3504 = vunpack.c.l.b16 %v3389
  %v3505 = vunpack.c.h.b16 %v3389
  %v3506 = vunpack.c.l.b16 %v3390
  %v3507 = vunpack.c.h.b16 %v3390
  %v3508 = vunpack.c.l.b16 %v3391
  %v3509 = vunpack.c.h.b16 %v3391
  %v3510 = vunpack.c.l.b16 %v3392
  %v3511 = vunpack.c.h.b16 %v3392
  %v3512 = vunpack.c.l.b16 %v3393
  %v3513 = vunpack.c.h.b16 %v3393
  %v3514 = vunpack.c.l.b16 %v3394
  %v3515 = vunpack.c.h.b16 %v3394
  %v3516 = vunpack.c.l.b16 %v3395
  %v3517 = vunpack.c.h.b16 %v3395
  %v3518 = vunpack.c.l.b16 %v3396
  %v3519 = vunpack.c.h.b16 %v3396
  %v3520 = vunpack.c.l.b16 %v3397
  %v3521 = vunpack.c.h.b16 %v3397
  %v3522 = vunpack.c.l.b16 %v3398
  %v3523 = vunpack.c.h.b16 %v3398
  %v3524 = vunpack.c.l.b16 %v3399
  %v3525 = vunpack.c.h.b16 %v3399
  %v3526 = vpack.c.b16 %v3446, %v3442
  %v3527 = vpack.c.b16 %v3447, %v3443
  %v3528 = vpack.c.b16 %v3448, %v3444
  %v3529 = vpack.c.b16 %v3449, %v3445
  %v3530 = vpack.c.b16 %v3454, %v3450
  %v3531 = vpack.c.b16 %v3455, %v3451
  %v3532 = vpack.c.b16 %v3456, %v3452
  %v3533 = vpack.c.b16 %v3457, %v3453
  %v3534 = vpack.c.b16 %v3462, %v3458
  %v3535 = vpack.c.b16 %v3463, %v3459
  %v3536 = vpack.c.b16 %v3464, %v3460
  %v3537 = vpack.c.b16 %v3465, %v3461
  %v3538 = vpack.c.b16 %v3470, %v3466
  %v3539 = vpack.c.b16 %v3471, %v3467
  %v3540 = vpack.c.b16 %v3472, %v3468
  %v3541 = vpack.c.b16 %v3473, %v3469
  %v3542 = vpack.c.b16 %v3478, %v3474
  %v3543 = vpack.c.b16 %v3479, %v3475
  %v3544 = vpack.c.b16 %v3480, %v3476
  %v3545 = vpack.c.b16 %v3481, %v3477
  %v3546 = vpack.c.b16 %v3486, %v3482
  %v3547 = vpack.c.b16 %v3487, %v3483
  %v3548 = vpack.c.b16 %v3488, %v3484
  %v3549 = vpack.c.b16 %v3489, %v3485
  %v3550 = vpack.c.b16 %v3494, %v3490
  %v3551 = vpack.c.b16 %v3495, %v3491
  %v3552 = vpack.c.b16 %v3496, %v3492
  %v3553 = vpack.c.b16 %v3497, %v3493
  %v3554 = vpack.c.b16 %v3502, %v3498
  %v3555 = vpack.c.b16 %v3503, %v3499
  %v3556 = vpack.c.b16 %v3504, %v3500
  %v3557 = vpack.c.b16 %v3505, %v3501
  %v3558 = vpack.c.b16 %v3510, %v3506
  %v3559 = vpack.c.b16 %v3511, %v3507
  %v3560 = vpack.c.b16 %v3512, %v3508
  %v3561 = vpack.c.b16 %v3513, %v3509
  %v3562 = vpack.c.b16 %v3518, %v3514
  %v3563 = vpack.c.b16 %v3519, %v3515
  %v3564 = vpack.c.b16 %v3520, %v3516
  %v3565 = vpack.c.b16 %v3521, %v3517
  %v3566 = vpack.c.b16 %v3522, %v3522
  %v3567 = vpack.c.b16 %v3523, %v3523
  %v3568 = vpack.c.b16 %v3524, %v3524
  %v3569 = vpack.c.b16 %v3525, %v3525
  %v3611 = vsel %vm3220, %v3356, 0
  %v3614 = vsel %vm623, %v3566, 0
  %v3617 = vsel %vm623, %v3567, 0
  %v3620 = vsel %vm623, %v3568, 0
  %v3623 = vsel %vm623, %v3569, 0
  %3625 = vmatpush.bf16.msra.mxu0 %v3554
  %3626 = vmatpush.bf16.msra.mxu0 %v3550
  %3627 = vmatpush.bf16.msra.mxu0 %v3546
  %3628 = vmatpush.bf16.msra.mxu0 %v3542
  %3629 = vmatpush.bf16.msra.mxu0 %v3538
  %3630 = vmatpush.bf16.msra.mxu0 %v3534
  %3631 = vmatpush.bf16.msra.mxu0 %v3530
  %3632 = vmatpush.bf16.msra.mxu0 %v3526
  %3633 = vmatmul.bf16.gmra.mxu0 %v3355
  %v3634 = vpop.f32.mrf.mxu0
  %v3635 = vadd.f32 0.0, %v3634
  %v3636 = vpop.f32.mrf.mxu0
  %3637 = vdwg.mxu0
  %3638 = vmatpush.bf16.msra.mxu0 0
  %3639 = vmatpush.bf16.msra.mxu0 0
  %3640 = vmatpush.bf16.msra.mxu0 0
  %3641 = vmatpush.bf16.msra.mxu0 0
  %3642 = vmatpush.bf16.msra.mxu0 0
  %3643 = vmatpush.bf16.msra.mxu0 %v3614
  %3644 = vmatpush.bf16.msra.mxu0 %v3562
  %3645 = vmatpush.bf16.msra.mxu0 %v3558
  %3646 = vmatmul.bf16.gmra.mxu0 %v3611
  %v3647 = vpop.f32.mrf.mxu0
  %v3648 = vadd.f32 %v3635, %v3647
  %v3649 = vpop.f32.mrf.mxu0
  %3650 = vdwg.mxu0
  %3651 = vmatpush.bf16.msra.mxu0 %v3555
  %3652 = vmatpush.bf16.msra.mxu0 %v3551
  %3653 = vmatpush.bf16.msra.mxu0 %v3547
  %3654 = vmatpush.bf16.msra.mxu0 %v3543
  %3655 = vmatpush.bf16.msra.mxu0 %v3539
  %3656 = vmatpush.bf16.msra.mxu0 %v3535
  %3657 = vmatpush.bf16.msra.mxu0 %v3531
  %3658 = vmatpush.bf16.msra.mxu0 %v3527
  %3659 = vmatmul.bf16.gmra.mxu0 %v3355
  %v3660 = vpop.f32.mrf.mxu0
  %v3661 = vadd.f32 0.0, %v3660
  %v3662 = vpop.f32.mrf.mxu0
  %3663 = vdwg.mxu0
  %3664 = vmatpush.bf16.msra.mxu0 0
  %3665 = vmatpush.bf16.msra.mxu0 0
  %3666 = vmatpush.bf16.msra.mxu0 0
  %3667 = vmatpush.bf16.msra.mxu0 0
  %3668 = vmatpush.bf16.msra.mxu0 0
  %3669 = vmatpush.bf16.msra.mxu0 %v3617
  %3670 = vmatpush.bf16.msra.mxu0 %v3563
  %3671 = vmatpush.bf16.msra.mxu0 %v3559
  %3672 = vmatmul.bf16.gmra.mxu0 %v3611
  %v3673 = vpop.f32.mrf.mxu0
  %v3674 = vadd.f32 %v3661, %v3673
  %v3675 = vpop.f32.mrf.mxu0
  %3676 = vdwg.mxu0
  %3677 = vmatpush.bf16.msra.mxu0 %v3556
  %3678 = vmatpush.bf16.msra.mxu0 %v3552
  %3679 = vmatpush.bf16.msra.mxu0 %v3548
  %3680 = vmatpush.bf16.msra.mxu0 %v3544
  %3681 = vmatpush.bf16.msra.mxu0 %v3540
  %3682 = vmatpush.bf16.msra.mxu0 %v3536
  %3683 = vmatpush.bf16.msra.mxu0 %v3532
  %3684 = vmatpush.bf16.msra.mxu0 %v3528
  %3685 = vmatmul.bf16.gmra.mxu0 %v3355
  %v3686 = vpop.f32.mrf.mxu0
  %v3687 = vadd.f32 0.0, %v3686
  %v3688 = vpop.f32.mrf.mxu0
  %3689 = vdwg.mxu0
  %3690 = vmatpush.bf16.msra.mxu0 0
  %3691 = vmatpush.bf16.msra.mxu0 0
  %3692 = vmatpush.bf16.msra.mxu0 0
  %3693 = vmatpush.bf16.msra.mxu0 0
  %3694 = vmatpush.bf16.msra.mxu0 0
  %3695 = vmatpush.bf16.msra.mxu0 %v3620
  %3696 = vmatpush.bf16.msra.mxu0 %v3564
  %3697 = vmatpush.bf16.msra.mxu0 %v3560
  %3698 = vmatmul.bf16.gmra.mxu0 %v3611
  %v3699 = vpop.f32.mrf.mxu0
  %v3700 = vadd.f32 %v3687, %v3699
  %v3701 = vpop.f32.mrf.mxu0
  %3702 = vdwg.mxu0
  %3703 = vmatpush.bf16.msra.mxu0 %v3557
  %3704 = vmatpush.bf16.msra.mxu0 %v3553
  %3705 = vmatpush.bf16.msra.mxu0 %v3549
  %3706 = vmatpush.bf16.msra.mxu0 %v3545
  %3707 = vmatpush.bf16.msra.mxu0 %v3541
  %3708 = vmatpush.bf16.msra.mxu0 %v3537
  %3709 = vmatpush.bf16.msra.mxu0 %v3533
  %3710 = vmatpush.bf16.msra.mxu0 %v3529
  %3711 = vmatmul.bf16.gmra.mxu0 %v3355
  %v3712 = vpop.f32.mrf.mxu0
  %v3713 = vadd.f32 0.0, %v3712
  %v3714 = vpop.f32.mrf.mxu0
  %3715 = vdwg.mxu0
  %3716 = vmatpush.bf16.msra.mxu0 0
  %3717 = vmatpush.bf16.msra.mxu0 0
  %3718 = vmatpush.bf16.msra.mxu0 0
  %3719 = vmatpush.bf16.msra.mxu0 0
  %3720 = vmatpush.bf16.msra.mxu0 0
  %3721 = vmatpush.bf16.msra.mxu0 %v3623
  %3722 = vmatpush.bf16.msra.mxu0 %v3565
  %3723 = vmatpush.bf16.msra.mxu0 %v3561
  %3724 = vmatmul.bf16.gmra.mxu0 %v3611
  %v3725 = vpop.f32.mrf.mxu0
  %v3726 = vadd.f32 %v3713, %v3725
  %v3727 = vpop.f32.mrf.mxu0
  %3728 = vdwg.mxu0
  %v3771 = vunpack.c.l.b16 %v3309
  %v3772 = vunpack.c.h.b16 %v3309
  %v3773 = vunpack.c.l.b16 %v3310
  %v3774 = vunpack.c.h.b16 %v3310
  %v3775 = vunpack.c.l.b16 %v3311
  %v3776 = vunpack.c.h.b16 %v3311
  %v3777 = vunpack.c.l.b16 %v3312
  %v3778 = vunpack.c.h.b16 %v3312
  %v3779 = vunpack.c.l.b16 %v3313
  %v3780 = vunpack.c.h.b16 %v3313
  %v3781 = vunpack.c.l.b16 %v3314
  %v3782 = vunpack.c.h.b16 %v3314
  %v3783 = vunpack.c.l.b16 %v3315
  %v3784 = vunpack.c.h.b16 %v3315
  %v3785 = vunpack.c.l.b16 %v3316
  %v3786 = vunpack.c.h.b16 %v3316
  %v3787 = vunpack.c.l.b16 %v3317
  %v3788 = vunpack.c.h.b16 %v3317
  %v3789 = vunpack.c.l.b16 %v3318
  %v3790 = vunpack.c.h.b16 %v3318
  %v3791 = vunpack.c.l.b16 %v3319
  %v3792 = vunpack.c.h.b16 %v3319
  %v3793 = vunpack.c.l.b16 %v3320
  %v3794 = vunpack.c.h.b16 %v3320
  %v3795 = vunpack.c.l.b16 %v3321
  %v3796 = vunpack.c.h.b16 %v3321
  %v3797 = vunpack.c.l.b16 %v3322
  %v3798 = vunpack.c.h.b16 %v3322
  %v3799 = vunpack.c.l.b16 %v3323
  %v3800 = vunpack.c.h.b16 %v3323
  %v3801 = vunpack.c.l.b16 %v3324
  %v3802 = vunpack.c.h.b16 %v3324
  %v3803 = vunpack.c.l.b16 %v3325
  %v3804 = vunpack.c.h.b16 %v3325
  %v3805 = vunpack.c.l.b16 %v3326
  %v3806 = vunpack.c.h.b16 %v3326
  %v3807 = vunpack.c.l.b16 %v3327
  %v3808 = vunpack.c.h.b16 %v3327
  %v3809 = vunpack.c.l.b16 %v3328
  %v3810 = vunpack.c.h.b16 %v3328
  %v3811 = vunpack.c.l.b16 %v3329
  %v3812 = vunpack.c.h.b16 %v3329
  %v3813 = vunpack.c.l.b16 %v3330
  %v3814 = vunpack.c.h.b16 %v3330
  %v3815 = vunpack.c.l.b16 %v3331
  %v3816 = vunpack.c.h.b16 %v3331
  %v3817 = vunpack.c.l.b16 %v3332
  %v3818 = vunpack.c.h.b16 %v3332
  %v3819 = vunpack.c.l.b16 %v3333
  %v3820 = vunpack.c.h.b16 %v3333
  %v3821 = vunpack.c.l.b16 %v3334
  %v3822 = vunpack.c.h.b16 %v3334
  %v3823 = vunpack.c.l.b16 %v3335
  %v3824 = vunpack.c.h.b16 %v3335
  %v3825 = vunpack.c.l.b16 %v3336
  %v3826 = vunpack.c.h.b16 %v3336
  %v3827 = vunpack.c.l.b16 %v3337
  %v3828 = vunpack.c.h.b16 %v3337
  %v3829 = vunpack.c.l.b16 %v3338
  %v3830 = vunpack.c.h.b16 %v3338
  %v3831 = vunpack.c.l.b16 %v3339
  %v3832 = vunpack.c.h.b16 %v3339
  %v3833 = vunpack.c.l.b16 %v3340
  %v3834 = vunpack.c.h.b16 %v3340
  %v3835 = vunpack.c.l.b16 %v3341
  %v3836 = vunpack.c.h.b16 %v3341
  %v3837 = vunpack.c.l.b16 %v3342
  %v3838 = vunpack.c.h.b16 %v3342
  %v3839 = vunpack.c.l.b16 %v3343
  %v3840 = vunpack.c.h.b16 %v3343
  %v3841 = vunpack.c.l.b16 %v3344
  %v3842 = vunpack.c.h.b16 %v3344
  %v3843 = vunpack.c.l.b16 %v3345
  %v3844 = vunpack.c.h.b16 %v3345
  %v3845 = vunpack.c.l.b16 %v3346
  %v3846 = vunpack.c.h.b16 %v3346
  %v3847 = vunpack.c.l.b16 %v3347
  %v3848 = vunpack.c.h.b16 %v3347
  %v3849 = vunpack.c.l.b16 %v3348
  %v3850 = vunpack.c.h.b16 %v3348
  %v3851 = vunpack.c.l.b16 %v3349
  %v3852 = vunpack.c.h.b16 %v3349
  %v3853 = vunpack.c.l.b16 %v3350
  %v3854 = vunpack.c.h.b16 %v3350
  %v3855 = vpack.c.b16 %v3775, %v3771
  %v3856 = vpack.c.b16 %v3776, %v3772
  %v3857 = vpack.c.b16 %v3777, %v3773
  %v3858 = vpack.c.b16 %v3778, %v3774
  %v3859 = vpack.c.b16 %v3783, %v3779
  %v3860 = vpack.c.b16 %v3784, %v3780
  %v3861 = vpack.c.b16 %v3785, %v3781
  %v3862 = vpack.c.b16 %v3786, %v3782
  %v3863 = vpack.c.b16 %v3791, %v3787
  %v3864 = vpack.c.b16 %v3792, %v3788
  %v3865 = vpack.c.b16 %v3793, %v3789
  %v3866 = vpack.c.b16 %v3794, %v3790
  %v3867 = vpack.c.b16 %v3799, %v3795
  %v3868 = vpack.c.b16 %v3800, %v3796
  %v3869 = vpack.c.b16 %v3801, %v3797
  %v3870 = vpack.c.b16 %v3802, %v3798
  %v3871 = vpack.c.b16 %v3807, %v3803
  %v3872 = vpack.c.b16 %v3808, %v3804
  %v3873 = vpack.c.b16 %v3809, %v3805
  %v3874 = vpack.c.b16 %v3810, %v3806
  %v3875 = vpack.c.b16 %v3815, %v3811
  %v3876 = vpack.c.b16 %v3816, %v3812
  %v3877 = vpack.c.b16 %v3817, %v3813
  %v3878 = vpack.c.b16 %v3818, %v3814
  %v3879 = vpack.c.b16 %v3823, %v3819
  %v3880 = vpack.c.b16 %v3824, %v3820
  %v3881 = vpack.c.b16 %v3825, %v3821
  %v3882 = vpack.c.b16 %v3826, %v3822
  %v3883 = vpack.c.b16 %v3831, %v3827
  %v3884 = vpack.c.b16 %v3832, %v3828
  %v3885 = vpack.c.b16 %v3833, %v3829
  %v3886 = vpack.c.b16 %v3834, %v3830
  %v3887 = vpack.c.b16 %v3839, %v3835
  %v3888 = vpack.c.b16 %v3840, %v3836
  %v3889 = vpack.c.b16 %v3841, %v3837
  %v3890 = vpack.c.b16 %v3842, %v3838
  %v3891 = vpack.c.b16 %v3847, %v3843
  %v3892 = vpack.c.b16 %v3848, %v3844
  %v3893 = vpack.c.b16 %v3849, %v3845
  %v3894 = vpack.c.b16 %v3850, %v3846
  %v3895 = vpack.c.b16 %v3851, %v3851
  %v3896 = vpack.c.b16 %v3852, %v3852
  %v3897 = vpack.c.b16 %v3853, %v3853
  %v3898 = vpack.c.b16 %v3854, %v3854
  %v3940 = vsel %vm3220, %v3308, 0
  %v3943 = vsel %vm623, %v3895, 0
  %v3946 = vsel %vm623, %v3896, 0
  %v3949 = vsel %vm623, %v3897, 0
  %v3952 = vsel %vm623, %v3898, 0
  %3954 = vmatpush.bf16.msra.mxu0 %v3883
  %3955 = vmatpush.bf16.msra.mxu0 %v3879
  %3956 = vmatpush.bf16.msra.mxu0 %v3875
  %3957 = vmatpush.bf16.msra.mxu0 %v3871
  %3958 = vmatpush.bf16.msra.mxu0 %v3867
  %3959 = vmatpush.bf16.msra.mxu0 %v3863
  %3960 = vmatpush.bf16.msra.mxu0 %v3859
  %3961 = vmatpush.bf16.msra.mxu0 %v3855
  %3962 = vmatmul.bf16.gmra.mxu0 %v3307
  %v3963 = vpop.f32.mrf.mxu0
  %v3964 = vadd.f32 %v3648, %v3963
  %v3965 = vpop.f32.mrf.mxu0
  %3966 = vdwg.mxu0
  %3967 = vmatpush.bf16.msra.mxu0 0
  %3968 = vmatpush.bf16.msra.mxu0 0
  %3969 = vmatpush.bf16.msra.mxu0 0
  %3970 = vmatpush.bf16.msra.mxu0 0
  %3971 = vmatpush.bf16.msra.mxu0 0
  %3972 = vmatpush.bf16.msra.mxu0 %v3943
  %3973 = vmatpush.bf16.msra.mxu0 %v3891
  %3974 = vmatpush.bf16.msra.mxu0 %v3887
  %3975 = vmatmul.bf16.gmra.mxu0 %v3940
  %v3976 = vpop.f32.mrf.mxu0
  %v3977 = vadd.f32 %v3964, %v3976
  %v3978 = vpop.f32.mrf.mxu0
  %3979 = vdwg.mxu0
  %3980 = vmatpush.bf16.msra.mxu0 %v3884
  %3981 = vmatpush.bf16.msra.mxu0 %v3880
  %3982 = vmatpush.bf16.msra.mxu0 %v3876
  %3983 = vmatpush.bf16.msra.mxu0 %v3872
  %3984 = vmatpush.bf16.msra.mxu0 %v3868
  %3985 = vmatpush.bf16.msra.mxu0 %v3864
  %3986 = vmatpush.bf16.msra.mxu0 %v3860
  %3987 = vmatpush.bf16.msra.mxu0 %v3856
  %3988 = vmatmul.bf16.gmra.mxu0 %v3307
  %v3989 = vpop.f32.mrf.mxu0
  %v3990 = vadd.f32 %v3674, %v3989
  %v3991 = vpop.f32.mrf.mxu0
  %3992 = vdwg.mxu0
  %3993 = vmatpush.bf16.msra.mxu0 0
  %3994 = vmatpush.bf16.msra.mxu0 0
  %3995 = vmatpush.bf16.msra.mxu0 0
  %3996 = vmatpush.bf16.msra.mxu0 0
  %3997 = vmatpush.bf16.msra.mxu0 0
  %3998 = vmatpush.bf16.msra.mxu0 %v3946
  %3999 = vmatpush.bf16.msra.mxu0 %v3892
  %4000 = vmatpush.bf16.msra.mxu0 %v3888
  %4001 = vmatmul.bf16.gmra.mxu0 %v3940
  %v4002 = vpop.f32.mrf.mxu0
  %v4003 = vadd.f32 %v3990, %v4002
  %v4004 = vpop.f32.mrf.mxu0
  %4005 = vdwg.mxu0
  %4006 = vmatpush.bf16.msra.mxu0 %v3885
  %4007 = vmatpush.bf16.msra.mxu0 %v3881
  %4008 = vmatpush.bf16.msra.mxu0 %v3877
  %4009 = vmatpush.bf16.msra.mxu0 %v3873
  %4010 = vmatpush.bf16.msra.mxu0 %v3869
  %4011 = vmatpush.bf16.msra.mxu0 %v3865
  %4012 = vmatpush.bf16.msra.mxu0 %v3861
  %4013 = vmatpush.bf16.msra.mxu0 %v3857
  %4014 = vmatmul.bf16.gmra.mxu0 %v3307
  %v4015 = vpop.f32.mrf.mxu0
  %v4016 = vadd.f32 %v3700, %v4015
  %v4017 = vpop.f32.mrf.mxu0
  %4018 = vdwg.mxu0
  %4019 = vmatpush.bf16.msra.mxu0 0
  %4020 = vmatpush.bf16.msra.mxu0 0
  %4021 = vmatpush.bf16.msra.mxu0 0
  %4022 = vmatpush.bf16.msra.mxu0 0
  %4023 = vmatpush.bf16.msra.mxu0 0
  %4024 = vmatpush.bf16.msra.mxu0 %v3949
  %4025 = vmatpush.bf16.msra.mxu0 %v3893
  %4026 = vmatpush.bf16.msra.mxu0 %v3889
  %4027 = vmatmul.bf16.gmra.mxu0 %v3940
  %v4028 = vpop.f32.mrf.mxu0
  %v4029 = vadd.f32 %v4016, %v4028
  %v4030 = vpop.f32.mrf.mxu0
  %4031 = vdwg.mxu0
  %4032 = vmatpush.bf16.msra.mxu0 %v3886
  %4033 = vmatpush.bf16.msra.mxu0 %v3882
  %4034 = vmatpush.bf16.msra.mxu0 %v3878
  %4035 = vmatpush.bf16.msra.mxu0 %v3874
  %4036 = vmatpush.bf16.msra.mxu0 %v3870
  %4037 = vmatpush.bf16.msra.mxu0 %v3866
  %4038 = vmatpush.bf16.msra.mxu0 %v3862
  %4039 = vmatpush.bf16.msra.mxu0 %v3858
  %4040 = vmatmul.bf16.gmra.mxu0 %v3307
  %v4041 = vpop.f32.mrf.mxu0
  %v4042 = vadd.f32 %v3726, %v4041
  %v4043 = vpop.f32.mrf.mxu0
  %4044 = vdwg.mxu0
  %4045 = vmatpush.bf16.msra.mxu0 0
  %4046 = vmatpush.bf16.msra.mxu0 0
  %4047 = vmatpush.bf16.msra.mxu0 0
  %4048 = vmatpush.bf16.msra.mxu0 0
  %4049 = vmatpush.bf16.msra.mxu0 0
  %4050 = vmatpush.bf16.msra.mxu0 %v3952
  %4051 = vmatpush.bf16.msra.mxu0 %v3894
  %4052 = vmatpush.bf16.msra.mxu0 %v3890
  %4053 = vmatmul.bf16.gmra.mxu0 %v3940
  %v4054 = vpop.f32.mrf.mxu0
  %v4055 = vadd.f32 %v4042, %v4054
  %v4056 = vpop.f32.mrf.mxu0
  %4057 = vdwg.mxu0
  %v4058 = vmul.f32 %v3200, %v3296
  %v4059 = vmul.f32 %v3201, %v3296
  %v4060 = vadd.f32 %v4058, %v3303
  %v4061 = vadd.f32 %v4059, %v3303
  %v4062 = vpack.c.bf16 %v4060, %v4060
  %v4063 = vpack.c.bf16 %v4061, %v4061
  %s4064 = scalar_lea.vmem %s17, 672
  %v4065 = vld [vmem:[%s4064] sm:$0xff]
  %v4066 = vld [vmem:[%s4064 + $0x8] sm:$0xff]
  %v4067 = vld [vmem:[%s4064 + $0x10] sm:$0xff]
  %v4068 = vld [vmem:[%s4064 + $0x18] sm:$0xff]
  %v4069 = vld [vmem:[%s4064 + $0x20] sm:$0xff]
  %v4070 = vld [vmem:[%s4064 + $0x28] sm:$0xff]
  %v4071 = vld [vmem:[%s4064 + $0x30] sm:$0xff]
  %v4072 = vld [vmem:[%s4064 + $0x38] sm:$0xff]
  %v4073 = vld [vmem:[%s4064 + $0x40] sm:$0xff]
  %v4074 = vld [vmem:[%s4064 + $0x48] sm:$0xff]
  %v4075 = vld [vmem:[%s4064 + $0x50] sm:$0xff]
  %v4076 = vld [vmem:[%s4064 + $0x58] sm:$0xff]
  %v4077 = vld [vmem:[%s4064 + $0x60] sm:$0xff]
  %v4078 = vld [vmem:[%s4064 + $0x68] sm:$0xff]
  %v4079 = vld [vmem:[%s4064 + $0x70] sm:$0xff]
  %v4080 = vld [vmem:[%s4064 + $0x78] sm:$0xff]
  %v4081 = vld [vmem:[%s4064 + $0x80] sm:$0xff]
  %v4082 = vld [vmem:[%s4064 + $0x88] sm:$0xff]
  %v4083 = vld [vmem:[%s4064 + $0x90] sm:$0xff]
  %v4084 = vld [vmem:[%s4064 + $0x98] sm:$0xff]
  %v4085 = vld [vmem:[%s4064 + $0xa0] sm:$0xff]
  %v4086 = vld [vmem:[%s4064 + $0xa8] sm:$0xff]
  %v4087 = vld [vmem:[%s4064 + $0xb0] sm:$0xff]
  %v4088 = vld [vmem:[%s4064 + $0xb8] sm:$0xff]
  %v4089 = vld [vmem:[%s4064 + $0xc0] sm:$0xff]
  %v4090 = vld [vmem:[%s4064 + $0xc8] sm:$0xff]
  %v4091 = vld [vmem:[%s4064 + $0xd0] sm:$0xff]
  %v4092 = vld [vmem:[%s4064 + $0xd8] sm:$0xff]
  %v4093 = vld [vmem:[%s4064 + $0xe0] sm:$0xff]
  %v4094 = vld [vmem:[%s4064 + $0xe8] sm:$0xff]
  %v4095 = vld [vmem:[%s4064 + $0xf0] sm:$0xff]
  %v4096 = vld [vmem:[%s4064 + $0xf8] sm:$0xff]
  %v4097 = vld [vmem:[%s4064 + $0x100] sm:$0xff]
  %v4098 = vld [vmem:[%s4064 + $0x108] sm:$0xff]
  %v4099 = vld [vmem:[%s4064 + $0x110] sm:$0xff]
  %v4100 = vld [vmem:[%s4064 + $0x118] sm:$0xff]
  %v4101 = vld [vmem:[%s4064 + $0x120] sm:$0xff]
  %v4102 = vld [vmem:[%s4064 + $0x128] sm:$0xff]
  %v4103 = vld [vmem:[%s4064 + $0x130] sm:$0xff]
  %v4104 = vld [vmem:[%s4064 + $0x138] sm:$0xff]
  %v4105 = vld [vmem:[%s4064 + $0x140] sm:$0x11]
  %v4106 = vld [vmem:[%s4064 + $0x148] sm:$0x11]
  %v4149 = vunpack.c.l.b16 %v4065
  %v4150 = vunpack.c.h.b16 %v4065
  %v4151 = vunpack.c.l.b16 %v4066
  %v4152 = vunpack.c.h.b16 %v4066
  %v4153 = vunpack.c.l.b16 %v4067
  %v4154 = vunpack.c.h.b16 %v4067
  %v4155 = vunpack.c.l.b16 %v4068
  %v4156 = vunpack.c.h.b16 %v4068
  %v4157 = vunpack.c.l.b16 %v4069
  %v4158 = vunpack.c.h.b16 %v4069
  %v4159 = vunpack.c.l.b16 %v4070
  %v4160 = vunpack.c.h.b16 %v4070
  %v4161 = vunpack.c.l.b16 %v4071
  %v4162 = vunpack.c.h.b16 %v4071
  %v4163 = vunpack.c.l.b16 %v4072
  %v4164 = vunpack.c.h.b16 %v4072
  %v4165 = vunpack.c.l.b16 %v4073
  %v4166 = vunpack.c.h.b16 %v4073
  %v4167 = vunpack.c.l.b16 %v4074
  %v4168 = vunpack.c.h.b16 %v4074
  %v4169 = vunpack.c.l.b16 %v4075
  %v4170 = vunpack.c.h.b16 %v4075
  %v4171 = vunpack.c.l.b16 %v4076
  %v4172 = vunpack.c.h.b16 %v4076
  %v4173 = vunpack.c.l.b16 %v4077
  %v4174 = vunpack.c.h.b16 %v4077
  %v4175 = vunpack.c.l.b16 %v4078
  %v4176 = vunpack.c.h.b16 %v4078
  %v4177 = vunpack.c.l.b16 %v4079
  %v4178 = vunpack.c.h.b16 %v4079
  %v4179 = vunpack.c.l.b16 %v4080
  %v4180 = vunpack.c.h.b16 %v4080
  %v4181 = vunpack.c.l.b16 %v4081
  %v4182 = vunpack.c.h.b16 %v4081
  %v4183 = vunpack.c.l.b16 %v4082
  %v4184 = vunpack.c.h.b16 %v4082
  %v4185 = vunpack.c.l.b16 %v4083
  %v4186 = vunpack.c.h.b16 %v4083
  %v4187 = vunpack.c.l.b16 %v4084
  %v4188 = vunpack.c.h.b16 %v4084
  %v4189 = vunpack.c.l.b16 %v4085
  %v4190 = vunpack.c.h.b16 %v4085
  %v4191 = vunpack.c.l.b16 %v4086
  %v4192 = vunpack.c.h.b16 %v4086
  %v4193 = vunpack.c.l.b16 %v4087
  %v4194 = vunpack.c.h.b16 %v4087
  %v4195 = vunpack.c.l.b16 %v4088
  %v4196 = vunpack.c.h.b16 %v4088
  %v4197 = vunpack.c.l.b16 %v4089
  %v4198 = vunpack.c.h.b16 %v4089
  %v4199 = vunpack.c.l.b16 %v4090
  %v4200 = vunpack.c.h.b16 %v4090
  %v4201 = vunpack.c.l.b16 %v4091
  %v4202 = vunpack.c.h.b16 %v4091
  %v4203 = vunpack.c.l.b16 %v4092
  %v4204 = vunpack.c.h.b16 %v4092
  %v4205 = vunpack.c.l.b16 %v4093
  %v4206 = vunpack.c.h.b16 %v4093
  %v4207 = vunpack.c.l.b16 %v4094
  %v4208 = vunpack.c.h.b16 %v4094
  %v4209 = vunpack.c.l.b16 %v4095
  %v4210 = vunpack.c.h.b16 %v4095
  %v4211 = vunpack.c.l.b16 %v4096
  %v4212 = vunpack.c.h.b16 %v4096
  %v4213 = vunpack.c.l.b16 %v4097
  %v4214 = vunpack.c.h.b16 %v4097
  %v4215 = vunpack.c.l.b16 %v4098
  %v4216 = vunpack.c.h.b16 %v4098
  %v4217 = vunpack.c.l.b16 %v4099
  %v4218 = vunpack.c.h.b16 %v4099
  %v4219 = vunpack.c.l.b16 %v4100
  %v4220 = vunpack.c.h.b16 %v4100
  %v4221 = vunpack.c.l.b16 %v4101
  %v4222 = vunpack.c.h.b16 %v4101
  %v4223 = vunpack.c.l.b16 %v4102
  %v4224 = vunpack.c.h.b16 %v4102
  %v4225 = vunpack.c.l.b16 %v4103
  %v4226 = vunpack.c.h.b16 %v4103
  %v4227 = vunpack.c.l.b16 %v4104
  %v4228 = vunpack.c.h.b16 %v4104
  %v4229 = vunpack.c.l.b16 %v4105
  %v4230 = vunpack.c.h.b16 %v4105
  %v4231 = vunpack.c.l.b16 %v4106
  %v4232 = vunpack.c.h.b16 %v4106
  %v4233 = vpack.c.b16 %v4153, %v4149
  %v4234 = vpack.c.b16 %v4154, %v4150
  %v4235 = vpack.c.b16 %v4155, %v4151
  %v4236 = vpack.c.b16 %v4156, %v4152
  %v4237 = vpack.c.b16 %v4161, %v4157
  %v4238 = vpack.c.b16 %v4162, %v4158
  %v4239 = vpack.c.b16 %v4163, %v4159
  %v4240 = vpack.c.b16 %v4164, %v4160
  %v4241 = vpack.c.b16 %v4169, %v4165
  %v4242 = vpack.c.b16 %v4170, %v4166
  %v4243 = vpack.c.b16 %v4171, %v4167
  %v4244 = vpack.c.b16 %v4172, %v4168
  %v4245 = vpack.c.b16 %v4177, %v4173
  %v4246 = vpack.c.b16 %v4178, %v4174
  %v4247 = vpack.c.b16 %v4179, %v4175
  %v4248 = vpack.c.b16 %v4180, %v4176
  %v4249 = vpack.c.b16 %v4185, %v4181
  %v4250 = vpack.c.b16 %v4186, %v4182
  %v4251 = vpack.c.b16 %v4187, %v4183
  %v4252 = vpack.c.b16 %v4188, %v4184
  %v4253 = vpack.c.b16 %v4193, %v4189
  %v4254 = vpack.c.b16 %v4194, %v4190
  %v4255 = vpack.c.b16 %v4195, %v4191
  %v4256 = vpack.c.b16 %v4196, %v4192
  %v4257 = vpack.c.b16 %v4201, %v4197
  %v4258 = vpack.c.b16 %v4202, %v4198
  %v4259 = vpack.c.b16 %v4203, %v4199
  %v4260 = vpack.c.b16 %v4204, %v4200
  %v4261 = vpack.c.b16 %v4209, %v4205
  %v4262 = vpack.c.b16 %v4210, %v4206
  %v4263 = vpack.c.b16 %v4211, %v4207
  %v4264 = vpack.c.b16 %v4212, %v4208
  %v4265 = vpack.c.b16 %v4217, %v4213
  %v4266 = vpack.c.b16 %v4218, %v4214
  %v4267 = vpack.c.b16 %v4219, %v4215
  %v4268 = vpack.c.b16 %v4220, %v4216
  %v4269 = vpack.c.b16 %v4225, %v4221
  %v4270 = vpack.c.b16 %v4226, %v4222
  %v4271 = vpack.c.b16 %v4227, %v4223
  %v4272 = vpack.c.b16 %v4228, %v4224
  %v4273 = vpack.c.b16 %v4229, %v4229
  %v4274 = vpack.c.b16 %v4230, %v4230
  %v4275 = vpack.c.b16 %v4231, %v4231
  %v4276 = vpack.c.b16 %v4232, %v4232
  %v4318 = vsel %vm3220, %v4063, 0
  %v4321 = vsel %vm623, %v4273, 0
  %v4324 = vsel %vm623, %v4274, 0
  %v4327 = vsel %vm623, %v4275, 0
  %v4330 = vsel %vm623, %v4276, 0
  %4332 = vmatpush.bf16.msra.mxu0 %v4261
  %4333 = vmatpush.bf16.msra.mxu0 %v4257
  %4334 = vmatpush.bf16.msra.mxu0 %v4253
  %4335 = vmatpush.bf16.msra.mxu0 %v4249
  %4336 = vmatpush.bf16.msra.mxu0 %v4245
  %4337 = vmatpush.bf16.msra.mxu0 %v4241
  %4338 = vmatpush.bf16.msra.mxu0 %v4237
  %4339 = vmatpush.bf16.msra.mxu0 %v4233
  %4340 = vmatmul.bf16.gmra.mxu0 %v4062
  %v4341 = vpop.f32.mrf.mxu0
  %v4342 = vadd.f32 0.0, %v4341
  %v4343 = vpop.f32.mrf.mxu0
  %4344 = vdwg.mxu0
  %4345 = vmatpush.bf16.msra.mxu0 0
  %4346 = vmatpush.bf16.msra.mxu0 0
  %4347 = vmatpush.bf16.msra.mxu0 0
  %4348 = vmatpush.bf16.msra.mxu0 0
  %4349 = vmatpush.bf16.msra.mxu0 0
  %4350 = vmatpush.bf16.msra.mxu0 %v4321
  %4351 = vmatpush.bf16.msra.mxu0 %v4269
  %4352 = vmatpush.bf16.msra.mxu0 %v4265
  %4353 = vmatmul.bf16.gmra.mxu0 %v4318
  %v4354 = vpop.f32.mrf.mxu0
  %v4355 = vadd.f32 %v4342, %v4354
  %v4356 = vpop.f32.mrf.mxu0
  %4357 = vdwg.mxu0
  %4358 = vmatpush.bf16.msra.mxu0 %v4262
  %4359 = vmatpush.bf16.msra.mxu0 %v4258
  %4360 = vmatpush.bf16.msra.mxu0 %v4254
  %4361 = vmatpush.bf16.msra.mxu0 %v4250
  %4362 = vmatpush.bf16.msra.mxu0 %v4246
  %4363 = vmatpush.bf16.msra.mxu0 %v4242
  %4364 = vmatpush.bf16.msra.mxu0 %v4238
  %4365 = vmatpush.bf16.msra.mxu0 %v4234
  %4366 = vmatmul.bf16.gmra.mxu0 %v4062
  %v4367 = vpop.f32.mrf.mxu0
  %v4368 = vadd.f32 0.0, %v4367
  %v4369 = vpop.f32.mrf.mxu0
  %4370 = vdwg.mxu0
  %4371 = vmatpush.bf16.msra.mxu0 0
  %4372 = vmatpush.bf16.msra.mxu0 0
  %4373 = vmatpush.bf16.msra.mxu0 0
  %4374 = vmatpush.bf16.msra.mxu0 0
  %4375 = vmatpush.bf16.msra.mxu0 0
  %4376 = vmatpush.bf16.msra.mxu0 %v4324
  %4377 = vmatpush.bf16.msra.mxu0 %v4270
  %4378 = vmatpush.bf16.msra.mxu0 %v4266
  %4379 = vmatmul.bf16.gmra.mxu0 %v4318
  %v4380 = vpop.f32.mrf.mxu0
  %v4381 = vadd.f32 %v4368, %v4380
  %v4382 = vpop.f32.mrf.mxu0
  %4383 = vdwg.mxu0
  %4384 = vmatpush.bf16.msra.mxu0 %v4263
  %4385 = vmatpush.bf16.msra.mxu0 %v4259
  %4386 = vmatpush.bf16.msra.mxu0 %v4255
  %4387 = vmatpush.bf16.msra.mxu0 %v4251
  %4388 = vmatpush.bf16.msra.mxu0 %v4247
  %4389 = vmatpush.bf16.msra.mxu0 %v4243
  %4390 = vmatpush.bf16.msra.mxu0 %v4239
  %4391 = vmatpush.bf16.msra.mxu0 %v4235
  %4392 = vmatmul.bf16.gmra.mxu0 %v4062
  %v4393 = vpop.f32.mrf.mxu0
  %v4394 = vadd.f32 0.0, %v4393
  %v4395 = vpop.f32.mrf.mxu0
  %4396 = vdwg.mxu0
  %4397 = vmatpush.bf16.msra.mxu0 0
  %4398 = vmatpush.bf16.msra.mxu0 0
  %4399 = vmatpush.bf16.msra.mxu0 0
  %4400 = vmatpush.bf16.msra.mxu0 0
  %4401 = vmatpush.bf16.msra.mxu0 0
  %4402 = vmatpush.bf16.msra.mxu0 %v4327
  %4403 = vmatpush.bf16.msra.mxu0 %v4271
  %4404 = vmatpush.bf16.msra.mxu0 %v4267
  %4405 = vmatmul.bf16.gmra.mxu0 %v4318
  %v4406 = vpop.f32.mrf.mxu0
  %v4407 = vadd.f32 %v4394, %v4406
  %v4408 = vpop.f32.mrf.mxu0
  %4409 = vdwg.mxu0
  %4410 = vmatpush.bf16.msra.mxu0 %v4264
  %4411 = vmatpush.bf16.msra.mxu0 %v4260
  %4412 = vmatpush.bf16.msra.mxu0 %v4256
  %4413 = vmatpush.bf16.msra.mxu0 %v4252
  %4414 = vmatpush.bf16.msra.mxu0 %v4248
  %4415 = vmatpush.bf16.msra.mxu0 %v4244
  %4416 = vmatpush.bf16.msra.mxu0 %v4240
  %4417 = vmatpush.bf16.msra.mxu0 %v4236
  %4418 = vmatmul.bf16.gmra.mxu0 %v4062
  %v4419 = vpop.f32.mrf.mxu0
  %v4420 = vadd.f32 0.0, %v4419
  %v4421 = vpop.f32.mrf.mxu0
  %4422 = vdwg.mxu0
  %4423 = vmatpush.bf16.msra.mxu0 0
  %4424 = vmatpush.bf16.msra.mxu0 0
  %4425 = vmatpush.bf16.msra.mxu0 0
  %4426 = vmatpush.bf16.msra.mxu0 0
  %4427 = vmatpush.bf16.msra.mxu0 0
  %4428 = vmatpush.bf16.msra.mxu0 %v4330
  %4429 = vmatpush.bf16.msra.mxu0 %v4272
  %4430 = vmatpush.bf16.msra.mxu0 %v4268
  %4431 = vmatmul.bf16.gmra.mxu0 %v4318
  %v4432 = vpop.f32.mrf.mxu0
  %v4433 = vadd.f32 %v4420, %v4432
  %v4434 = vpop.f32.mrf.mxu0
  %4435 = vdwg.mxu0
  %v4436 = vadd.f32 %v3977, %v4355
  %v4437 = vadd.f32 %v4003, %v4381
  %v4438 = vadd.f32 %v4029, %v4407
  %v4439 = vadd.f32 %v4055, %v4433
  %v4440 = vmul.f32 %v3202, %v3296
  %v4441 = vmul.f32 %v3203, %v3296
  %v4442 = vadd.f32 %v4440, %v3303
  %v4443 = vadd.f32 %v4441, %v3303
  %v4444 = vpack.c.bf16 %v4442, %v4442
  %v4445 = vpack.c.bf16 %v4443, %v4443
  %s4446 = scalar_lea.vmem %s17, 1008
  %v4447 = vld [vmem:[%s4446] sm:$0xff]
  %v4448 = vld [vmem:[%s4446 + $0x8] sm:$0xff]
  %v4449 = vld [vmem:[%s4446 + $0x10] sm:$0xff]
  %v4450 = vld [vmem:[%s4446 + $0x18] sm:$0xff]
  %v4451 = vld [vmem:[%s4446 + $0x20] sm:$0xff]
  %v4452 = vld [vmem:[%s4446 + $0x28] sm:$0xff]
  %v4453 = vld [vmem:[%s4446 + $0x30] sm:$0xff]
  %v4454 = vld [vmem:[%s4446 + $0x38] sm:$0xff]
  %v4455 = vld [vmem:[%s4446 + $0x40] sm:$0xff]
  %v4456 = vld [vmem:[%s4446 + $0x48] sm:$0xff]
  %v4457 = vld [vmem:[%s4446 + $0x50] sm:$0xff]
  %v4458 = vld [vmem:[%s4446 + $0x58] sm:$0xff]
  %v4459 = vld [vmem:[%s4446 + $0x60] sm:$0xff]
  %v4460 = vld [vmem:[%s4446 + $0x68] sm:$0xff]
  %v4461 = vld [vmem:[%s4446 + $0x70] sm:$0xff]
  %v4462 = vld [vmem:[%s4446 + $0x78] sm:$0xff]
  %v4463 = vld [vmem:[%s4446 + $0x80] sm:$0xff]
  %v4464 = vld [vmem:[%s4446 + $0x88] sm:$0xff]
  %v4465 = vld [vmem:[%s4446 + $0x90] sm:$0xff]
  %v4466 = vld [vmem:[%s4446 + $0x98] sm:$0xff]
  %v4467 = vld [vmem:[%s4446 + $0xa0] sm:$0xff]
  %v4468 = vld [vmem:[%s4446 + $0xa8] sm:$0xff]
  %v4469 = vld [vmem:[%s4446 + $0xb0] sm:$0xff]
  %v4470 = vld [vmem:[%s4446 + $0xb8] sm:$0xff]
  %v4471 = vld [vmem:[%s4446 + $0xc0] sm:$0xff]
  %v4472 = vld [vmem:[%s4446 + $0xc8] sm:$0xff]
  %v4473 = vld [vmem:[%s4446 + $0xd0] sm:$0xff]
  %v4474 = vld [vmem:[%s4446 + $0xd8] sm:$0xff]
  %v4475 = vld [vmem:[%s4446 + $0xe0] sm:$0xff]
  %v4476 = vld [vmem:[%s4446 + $0xe8] sm:$0xff]
  %v4477 = vld [vmem:[%s4446 + $0xf0] sm:$0xff]
  %v4478 = vld [vmem:[%s4446 + $0xf8] sm:$0xff]
  %v4479 = vld [vmem:[%s4446 + $0x100] sm:$0xff]
  %v4480 = vld [vmem:[%s4446 + $0x108] sm:$0xff]
  %v4481 = vld [vmem:[%s4446 + $0x110] sm:$0xff]
  %v4482 = vld [vmem:[%s4446 + $0x118] sm:$0xff]
  %v4483 = vld [vmem:[%s4446 + $0x120] sm:$0xff]
  %v4484 = vld [vmem:[%s4446 + $0x128] sm:$0xff]
  %v4485 = vld [vmem:[%s4446 + $0x130] sm:$0xff]
  %v4486 = vld [vmem:[%s4446 + $0x138] sm:$0xff]
  %v4487 = vld [vmem:[%s4446 + $0x140] sm:$0x11]
  %v4488 = vld [vmem:[%s4446 + $0x148] sm:$0x11]
  %v4531 = vunpack.c.l.b16 %v4447
  %v4532 = vunpack.c.h.b16 %v4447
  %v4533 = vunpack.c.l.b16 %v4448
  %v4534 = vunpack.c.h.b16 %v4448
  %v4535 = vunpack.c.l.b16 %v4449
  %v4536 = vunpack.c.h.b16 %v4449
  %v4537 = vunpack.c.l.b16 %v4450
  %v4538 = vunpack.c.h.b16 %v4450
  %v4539 = vunpack.c.l.b16 %v4451
  %v4540 = vunpack.c.h.b16 %v4451
  %v4541 = vunpack.c.l.b16 %v4452
  %v4542 = vunpack.c.h.b16 %v4452
  %v4543 = vunpack.c.l.b16 %v4453
  %v4544 = vunpack.c.h.b16 %v4453
  %v4545 = vunpack.c.l.b16 %v4454
  %v4546 = vunpack.c.h.b16 %v4454
  %v4547 = vunpack.c.l.b16 %v4455
  %v4548 = vunpack.c.h.b16 %v4455
  %v4549 = vunpack.c.l.b16 %v4456
  %v4550 = vunpack.c.h.b16 %v4456
  %v4551 = vunpack.c.l.b16 %v4457
  %v4552 = vunpack.c.h.b16 %v4457
  %v4553 = vunpack.c.l.b16 %v4458
  %v4554 = vunpack.c.h.b16 %v4458
  %v4555 = vunpack.c.l.b16 %v4459
  %v4556 = vunpack.c.h.b16 %v4459
  %v4557 = vunpack.c.l.b16 %v4460
  %v4558 = vunpack.c.h.b16 %v4460
  %v4559 = vunpack.c.l.b16 %v4461
  %v4560 = vunpack.c.h.b16 %v4461
  %v4561 = vunpack.c.l.b16 %v4462
  %v4562 = vunpack.c.h.b16 %v4462
  %v4563 = vunpack.c.l.b16 %v4463
  %v4564 = vunpack.c.h.b16 %v4463
  %v4565 = vunpack.c.l.b16 %v4464
  %v4566 = vunpack.c.h.b16 %v4464
  %v4567 = vunpack.c.l.b16 %v4465
  %v4568 = vunpack.c.h.b16 %v4465
  %v4569 = vunpack.c.l.b16 %v4466
  %v4570 = vunpack.c.h.b16 %v4466
  %v4571 = vunpack.c.l.b16 %v4467
  %v4572 = vunpack.c.h.b16 %v4467
  %v4573 = vunpack.c.l.b16 %v4468
  %v4574 = vunpack.c.h.b16 %v4468
  %v4575 = vunpack.c.l.b16 %v4469
  %v4576 = vunpack.c.h.b16 %v4469
  %v4577 = vunpack.c.l.b16 %v4470
  %v4578 = vunpack.c.h.b16 %v4470
  %v4579 = vunpack.c.l.b16 %v4471
  %v4580 = vunpack.c.h.b16 %v4471
  %v4581 = vunpack.c.l.b16 %v4472
  %v4582 = vunpack.c.h.b16 %v4472
  %v4583 = vunpack.c.l.b16 %v4473
  %v4584 = vunpack.c.h.b16 %v4473
  %v4585 = vunpack.c.l.b16 %v4474
  %v4586 = vunpack.c.h.b16 %v4474
  %v4587 = vunpack.c.l.b16 %v4475
  %v4588 = vunpack.c.h.b16 %v4475
  %v4589 = vunpack.c.l.b16 %v4476
  %v4590 = vunpack.c.h.b16 %v4476
  %v4591 = vunpack.c.l.b16 %v4477
  %v4592 = vunpack.c.h.b16 %v4477
  %v4593 = vunpack.c.l.b16 %v4478
  %v4594 = vunpack.c.h.b16 %v4478
  %v4595 = vunpack.c.l.b16 %v4479
  %v4596 = vunpack.c.h.b16 %v4479
  %v4597 = vunpack.c.l.b16 %v4480
  %v4598 = vunpack.c.h.b16 %v4480
  %v4599 = vunpack.c.l.b16 %v4481
  %v4600 = vunpack.c.h.b16 %v4481
  %v4601 = vunpack.c.l.b16 %v4482
  %v4602 = vunpack.c.h.b16 %v4482
  %v4603 = vunpack.c.l.b16 %v4483
  %v4604 = vunpack.c.h.b16 %v4483
  %v4605 = vunpack.c.l.b16 %v4484
  %v4606 = vunpack.c.h.b16 %v4484
  %v4607 = vunpack.c.l.b16 %v4485
  %v4608 = vunpack.c.h.b16 %v4485
  %v4609 = vunpack.c.l.b16 %v4486
  %v4610 = vunpack.c.h.b16 %v4486
  %v4611 = vunpack.c.l.b16 %v4487
  %v4612 = vunpack.c.h.b16 %v4487
  %v4613 = vunpack.c.l.b16 %v4488
  %v4614 = vunpack.c.h.b16 %v4488
  %v4615 = vpack.c.b16 %v4535, %v4531
  %v4616 = vpack.c.b16 %v4536, %v4532
  %v4617 = vpack.c.b16 %v4537, %v4533
  %v4618 = vpack.c.b16 %v4538, %v4534
  %v4619 = vpack.c.b16 %v4543, %v4539
  %v4620 = vpack.c.b16 %v4544, %v4540
  %v4621 = vpack.c.b16 %v4545, %v4541
  %v4622 = vpack.c.b16 %v4546, %v4542
  %v4623 = vpack.c.b16 %v4551, %v4547
  %v4624 = vpack.c.b16 %v4552, %v4548
  %v4625 = vpack.c.b16 %v4553, %v4549
  %v4626 = vpack.c.b16 %v4554, %v4550
  %v4627 = vpack.c.b16 %v4559, %v4555
  %v4628 = vpack.c.b16 %v4560, %v4556
  %v4629 = vpack.c.b16 %v4561, %v4557
  %v4630 = vpack.c.b16 %v4562, %v4558
  %v4631 = vpack.c.b16 %v4567, %v4563
  %v4632 = vpack.c.b16 %v4568, %v4564
  %v4633 = vpack.c.b16 %v4569, %v4565
  %v4634 = vpack.c.b16 %v4570, %v4566
  %v4635 = vpack.c.b16 %v4575, %v4571
  %v4636 = vpack.c.b16 %v4576, %v4572
  %v4637 = vpack.c.b16 %v4577, %v4573
  %v4638 = vpack.c.b16 %v4578, %v4574
  %v4639 = vpack.c.b16 %v4583, %v4579
  %v4640 = vpack.c.b16 %v4584, %v4580
  %v4641 = vpack.c.b16 %v4585, %v4581
  %v4642 = vpack.c.b16 %v4586, %v4582
  %v4643 = vpack.c.b16 %v4591, %v4587
  %v4644 = vpack.c.b16 %v4592, %v4588
  %v4645 = vpack.c.b16 %v4593, %v4589
  %v4646 = vpack.c.b16 %v4594, %v4590
  %v4647 = vpack.c.b16 %v4599, %v4595
  %v4648 = vpack.c.b16 %v4600, %v4596
  %v4649 = vpack.c.b16 %v4601, %v4597
  %v4650 = vpack.c.b16 %v4602, %v4598
  %v4651 = vpack.c.b16 %v4607, %v4603
  %v4652 = vpack.c.b16 %v4608, %v4604
  %v4653 = vpack.c.b16 %v4609, %v4605
  %v4654 = vpack.c.b16 %v4610, %v4606
  %v4655 = vpack.c.b16 %v4611, %v4611
  %v4656 = vpack.c.b16 %v4612, %v4612
  %v4657 = vpack.c.b16 %v4613, %v4613
  %v4658 = vpack.c.b16 %v4614, %v4614
  %v4700 = vsel %vm3220, %v4445, 0
  %v4703 = vsel %vm623, %v4655, 0
  %v4706 = vsel %vm623, %v4656, 0
  %v4709 = vsel %vm623, %v4657, 0
  %v4712 = vsel %vm623, %v4658, 0
  %4714 = vmatpush.bf16.msra.mxu0 %v4643
  %4715 = vmatpush.bf16.msra.mxu0 %v4639
  %4716 = vmatpush.bf16.msra.mxu0 %v4635
  %4717 = vmatpush.bf16.msra.mxu0 %v4631
  %4718 = vmatpush.bf16.msra.mxu0 %v4627
  %4719 = vmatpush.bf16.msra.mxu0 %v4623
  %4720 = vmatpush.bf16.msra.mxu0 %v4619
  %4721 = vmatpush.bf16.msra.mxu0 %v4615
  %4722 = vmatmul.bf16.gmra.mxu0 %v4444
  %v4723 = vpop.f32.mrf.mxu0
  %v4724 = vadd.f32 0.0, %v4723
  %v4725 = vpop.f32.mrf.mxu0
  %4726 = vdwg.mxu0
  %4727 = vmatpush.bf16.msra.mxu0 0
  %4728 = vmatpush.bf16.msra.mxu0 0
  %4729 = vmatpush.bf16.msra.mxu0 0
  %4730 = vmatpush.bf16.msra.mxu0 0
  %4731 = vmatpush.bf16.msra.mxu0 0
  %4732 = vmatpush.bf16.msra.mxu0 %v4703
  %4733 = vmatpush.bf16.msra.mxu0 %v4651
  %4734 = vmatpush.bf16.msra.mxu0 %v4647
  %4735 = vmatmul.bf16.gmra.mxu0 %v4700
  %v4736 = vpop.f32.mrf.mxu0
  %v4737 = vadd.f32 %v4724, %v4736
  %v4738 = vpop.f32.mrf.mxu0
  %4739 = vdwg.mxu0
  %4740 = vmatpush.bf16.msra.mxu0 %v4644
  %4741 = vmatpush.bf16.msra.mxu0 %v4640
  %4742 = vmatpush.bf16.msra.mxu0 %v4636
  %4743 = vmatpush.bf16.msra.mxu0 %v4632
  %4744 = vmatpush.bf16.msra.mxu0 %v4628
  %4745 = vmatpush.bf16.msra.mxu0 %v4624
  %4746 = vmatpush.bf16.msra.mxu0 %v4620
  %4747 = vmatpush.bf16.msra.mxu0 %v4616
  %4748 = vmatmul.bf16.gmra.mxu0 %v4444
  %v4749 = vpop.f32.mrf.mxu0
  %v4750 = vadd.f32 0.0, %v4749
  %v4751 = vpop.f32.mrf.mxu0
  %4752 = vdwg.mxu0
  %4753 = vmatpush.bf16.msra.mxu0 0
  %4754 = vmatpush.bf16.msra.mxu0 0
  %4755 = vmatpush.bf16.msra.mxu0 0
  %4756 = vmatpush.bf16.msra.mxu0 0
  %4757 = vmatpush.bf16.msra.mxu0 0
  %4758 = vmatpush.bf16.msra.mxu0 %v4706
  %4759 = vmatpush.bf16.msra.mxu0 %v4652
  %4760 = vmatpush.bf16.msra.mxu0 %v4648
  %4761 = vmatmul.bf16.gmra.mxu0 %v4700
  %v4762 = vpop.f32.mrf.mxu0
  %v4763 = vadd.f32 %v4750, %v4762
  %v4764 = vpop.f32.mrf.mxu0
  %4765 = vdwg.mxu0
  %4766 = vmatpush.bf16.msra.mxu0 %v4645
  %4767 = vmatpush.bf16.msra.mxu0 %v4641
  %4768 = vmatpush.bf16.msra.mxu0 %v4637
  %4769 = vmatpush.bf16.msra.mxu0 %v4633
  %4770 = vmatpush.bf16.msra.mxu0 %v4629
  %4771 = vmatpush.bf16.msra.mxu0 %v4625
  %4772 = vmatpush.bf16.msra.mxu0 %v4621
  %4773 = vmatpush.bf16.msra.mxu0 %v4617
  %4774 = vmatmul.bf16.gmra.mxu0 %v4444
  %v4775 = vpop.f32.mrf.mxu0
  %v4776 = vadd.f32 0.0, %v4775
  %v4777 = vpop.f32.mrf.mxu0
  %4778 = vdwg.mxu0
  %4779 = vmatpush.bf16.msra.mxu0 0
  %4780 = vmatpush.bf16.msra.mxu0 0
  %4781 = vmatpush.bf16.msra.mxu0 0
  %4782 = vmatpush.bf16.msra.mxu0 0
  %4783 = vmatpush.bf16.msra.mxu0 0
  %4784 = vmatpush.bf16.msra.mxu0 %v4709
  %4785 = vmatpush.bf16.msra.mxu0 %v4653
  %4786 = vmatpush.bf16.msra.mxu0 %v4649
  %4787 = vmatmul.bf16.gmra.mxu0 %v4700
  %v4788 = vpop.f32.mrf.mxu0
  %v4789 = vadd.f32 %v4776, %v4788
  %v4790 = vpop.f32.mrf.mxu0
  %4791 = vdwg.mxu0
  %4792 = vmatpush.bf16.msra.mxu0 %v4646
  %4793 = vmatpush.bf16.msra.mxu0 %v4642
  %4794 = vmatpush.bf16.msra.mxu0 %v4638
  %4795 = vmatpush.bf16.msra.mxu0 %v4634
  %4796 = vmatpush.bf16.msra.mxu0 %v4630
  %4797 = vmatpush.bf16.msra.mxu0 %v4626
  %4798 = vmatpush.bf16.msra.mxu0 %v4622
  %4799 = vmatpush.bf16.msra.mxu0 %v4618
  %4800 = vmatmul.bf16.gmra.mxu0 %v4444
  %v4801 = vpop.f32.mrf.mxu0
  %v4802 = vadd.f32 0.0, %v4801
  %v4803 = vpop.f32.mrf.mxu0
  %4804 = vdwg.mxu0
  %4805 = vmatpush.bf16.msra.mxu0 0
  %4806 = vmatpush.bf16.msra.mxu0 0
  %4807 = vmatpush.bf16.msra.mxu0 0
  %4808 = vmatpush.bf16.msra.mxu0 0
  %4809 = vmatpush.bf16.msra.mxu0 0
  %4810 = vmatpush.bf16.msra.mxu0 %v4712
  %4811 = vmatpush.bf16.msra.mxu0 %v4654
  %4812 = vmatpush.bf16.msra.mxu0 %v4650
  %4813 = vmatmul.bf16.gmra.mxu0 %v4700
  %v4814 = vpop.f32.mrf.mxu0
  %v4815 = vadd.f32 %v4802, %v4814
  %v4816 = vpop.f32.mrf.mxu0
  %4817 = vdwg.mxu0
  %v4818 = vadd.f32 %v4436, %v4737
  %v4819 = vadd.f32 %v4437, %v4763
  %v4820 = vadd.f32 %v4438, %v4789
  %v4821 = vadd.f32 %v4439, %v4815
  %4822 = vst [vmem:[#allocation4] sm:$0xff] 0
  %4823 = vst [vmem:[#allocation4 + $0x8] sm:$0xff] 0
  %vm4824 = vcmask 273408
  %4825 = vst.msk [vmem:[#allocation4 + $0x10] sm:$0xf] %vm4824, 0
  %v4826 = vpack.c.bf16 %v4819, %v4818
  %v4827 = vpack.c.bf16 %v4821, %v4820
  %4830 = vrot.lane.b32.xlu0 %v4826, 17
  %v4831 = vpop.permute.xlu0 %4830
  %4832 = vrot.lane.b32.xlu0 %v4827, 17
  %v4833 = vpop.permute.xlu0 %4832
  %v4834 = vrot.slane %v4831, 4
  %v4835 = vrot.slane %v4833, 4
  %vm4836 = vcmask 138240
  %v4837 = vsel %vm4836, %v4834, %v4831
  %vm4838 = vcmask 1043456
  %v4839 = vsel %vm4838, %v4834, %v4835
  %v4840 = vsel %vm4836, %v4839, %v4833
  %vm4844 = vcmask 1043592
  %vm4845 = vcmask 1047556
  %vm4846 = vmor %vm4845, %vm4844
  %4847 = vst.msk [vmem:[#allocation4] sm:$0xff] %vm4846, %v4837
  %4848 = vst [vmem:[#allocation4 + $0x8] sm:$0xff] %v4840
  %vm4849 = vcmask 134144
  %4850 = vst.msk [vmem:[#allocation4 + $0x10] sm:$0xf] %vm4849, %v4835
  %v4851 = vld [vmem:[#allocation4] sm:$0xff]
  %v4852 = vld [vmem:[#allocation4 + $0x8] sm:$0xff]
  %v4853 = vld [vmem:[%s18] sm:$0x3]
  %v4854 = vld [vmem:[#allocation4 + $0x10] sm:$0xf]
  %s4855 = scalar_lea.vmem %s18, 2
  %v4856 = vld [vmem:[%s4855] sm:$0x3]
  %v4860 = vunpack.c.l.b16 %v4851
  %v4861 = vunpack.c.h.b16 %v4851
  %v4862 = vunpack.c.l.b16 %v4852
  %v4863 = vunpack.c.h.b16 %v4852
  %v4864 = vunpack.c.l.b16 %v4854
  %v4865 = vpack.c.b16 %v4860, %v4860
  %v4866 = vpack.c.b16 %v4861, %v4861
  %v4867 = vpack.c.b16 %v4862, %v4862
  %v4868 = vpack.c.b16 %v4863, %v4863
  %v4869 = vpack.c.b16 %v4864, %v4864
  %4870 = vrot.lane.b32.xlu0 %v4865, 127
  %v4871 = vpop.permute.xlu0 %4870
  %4872 = vrot.lane.b32.xlu0 %v4866, 127
  %v4873 = vpop.permute.xlu0 %4872
  %4874 = vrot.lane.b32.xlu0 %v4867, 127
  %v4875 = vpop.permute.xlu0 %4874
  %4876 = vrot.lane.b32.xlu0 %v4868, 127
  %v4877 = vpop.permute.xlu0 %4876
  %4878 = vrot.lane.b32.xlu0 %v4869, 127
  %v4879 = vpop.permute.xlu0 %4878
  %v4880 = vsel %vm2534, %v4871, %v4873
  %v4881 = vsel %vm2534, %v4873, %v4875
  %v4882 = vsel %vm2534, %v4875, %v4877
  %v4883 = vsel %vm2534, %v4877, %v4879
  %vm4884 = vcmask 64512
  %v4886 = vsel %vm4884, %v4856, 0
  %v4889 = vsel %vm2158, %v4880, 0
  %v4892 = vsel %vm2158, %v4881, 0
  %v4895 = vsel %vm2158, %v4882, 0
  %v4898 = vsel %vm2158, %v4883, 0
  %4900 = vmatpush.bf16.msra.mxu0 0
  %4901 = vmatpush.bf16.msra.mxu0 0
  %4902 = vmatpush.bf16.msra.mxu0 0
  %4903 = vmatpush.bf16.msra.mxu0 0
  %4904 = vmatpush.bf16.msra.mxu0 0
  %4905 = vmatpush.bf16.msra.mxu0 0
  %4906 = vmatpush.bf16.msra.mxu0 0
  %4907 = vmatpush.bf16.msra.mxu0 %v4889
  %4908 = vmatmul.bf16.gmra.mxu0 %v4886
  %v4909 = vpop.f32.mrf.mxu0
  %v4910 = vadd.f32 0.0, %v4909
  %v4911 = vpop.f32.mrf.mxu0
  %4912 = vdwg.mxu0
  %4913 = vmatpush.bf16.msra.mxu0 0
  %4914 = vmatpush.bf16.msra.mxu0 0
  %4915 = vmatpush.bf16.msra.mxu0 0
  %4916 = vmatpush.bf16.msra.mxu0 0
  %4917 = vmatpush.bf16.msra.mxu0 0
  %4918 = vmatpush.bf16.msra.mxu0 0
  %4919 = vmatpush.bf16.msra.mxu0 0
  %4920 = vmatpush.bf16.msra.mxu0 %v4892
  %4921 = vmatmul.bf16.gmra.mxu0 %v4886
  %v4922 = vpop.f32.mrf.mxu0
  %v4923 = vadd.f32 0.0, %v4922
  %v4924 = vpop.f32.mrf.mxu0
  %4925 = vdwg.mxu0
  %4926 = vmatpush.bf16.msra.mxu0 0
  %4927 = vmatpush.bf16.msra.mxu0 0
  %4928 = vmatpush.bf16.msra.mxu0 0
  %4929 = vmatpush.bf16.msra.mxu0 0
  %4930 = vmatpush.bf16.msra.mxu0 0
  %4931 = vmatpush.bf16.msra.mxu0 0
  %4932 = vmatpush.bf16.msra.mxu0 0
  %4933 = vmatpush.bf16.msra.mxu0 %v4895
  %4934 = vmatmul.bf16.gmra.mxu0 %v4886
  %v4935 = vpop.f32.mrf.mxu0
  %v4936 = vadd.f32 0.0, %v4935
  %v4937 = vpop.f32.mrf.mxu0
  %4938 = vdwg.mxu0
  %4939 = vmatpush.bf16.msra.mxu0 0
  %4940 = vmatpush.bf16.msra.mxu0 0
  %4941 = vmatpush.bf16.msra.mxu0 0
  %4942 = vmatpush.bf16.msra.mxu0 0
  %4943 = vmatpush.bf16.msra.mxu0 0
  %4944 = vmatpush.bf16.msra.mxu0 0
  %4945 = vmatpush.bf16.msra.mxu0 0
  %4946 = vmatpush.bf16.msra.mxu0 %v4898
  %4947 = vmatmul.bf16.gmra.mxu0 %v4886
  %v4948 = vpop.f32.mrf.mxu0
  %v4949 = vadd.f32 0.0, %v4948
  %v4950 = vpop.f32.mrf.mxu0
  %4951 = vdwg.mxu0
  %v4953 = vsel %vm4884, %v4853, 0
  %v4956 = vsel %vm2158, %v4865, 0
  %v4959 = vsel %vm2158, %v4866, 0
  %v4962 = vsel %vm2158, %v4867, 0
  %v4965 = vsel %vm2158, %v4868, 0
  %4967 = vmatpush.bf16.msra.mxu0 0
  %4968 = vmatpush.bf16.msra.mxu0 0
  %4969 = vmatpush.bf16.msra.mxu0 0
  %4970 = vmatpush.bf16.msra.mxu0 0
  %4971 = vmatpush.bf16.msra.mxu0 0
  %4972 = vmatpush.bf16.msra.mxu0 0
  %4973 = vmatpush.bf16.msra.mxu0 0
  %4974 = vmatpush.bf16.msra.mxu0 %v4956
  %4975 = vmatmul.bf16.gmra.mxu0 %v4953
  %v4976 = vpop.f32.mrf.mxu0
  %v4977 = vadd.f32 %v4910, %v4976
  %v4978 = vpop.f32.mrf.mxu0
  %4979 = vdwg.mxu0
  %4980 = vmatpush.bf16.msra.mxu0 0
  %4981 = vmatpush.bf16.msra.mxu0 0
  %4982 = vmatpush.bf16.msra.mxu0 0
  %4983 = vmatpush.bf16.msra.mxu0 0
  %4984 = vmatpush.bf16.msra.mxu0 0
  %4985 = vmatpush.bf16.msra.mxu0 0
  %4986 = vmatpush.bf16.msra.mxu0 0
  %4987 = vmatpush.bf16.msra.mxu0 %v4959
  %4988 = vmatmul.bf16.gmra.mxu0 %v4953
  %v4989 = vpop.f32.mrf.mxu0
  %v4990 = vadd.f32 %v4923, %v4989
  %v4991 = vpop.f32.mrf.mxu0
  %4992 = vdwg.mxu0
  %4993 = vmatpush.bf16.msra.mxu0 0
  %4994 = vmatpush.bf16.msra.mxu0 0
  %4995 = vmatpush.bf16.msra.mxu0 0
  %4996 = vmatpush.bf16.msra.mxu0 0
  %4997 = vmatpush.bf16.msra.mxu0 0
  %4998 = vmatpush.bf16.msra.mxu0 0
  %4999 = vmatpush.bf16.msra.mxu0 0
  %5000 = vmatpush.bf16.msra.mxu0 %v4962
  %5001 = vmatmul.bf16.gmra.mxu0 %v4953
  %v5002 = vpop.f32.mrf.mxu0
  %v5003 = vadd.f32 %v4936, %v5002
  %v5004 = vpop.f32.mrf.mxu0
  %5005 = vdwg.mxu0
  %5006 = vmatpush.bf16.msra.mxu0 0
  %5007 = vmatpush.bf16.msra.mxu0 0
  %5008 = vmatpush.bf16.msra.mxu0 0
  %5009 = vmatpush.bf16.msra.mxu0 0
  %5010 = vmatpush.bf16.msra.mxu0 0
  %5011 = vmatpush.bf16.msra.mxu0 0
  %5012 = vmatpush.bf16.msra.mxu0 0
  %5013 = vmatpush.bf16.msra.mxu0 %v4965
  %5014 = vmatmul.bf16.gmra.mxu0 %v4953
  %v5015 = vpop.f32.mrf.mxu0
  %v5016 = vadd.f32 %v4949, %v5015
  %v5017 = vpop.f32.mrf.mxu0
  %5018 = vdwg.mxu0
  %s5019 = scalar_lea.vmem %s18, 4
  %v5020 = vld [vmem:[%s5019] sm:$0x3]
  %5021 = vrot.lane.b32.xlu0 %v4865, 126
  %v5022 = vpop.permute.xlu0 %5021
  %5023 = vrot.lane.b32.xlu0 %v4866, 126
  %v5024 = vpop.permute.xlu0 %5023
  %5025 = vrot.lane.b32.xlu0 %v4867, 126
  %v5026 = vpop.permute.xlu0 %5025
  %5027 = vrot.lane.b32.xlu0 %v4868, 126
  %v5028 = vpop.permute.xlu0 %5027
  %5029 = vrot.lane.b32.xlu0 %v4869, 126
  %v5030 = vpop.permute.xlu0 %5029
  %v5031 = vsel %vm2658, %v5022, %v5024
  %v5032 = vsel %vm2658, %v5024, %v5026
  %v5033 = vsel %vm2658, %v5026, %v5028
  %v5034 = vsel %vm2658, %v5028, %v5030
  %v5036 = vsel %vm4884, %v5020, 0
  %v5039 = vsel %vm2158, %v5031, 0
  %v5042 = vsel %vm2158, %v5032, 0
  %v5045 = vsel %vm2158, %v5033, 0
  %v5048 = vsel %vm2158, %v5034, 0
  %5050 = vmatpush.bf16.msra.mxu0 0
  %5051 = vmatpush.bf16.msra.mxu0 0
  %5052 = vmatpush.bf16.msra.mxu0 0
  %5053 = vmatpush.bf16.msra.mxu0 0
  %5054 = vmatpush.bf16.msra.mxu0 0
  %5055 = vmatpush.bf16.msra.mxu0 0
  %5056 = vmatpush.bf16.msra.mxu0 0
  %5057 = vmatpush.bf16.msra.mxu0 %v5039
  %5058 = vmatmul.bf16.gmra.mxu0 %v5036
  %v5059 = vpop.f32.mrf.mxu0
  %v5060 = vadd.f32 0.0, %v5059
  %v5061 = vpop.f32.mrf.mxu0
  %5062 = vdwg.mxu0
  %5063 = vmatpush.bf16.msra.mxu0 0
  %5064 = vmatpush.bf16.msra.mxu0 0
  %5065 = vmatpush.bf16.msra.mxu0 0
  %5066 = vmatpush.bf16.msra.mxu0 0
  %5067 = vmatpush.bf16.msra.mxu0 0
  %5068 = vmatpush.bf16.msra.mxu0 0
  %5069 = vmatpush.bf16.msra.mxu0 0
  %5070 = vmatpush.bf16.msra.mxu0 %v5042
  %5071 = vmatmul.bf16.gmra.mxu0 %v5036
  %v5072 = vpop.f32.mrf.mxu0
  %v5073 = vadd.f32 0.0, %v5072
  %v5074 = vpop.f32.mrf.mxu0
  %5075 = vdwg.mxu0
  %5076 = vmatpush.bf16.msra.mxu0 0
  %5077 = vmatpush.bf16.msra.mxu0 0
  %5078 = vmatpush.bf16.msra.mxu0 0
  %5079 = vmatpush.bf16.msra.mxu0 0
  %5080 = vmatpush.bf16.msra.mxu0 0
  %5081 = vmatpush.bf16.msra.mxu0 0
  %5082 = vmatpush.bf16.msra.mxu0 0
  %5083 = vmatpush.bf16.msra.mxu0 %v5045
  %5084 = vmatmul.bf16.gmra.mxu0 %v5036
  %v5085 = vpop.f32.mrf.mxu0
  %v5086 = vadd.f32 0.0, %v5085
  %v5087 = vpop.f32.mrf.mxu0
  %5088 = vdwg.mxu0
  %5089 = vmatpush.bf16.msra.mxu0 0
  %5090 = vmatpush.bf16.msra.mxu0 0
  %5091 = vmatpush.bf16.msra.mxu0 0
  %5092 = vmatpush.bf16.msra.mxu0 0
  %5093 = vmatpush.bf16.msra.mxu0 0
  %5094 = vmatpush.bf16.msra.mxu0 0
  %5095 = vmatpush.bf16.msra.mxu0 0
  %5096 = vmatpush.bf16.msra.mxu0 %v5048
  %5097 = vmatmul.bf16.gmra.mxu0 %v5036
  %v5098 = vpop.f32.mrf.mxu0
  %v5099 = vadd.f32 0.0, %v5098
  %v5100 = vpop.f32.mrf.mxu0
  %5101 = vdwg.mxu0
  %v5102 = vadd.f32 %v4977, %v5060
  %v5103 = vadd.f32 %v4990, %v5073
  %v5104 = vadd.f32 %v5003, %v5086
  %v5105 = vadd.f32 %v5016, %v5099
  %s5106 = scalar_lea.vmem %s18, 6
  %v5107 = vld [vmem:[%s5106] sm:$0x3]
  %5108 = vrot.lane.b32.xlu0 %v4865, 112
  %v5109 = vpop.permute.xlu0 %5108
  %5110 = vrot.lane.b32.xlu0 %v4866, 112
  %v5111 = vpop.permute.xlu0 %5110
  %5112 = vrot.lane.b32.xlu0 %v4867, 112
  %v5113 = vpop.permute.xlu0 %5112
  %5114 = vrot.lane.b32.xlu0 %v4868, 112
  %v5115 = vpop.permute.xlu0 %5114
  %5116 = vrot.lane.b32.xlu0 %v4869, 112
  %v5117 = vpop.permute.xlu0 %5116
  %vm5118 = vcmask 916480
  %v5119 = vsel %vm5118, %v5109, %v5111
  %v5120 = vsel %vm5118, %v5111, %v5113
  %v5121 = vsel %vm5118, %v5113, %v5115
  %v5122 = vsel %vm5118, %v5115, %v5117
  %v5124 = vsel %vm4884, %v5107, 0
  %v5127 = vsel %vm2158, %v5119, 0
  %v5130 = vsel %vm2158, %v5120, 0
  %v5133 = vsel %vm2158, %v5121, 0
  %v5136 = vsel %vm2158, %v5122, 0
  %5138 = vmatpush.bf16.msra.mxu0 0
  %5139 = vmatpush.bf16.msra.mxu0 0
  %5140 = vmatpush.bf16.msra.mxu0 0
  %5141 = vmatpush.bf16.msra.mxu0 0
  %5142 = vmatpush.bf16.msra.mxu0 0
  %5143 = vmatpush.bf16.msra.mxu0 0
  %5144 = vmatpush.bf16.msra.mxu0 0
  %5145 = vmatpush.bf16.msra.mxu0 %v5127
  %5146 = vmatmul.bf16.gmra.mxu0 %v5124
  %v5147 = vpop.f32.mrf.mxu0
  %v5148 = vadd.f32 0.0, %v5147
  %v5149 = vpop.f32.mrf.mxu0
  %5150 = vdwg.mxu0
  %5151 = vmatpush.bf16.msra.mxu0 0
  %5152 = vmatpush.bf16.msra.mxu0 0
  %5153 = vmatpush.bf16.msra.mxu0 0
  %5154 = vmatpush.bf16.msra.mxu0 0
  %5155 = vmatpush.bf16.msra.mxu0 0
  %5156 = vmatpush.bf16.msra.mxu0 0
  %5157 = vmatpush.bf16.msra.mxu0 0
  %5158 = vmatpush.bf16.msra.mxu0 %v5130
  %5159 = vmatmul.bf16.gmra.mxu0 %v5124
  %v5160 = vpop.f32.mrf.mxu0
  %v5161 = vadd.f32 0.0, %v5160
  %v5162 = vpop.f32.mrf.mxu0
  %5163 = vdwg.mxu0
  %5164 = vmatpush.bf16.msra.mxu0 0
  %5165 = vmatpush.bf16.msra.mxu0 0
  %5166 = vmatpush.bf16.msra.mxu0 0
  %5167 = vmatpush.bf16.msra.mxu0 0
  %5168 = vmatpush.bf16.msra.mxu0 0
  %5169 = vmatpush.bf16.msra.mxu0 0
  %5170 = vmatpush.bf16.msra.mxu0 0
  %5171 = vmatpush.bf16.msra.mxu0 %v5133
  %5172 = vmatmul.bf16.gmra.mxu0 %v5124
  %v5173 = vpop.f32.mrf.mxu0
  %v5174 = vadd.f32 0.0, %v5173
  %v5175 = vpop.f32.mrf.mxu0
  %5176 = vdwg.mxu0
  %5177 = vmatpush.bf16.msra.mxu0 0
  %5178 = vmatpush.bf16.msra.mxu0 0
  %5179 = vmatpush.bf16.msra.mxu0 0
  %5180 = vmatpush.bf16.msra.mxu0 0
  %5181 = vmatpush.bf16.msra.mxu0 0
  %5182 = vmatpush.bf16.msra.mxu0 0
  %5183 = vmatpush.bf16.msra.mxu0 0
  %5184 = vmatpush.bf16.msra.mxu0 %v5136
  %5185 = vmatmul.bf16.gmra.mxu0 %v5124
  %v5186 = vpop.f32.mrf.mxu0
  %v5187 = vadd.f32 0.0, %v5186
  %v5188 = vpop.f32.mrf.mxu0
  %5189 = vdwg.mxu0
  %v5190 = vadd.f32 %v5102, %v5148
  %v5191 = vadd.f32 %v5103, %v5161
  %v5192 = vadd.f32 %v5104, %v5174
  %v5193 = vadd.f32 %v5105, %v5187
  %s5194 = scalar_lea.vmem %s18, 8
  %v5195 = vld [vmem:[%s5194] sm:$0x3]
  %5196 = vrot.lane.b32.xlu0 %v4865, 111
  %v5197 = vpop.permute.xlu0 %5196
  %5198 = vrot.lane.b32.xlu0 %v4866, 111
  %v5199 = vpop.permute.xlu0 %5198
  %5200 = vrot.lane.b32.xlu0 %v4867, 111
  %v5201 = vpop.permute.xlu0 %5200
  %5202 = vrot.lane.b32.xlu0 %v4868, 111
  %v5203 = vpop.permute.xlu0 %5202
  %5204 = vrot.lane.b32.xlu0 %v4869, 111
  %v5205 = vpop.permute.xlu0 %5204
  %vm5206 = vcmask 908288
  %v5207 = vsel %vm5206, %v5197, %v5199
  %v5208 = vsel %vm5206, %v5199, %v5201
  %v5209 = vsel %vm5206, %v5201, %v5203
  %v5210 = vsel %vm5206, %v5203, %v5205
  %v5212 = vsel %vm4884, %v5195, 0
  %v5215 = vsel %vm2158, %v5207, 0
  %v5218 = vsel %vm2158, %v5208, 0
  %v5221 = vsel %vm2158, %v5209, 0
  %v5224 = vsel %vm2158, %v5210, 0
  %5226 = vmatpush.bf16.msra.mxu0 0
  %5227 = vmatpush.bf16.msra.mxu0 0
  %5228 = vmatpush.bf16.msra.mxu0 0
  %5229 = vmatpush.bf16.msra.mxu0 0
  %5230 = vmatpush.bf16.msra.mxu0 0
  %5231 = vmatpush.bf16.msra.mxu0 0
  %5232 = vmatpush.bf16.msra.mxu0 0
  %5233 = vmatpush.bf16.msra.mxu0 %v5215
  %5234 = vmatmul.bf16.gmra.mxu0 %v5212
  %v5235 = vpop.f32.mrf.mxu0
  %v5236 = vadd.f32 0.0, %v5235
  %v5237 = vpop.f32.mrf.mxu0
  %5238 = vdwg.mxu0
  %5239 = vmatpush.bf16.msra.mxu0 0
  %5240 = vmatpush.bf16.msra.mxu0 0
  %5241 = vmatpush.bf16.msra.mxu0 0
  %5242 = vmatpush.bf16.msra.mxu0 0
  %5243 = vmatpush.bf16.msra.mxu0 0
  %5244 = vmatpush.bf16.msra.mxu0 0
  %5245 = vmatpush.bf16.msra.mxu0 0
  %5246 = vmatpush.bf16.msra.mxu0 %v5218
  %5247 = vmatmul.bf16.gmra.mxu0 %v5212
  %v5248 = vpop.f32.mrf.mxu0
  %v5249 = vadd.f32 0.0, %v5248
  %v5250 = vpop.f32.mrf.mxu0
  %5251 = vdwg.mxu0
  %5252 = vmatpush.bf16.msra.mxu0 0
  %5253 = vmatpush.bf16.msra.mxu0 0
  %5254 = vmatpush.bf16.msra.mxu0 0
  %5255 = vmatpush.bf16.msra.mxu0 0
  %5256 = vmatpush.bf16.msra.mxu0 0
  %5257 = vmatpush.bf16.msra.mxu0 0
  %5258 = vmatpush.bf16.msra.mxu0 0
  %5259 = vmatpush.bf16.msra.mxu0 %v5221
  %5260 = vmatmul.bf16.gmra.mxu0 %v5212
  %v5261 = vpop.f32.mrf.mxu0
  %v5262 = vadd.f32 0.0, %v5261
  %v5263 = vpop.f32.mrf.mxu0
  %5264 = vdwg.mxu0
  %5265 = vmatpush.bf16.msra.mxu0 0
  %5266 = vmatpush.bf16.msra.mxu0 0
  %5267 = vmatpush.bf16.msra.mxu0 0
  %5268 = vmatpush.bf16.msra.mxu0 0
  %5269 = vmatpush.bf16.msra.mxu0 0
  %5270 = vmatpush.bf16.msra.mxu0 0
  %5271 = vmatpush.bf16.msra.mxu0 0
  %5272 = vmatpush.bf16.msra.mxu0 %v5224
  %5273 = vmatmul.bf16.gmra.mxu0 %v5212
  %v5274 = vpop.f32.mrf.mxu0
  %v5275 = vadd.f32 0.0, %v5274
  %v5276 = vpop.f32.mrf.mxu0
  %5277 = vdwg.mxu0
  %v5278 = vadd.f32 %v5190, %v5236
  %v5279 = vadd.f32 %v5191, %v5249
  %v5280 = vadd.f32 %v5192, %v5262
  %v5281 = vadd.f32 %v5193, %v5275
  %s5282 = scalar_lea.vmem %s18, 10
  %v5283 = vld [vmem:[%s5282] sm:$0x3]
  %5284 = vrot.lane.b32.xlu0 %v4865, 110
  %v5285 = vpop.permute.xlu0 %5284
  %5286 = vrot.lane.b32.xlu0 %v4866, 110
  %v5287 = vpop.permute.xlu0 %5286
  %5288 = vrot.lane.b32.xlu0 %v4867, 110
  %v5289 = vpop.permute.xlu0 %5288
  %5290 = vrot.lane.b32.xlu0 %v4868, 110
  %v5291 = vpop.permute.xlu0 %5290
  %5292 = vrot.lane.b32.xlu0 %v4869, 110
  %v5293 = vpop.permute.xlu0 %5292
  %v5294 = vsel %vm2958, %v5285, %v5287
  %v5295 = vsel %vm2958, %v5287, %v5289
  %v5296 = vsel %vm2958, %v5289, %v5291
  %v5297 = vsel %vm2958, %v5291, %v5293
  %v5299 = vsel %vm4884, %v5283, 0
  %v5302 = vsel %vm2158, %v5294, 0
  %v5305 = vsel %vm2158, %v5295, 0
  %v5308 = vsel %vm2158, %v5296, 0
  %v5311 = vsel %vm2158, %v5297, 0
  %5313 = vmatpush.bf16.msra.mxu0 0
  %5314 = vmatpush.bf16.msra.mxu0 0
  %5315 = vmatpush.bf16.msra.mxu0 0
  %5316 = vmatpush.bf16.msra.mxu0 0
  %5317 = vmatpush.bf16.msra.mxu0 0
  %5318 = vmatpush.bf16.msra.mxu0 0
  %5319 = vmatpush.bf16.msra.mxu0 0
  %5320 = vmatpush.bf16.msra.mxu0 %v5302
  %5321 = vmatmul.bf16.gmra.mxu0 %v5299
  %v5322 = vpop.f32.mrf.mxu0
  %v5323 = vadd.f32 0.0, %v5322
  %v5324 = vpop.f32.mrf.mxu0
  %5325 = vdwg.mxu0
  %5326 = vmatpush.bf16.msra.mxu0 0
  %5327 = vmatpush.bf16.msra.mxu0 0
  %5328 = vmatpush.bf16.msra.mxu0 0
  %5329 = vmatpush.bf16.msra.mxu0 0
  %5330 = vmatpush.bf16.msra.mxu0 0
  %5331 = vmatpush.bf16.msra.mxu0 0
  %5332 = vmatpush.bf16.msra.mxu0 0
  %5333 = vmatpush.bf16.msra.mxu0 %v5305
  %5334 = vmatmul.bf16.gmra.mxu0 %v5299
  %v5335 = vpop.f32.mrf.mxu0
  %v5336 = vadd.f32 0.0, %v5335
  %v5337 = vpop.f32.mrf.mxu0
  %5338 = vdwg.mxu0
  %5339 = vmatpush.bf16.msra.mxu0 0
  %5340 = vmatpush.bf16.msra.mxu0 0
  %5341 = vmatpush.bf16.msra.mxu0 0
  %5342 = vmatpush.bf16.msra.mxu0 0
  %5343 = vmatpush.bf16.msra.mxu0 0
  %5344 = vmatpush.bf16.msra.mxu0 0
  %5345 = vmatpush.bf16.msra.mxu0 0
  %5346 = vmatpush.bf16.msra.mxu0 %v5308
  %5347 = vmatmul.bf16.gmra.mxu0 %v5299
  %v5348 = vpop.f32.mrf.mxu0
  %v5349 = vadd.f32 0.0, %v5348
  %v5350 = vpop.f32.mrf.mxu0
  %5351 = vdwg.mxu0
  %5352 = vmatpush.bf16.msra.mxu0 0
  %5353 = vmatpush.bf16.msra.mxu0 0
  %5354 = vmatpush.bf16.msra.mxu0 0
  %5355 = vmatpush.bf16.msra.mxu0 0
  %5356 = vmatpush.bf16.msra.mxu0 0
  %5357 = vmatpush.bf16.msra.mxu0 0
  %5358 = vmatpush.bf16.msra.mxu0 0
  %5359 = vmatpush.bf16.msra.mxu0 %v5311
  %5360 = vmatmul.bf16.gmra.mxu0 %v5299
  %v5361 = vpop.f32.mrf.mxu0
  %v5362 = vadd.f32 0.0, %v5361
  %v5363 = vpop.f32.mrf.mxu0
  %5364 = vdwg.mxu0
  %v5365 = vadd.f32 %v5278, %v5323
  %v5366 = vadd.f32 %v5279, %v5336
  %v5367 = vadd.f32 %v5280, %v5349
  %v5368 = vadd.f32 %v5281, %v5362
  %s5369 = scalar_lea.vmem %s18, 12
  %v5370 = vld [vmem:[%s5369] sm:$0x3]
  %5371 = vrot.lane.b32.xlu0 %v4865, 96
  %v5372 = vpop.permute.xlu0 %5371
  %5373 = vrot.lane.b32.xlu0 %v4866, 96
  %v5374 = vpop.permute.xlu0 %5373
  %5375 = vrot.lane.b32.xlu0 %v4867, 96
  %v5376 = vpop.permute.xlu0 %5375
  %5377 = vrot.lane.b32.xlu0 %v4868, 96
  %v5378 = vpop.permute.xlu0 %5377
  %5379 = vrot.lane.b32.xlu0 %v4869, 96
  %v5380 = vpop.permute.xlu0 %5379
  %vm5381 = vcmask 785408
  %v5382 = vsel %vm5381, %v5372, %v5374
  %v5383 = vsel %vm5381, %v5374, %v5376
  %v5384 = vsel %vm5381, %v5376, %v5378
  %v5385 = vsel %vm5381, %v5378, %v5380
  %v5387 = vsel %vm4884, %v5370, 0
  %v5390 = vsel %vm2158, %v5382, 0
  %v5393 = vsel %vm2158, %v5383, 0
  %v5396 = vsel %vm2158, %v5384, 0
  %v5399 = vsel %vm2158, %v5385, 0
  %5401 = vmatpush.bf16.msra.mxu0 0
  %5402 = vmatpush.bf16.msra.mxu0 0
  %5403 = vmatpush.bf16.msra.mxu0 0
  %5404 = vmatpush.bf16.msra.mxu0 0
  %5405 = vmatpush.bf16.msra.mxu0 0
  %5406 = vmatpush.bf16.msra.mxu0 0
  %5407 = vmatpush.bf16.msra.mxu0 0
  %5408 = vmatpush.bf16.msra.mxu0 %v5390
  %5409 = vmatmul.bf16.gmra.mxu0 %v5387
  %v5410 = vpop.f32.mrf.mxu0
  %v5411 = vadd.f32 0.0, %v5410
  %v5412 = vpop.f32.mrf.mxu0
  %5413 = vdwg.mxu0
  %5414 = vmatpush.bf16.msra.mxu0 0
  %5415 = vmatpush.bf16.msra.mxu0 0
  %5416 = vmatpush.bf16.msra.mxu0 0
  %5417 = vmatpush.bf16.msra.mxu0 0
  %5418 = vmatpush.bf16.msra.mxu0 0
  %5419 = vmatpush.bf16.msra.mxu0 0
  %5420 = vmatpush.bf16.msra.mxu0 0
  %5421 = vmatpush.bf16.msra.mxu0 %v5393
  %5422 = vmatmul.bf16.gmra.mxu0 %v5387
  %v5423 = vpop.f32.mrf.mxu0
  %v5424 = vadd.f32 0.0, %v5423
  %v5425 = vpop.f32.mrf.mxu0
  %5426 = vdwg.mxu0
  %5427 = vmatpush.bf16.msra.mxu0 0
  %5428 = vmatpush.bf16.msra.mxu0 0
  %5429 = vmatpush.bf16.msra.mxu0 0
  %5430 = vmatpush.bf16.msra.mxu0 0
  %5431 = vmatpush.bf16.msra.mxu0 0
  %5432 = vmatpush.bf16.msra.mxu0 0
  %5433 = vmatpush.bf16.msra.mxu0 0
  %5434 = vmatpush.bf16.msra.mxu0 %v5396
  %5435 = vmatmul.bf16.gmra.mxu0 %v5387
  %v5436 = vpop.f32.mrf.mxu0
  %v5437 = vadd.f32 0.0, %v5436
  %v5438 = vpop.f32.mrf.mxu0
  %5439 = vdwg.mxu0
  %5440 = vmatpush.bf16.msra.mxu0 0
  %5441 = vmatpush.bf16.msra.mxu0 0
  %5442 = vmatpush.bf16.msra.mxu0 0
  %5443 = vmatpush.bf16.msra.mxu0 0
  %5444 = vmatpush.bf16.msra.mxu0 0
  %5445 = vmatpush.bf16.msra.mxu0 0
  %5446 = vmatpush.bf16.msra.mxu0 0
  %5447 = vmatpush.bf16.msra.mxu0 %v5399
  %5448 = vmatmul.bf16.gmra.mxu0 %v5387
  %v5449 = vpop.f32.mrf.mxu0
  %v5450 = vadd.f32 0.0, %v5449
  %v5451 = vpop.f32.mrf.mxu0
  %5452 = vdwg.mxu0
  %v5453 = vadd.f32 %v5365, %v5411
  %v5454 = vadd.f32 %v5366, %v5424
  %v5455 = vadd.f32 %v5367, %v5437
  %v5456 = vadd.f32 %v5368, %v5450
  %s5457 = scalar_lea.vmem %s18, 14
  %v5458 = vld [vmem:[%s5457] sm:$0x3]
  %5459 = vrot.lane.b32.xlu0 %v4865, 95
  %v5460 = vpop.permute.xlu0 %5459
  %5461 = vrot.lane.b32.xlu0 %v4866, 95
  %v5462 = vpop.permute.xlu0 %5461
  %5463 = vrot.lane.b32.xlu0 %v4867, 95
  %v5464 = vpop.permute.xlu0 %5463
  %5465 = vrot.lane.b32.xlu0 %v4868, 95
  %v5466 = vpop.permute.xlu0 %5465
  %5467 = vrot.lane.b32.xlu0 %v4869, 95
  %v5468 = vpop.permute.xlu0 %5467
  %vm5469 = vcmask 777216
  %v5470 = vsel %vm5469, %v5460, %v5462
  %v5471 = vsel %vm5469, %v5462, %v5464
  %v5472 = vsel %vm5469, %v5464, %v5466
  %v5473 = vsel %vm5469, %v5466, %v5468
  %v5475 = vsel %vm4884, %v5458, 0
  %v5478 = vsel %vm2158, %v5470, 0
  %v5481 = vsel %vm2158, %v5471, 0
  %v5484 = vsel %vm2158, %v5472, 0
  %v5487 = vsel %vm2158, %v5473, 0
  %5489 = vmatpush.bf16.msra.mxu0 0
  %5490 = vmatpush.bf16.msra.mxu0 0
  %5491 = vmatpush.bf16.msra.mxu0 0
  %5492 = vmatpush.bf16.msra.mxu0 0
  %5493 = vmatpush.bf16.msra.mxu0 0
  %5494 = vmatpush.bf16.msra.mxu0 0
  %5495 = vmatpush.bf16.msra.mxu0 0
  %5496 = vmatpush.bf16.msra.mxu0 %v5478
  %5497 = vmatmul.bf16.gmra.mxu0 %v5475
  %v5498 = vpop.f32.mrf.mxu0
  %v5499 = vadd.f32 0.0, %v5498
  %v5500 = vpop.f32.mrf.mxu0
  %5501 = vdwg.mxu0
  %5502 = vmatpush.bf16.msra.mxu0 0
  %5503 = vmatpush.bf16.msra.mxu0 0
  %5504 = vmatpush.bf16.msra.mxu0 0
  %5505 = vmatpush.bf16.msra.mxu0 0
  %5506 = vmatpush.bf16.msra.mxu0 0
  %5507 = vmatpush.bf16.msra.mxu0 0
  %5508 = vmatpush.bf16.msra.mxu0 0
  %5509 = vmatpush.bf16.msra.mxu0 %v5481
  %5510 = vmatmul.bf16.gmra.mxu0 %v5475
  %v5511 = vpop.f32.mrf.mxu0
  %v5512 = vadd.f32 0.0, %v5511
  %v5513 = vpop.f32.mrf.mxu0
  %5514 = vdwg.mxu0
  %5515 = vmatpush.bf16.msra.mxu0 0
  %5516 = vmatpush.bf16.msra.mxu0 0
  %5517 = vmatpush.bf16.msra.mxu0 0
  %5518 = vmatpush.bf16.msra.mxu0 0
  %5519 = vmatpush.bf16.msra.mxu0 0
  %5520 = vmatpush.bf16.msra.mxu0 0
  %5521 = vmatpush.bf16.msra.mxu0 0
  %5522 = vmatpush.bf16.msra.mxu0 %v5484
  %5523 = vmatmul.bf16.gmra.mxu0 %v5475
  %v5524 = vpop.f32.mrf.mxu0
  %v5525 = vadd.f32 0.0, %v5524
  %v5526 = vpop.f32.mrf.mxu0
  %5527 = vdwg.mxu0
  %5528 = vmatpush.bf16.msra.mxu0 0
  %5529 = vmatpush.bf16.msra.mxu0 0
  %5530 = vmatpush.bf16.msra.mxu0 0
  %5531 = vmatpush.bf16.msra.mxu0 0
  %5532 = vmatpush.bf16.msra.mxu0 0
  %5533 = vmatpush.bf16.msra.mxu0 0
  %5534 = vmatpush.bf16.msra.mxu0 0
  %5535 = vmatpush.bf16.msra.mxu0 %v5487
  %5536 = vmatmul.bf16.gmra.mxu0 %v5475
  %v5537 = vpop.f32.mrf.mxu0
  %v5538 = vadd.f32 0.0, %v5537
  %v5539 = vpop.f32.mrf.mxu0
  %5540 = vdwg.mxu0
  %v5541 = vadd.f32 %v5453, %v5499
  %v5542 = vadd.f32 %v5454, %v5512
  %v5543 = vadd.f32 %v5455, %v5525
  %v5544 = vadd.f32 %v5456, %v5538
  %s5545 = scalar_lea.vmem %s18, 16
  %v5546 = vld [vmem:[%s5545] sm:$0x3]
  %5547 = vrot.lane.b32.xlu0 %v4865, 94
  %v5548 = vpop.permute.xlu0 %5547
  %5549 = vrot.lane.b32.xlu0 %v4866, 94
  %v5550 = vpop.permute.xlu0 %5549
  %5551 = vrot.lane.b32.xlu0 %v4867, 94
  %v5552 = vpop.permute.xlu0 %5551
  %5553 = vrot.lane.b32.xlu0 %v4868, 94
  %v5554 = vpop.permute.xlu0 %5553
  %5555 = vrot.lane.b32.xlu0 %v4869, 94
  %v5556 = vpop.permute.xlu0 %5555
  %vm5557 = vcmask 769024
  %v5558 = vsel %vm5557, %v5548, %v5550
  %v5559 = vsel %vm5557, %v5550, %v5552
  %v5560 = vsel %vm5557, %v5552, %v5554
  %v5561 = vsel %vm5557, %v5554, %v5556
  %v5563 = vsel %vm4884, %v5546, 0
  %v5566 = vsel %vm2158, %v5558, 0
  %v5569 = vsel %vm2158, %v5559, 0
  %v5572 = vsel %vm2158, %v5560, 0
  %v5575 = vsel %vm2158, %v5561, 0
  %5577 = vmatpush.bf16.msra.mxu0 0
  %5578 = vmatpush.bf16.msra.mxu0 0
  %5579 = vmatpush.bf16.msra.mxu0 0
  %5580 = vmatpush.bf16.msra.mxu0 0
  %5581 = vmatpush.bf16.msra.mxu0 0
  %5582 = vmatpush.bf16.msra.mxu0 0
  %5583 = vmatpush.bf16.msra.mxu0 0
  %5584 = vmatpush.bf16.msra.mxu0 %v5566
  %5585 = vmatmul.bf16.gmra.mxu0 %v5563
  %v5586 = vpop.f32.mrf.mxu0
  %v5587 = vadd.f32 0.0, %v5586
  %v5588 = vpop.f32.mrf.mxu0
  %5589 = vdwg.mxu0
  %5590 = vmatpush.bf16.msra.mxu0 0
  %5591 = vmatpush.bf16.msra.mxu0 0
  %5592 = vmatpush.bf16.msra.mxu0 0
  %5593 = vmatpush.bf16.msra.mxu0 0
  %5594 = vmatpush.bf16.msra.mxu0 0
  %5595 = vmatpush.bf16.msra.mxu0 0
  %5596 = vmatpush.bf16.msra.mxu0 0
  %5597 = vmatpush.bf16.msra.mxu0 %v5569
  %5598 = vmatmul.bf16.gmra.mxu0 %v5563
  %v5599 = vpop.f32.mrf.mxu0
  %v5600 = vadd.f32 0.0, %v5599
  %v5601 = vpop.f32.mrf.mxu0
  %5602 = vdwg.mxu0
  %5603 = vmatpush.bf16.msra.mxu0 0
  %5604 = vmatpush.bf16.msra.mxu0 0
  %5605 = vmatpush.bf16.msra.mxu0 0
  %5606 = vmatpush.bf16.msra.mxu0 0
  %5607 = vmatpush.bf16.msra.mxu0 0
  %5608 = vmatpush.bf16.msra.mxu0 0
  %5609 = vmatpush.bf16.msra.mxu0 0
  %5610 = vmatpush.bf16.msra.mxu0 %v5572
  %5611 = vmatmul.bf16.gmra.mxu0 %v5563
  %v5612 = vpop.f32.mrf.mxu0
  %v5613 = vadd.f32 0.0, %v5612
  %v5614 = vpop.f32.mrf.mxu0
  %5615 = vdwg.mxu0
  %5616 = vmatpush.bf16.msra.mxu0 0
  %5617 = vmatpush.bf16.msra.mxu0 0
  %5618 = vmatpush.bf16.msra.mxu0 0
  %5619 = vmatpush.bf16.msra.mxu0 0
  %5620 = vmatpush.bf16.msra.mxu0 0
  %5621 = vmatpush.bf16.msra.mxu0 0
  %5622 = vmatpush.bf16.msra.mxu0 0
  %5623 = vmatpush.bf16.msra.mxu0 %v5575
  %5624 = vmatmul.bf16.gmra.mxu0 %v5563
  %v5625 = vpop.f32.mrf.mxu0
  %v5626 = vadd.f32 0.0, %v5625
  %v5627 = vpop.f32.mrf.mxu0
  %5628 = vdwg.mxu0
  %v5629 = vadd.f32 %v5541, %v5587
  %v5630 = vadd.f32 %v5542, %v5600
  %v5631 = vadd.f32 %v5543, %v5613
  %v5632 = vadd.f32 %v5544, %v5626
  %v5633 = vld [vmem:[%s19] sm:$0xf]
  %5635 = vset.pattern.permute.xlu0 0
  %5636 = vperm.xlu0 %5635, %v5633
  %v5637 = vpop.permute.xlu0 %5636
  %v5639 = vadd.f32 %v5629, %v5637
  %v5640 = vadd.f32 %v5630, %v5637
  %v5641 = vadd.f32 %v5631, %v5637
  %v5642 = vadd.f32 %v5632, %v5637
  %v5643 = vsub.f32 0.0, %v5639
  %v5644 = vsub.f32 0.0, %v5640
  %v5645 = vsub.f32 0.0, %v5641
  %v5646 = vsub.f32 0.0, %v5642
  %v5647 = vmul.f32 %v5643, 1.442695
  %v5648 = vpow.pop %v5647
  %v5649 = vmul.f32 %v5644, 1.442695
  %v5650 = vpow.pop %v5649
  %v5651 = vmul.f32 %v5645, 1.442695
  %v5652 = vpow.pop %v5651
  %v5653 = vmul.f32 %v5646, 1.442695
  %v5654 = vpow.pop %v5653
  %v5655 = vadd.f32 %v5648, 1.0
  %v5656 = vadd.f32 %v5650, 1.0
  %v5657 = vadd.f32 %v5652, 1.0
  %v5658 = vadd.f32 %v5654, 1.0
  %v5659 = vrcp.pop %v5655
  %v5660 = vrcp.pop %v5656
  %v5661 = vrcp.pop %v5657
  %v5662 = vrcp.pop %v5658
  %v5663 = vmax.f32 %v5659, 0.0
  %v5664 = vmax.f32 %v5660, 0.0
  %v5665 = vmax.f32 %v5661, 0.0
  %v5666 = vmax.f32 %v5662, 0.0
  %v5667 = vmin.f32 %v5663, 1.0
  %v5668 = vmin.f32 %v5664, 1.0
  %v5669 = vmin.f32 %v5665, 1.0
  %v5670 = vmin.f32 %v5666, 1.0
  %v5675 = vrot.slane %v5668, 4
  %v5676 = vrot.slane %v5670, 4
  %v5677 = vsel %vm2158, %v5667, %v5675
  %v5678 = vsel %vm2158, %v5669, %v5676
  %5681 = vst [vmem:[%s20] sm:$0xff] %v5677
  %5682 = vst [vmem:[%s20 + $0x8] sm:$0xff] %v5678
  // Predicated region
  $region82: #{generator_dcgan_forward.1} parent=0 // pred_check
    _
  $region83: #{generator_dcgan_forward.1} parent=0 // pred_check_branch
    %5684 = sbr.rel (0) target = $region85
  $region84: #{generator_dcgan_forward.1} parent=0 // pred_region
    _
  $region85: #{generator_dcgan_forward.1} parent=0 // pred_fallthru
    _
  // Predicated region
  $region86: #{generator_dcgan_forward.1} parent=0 // pred_check
    _
  $region87: #{generator_dcgan_forward.1} parent=0 // pred_check_branch
    %5686 = sbr.rel (0) target = $region89
  $region88: #{generator_dcgan_forward.1} parent=0 // pred_region
    _
  $region89: #{generator_dcgan_forward.1} parent=0 // pred_fallthru
    _

</llo_original>
